<compile_context>
chip_gen: v6e
topology: v6e:2x2x1
jax: 0.10.0
libtpu: 0.0.40
codegen_flags: <defaults>
</compile_context>

<pallas_src>
import functools

import jax
import jax.numpy as jnp
from jax import lax
from jax.experimental import pallas as pl
from jax.experimental.pallas import tpu as pltpu


def _fold_bn(w, b, gamma, beta, mean, var, eps=1e-5):
    """Fold inference-mode BatchNorm into a conv whose output channel is the last axis of w."""
    scale = gamma / jnp.sqrt(var + eps)          # (C_out,)
    w_eff = w * scale                            # broadcast over last axis
    b_eff = (b - mean) * scale + beta            # (C_out,)
    return w_eff.astype(jnp.float32), b_eff.astype(jnp.float32)


def _side_residual_kernel(x_ref, w1_ref, b1_ref, w2_ref, b2_ref, w3_ref,
                          b3_ref, upw_ref, o_ref,
                          pad_ref, col_ref, up_pad_ref, *, upsample_rate):
    _, H, W, C_in = x_ref.shape
    C_mid = w1_ref.shape[1]

    # ---- conv1 (1x1) + BN1 + ReLU: per-pixel matmul, bf16 x bf16 -> f32 on the MXU ----
    x2 = x_ref[0].reshape(H * W, C_in)                                   # bf16
    h1 = jnp.dot(x2, w1_ref[...], preferred_element_type=jnp.float32) + b1_ref[...]
    h1 = jnp.maximum(h1, 0.0)                                            # (H*W, C_mid) f32

    # ---- stage h1 into the zero-halo buffer (zero only the ring, every step) ----
    zrow = jnp.zeros((1, W + 2, C_mid), jnp.float32)
    zcol = jnp.zeros((H + 2, 1, C_mid), jnp.float32)
    pad_ref[pl.ds(0, 1), :, :] = zrow
    pad_ref[pl.ds(H + 1, 1), :, :] = zrow
    pad_ref[:, pl.ds(0, 1), :] = zcol
    pad_ref[:, pl.ds(W + 1, 1), :] = zcol
    pad_ref[pl.ds(1, H), pl.ds(1, W), :] = h1.reshape(H, W, C_mid)       # interior only

    # ---- conv2 (3x3, padding=1) + BN2 + ReLU as ONE bf16 im2col matmul ----
    # col_ref[:, t*C : (t+1)*C] = tap t  =>  accumulation over the 9 taps happens
    # in the MXU K dimension (K = 9*C_mid); every column is rewritten each step.
    for t in range(9):
        ky, kx = t // 3, t % 3
        tap = pad_ref[pl.ds(ky, H), pl.ds(kx, W), :].reshape(H * W, C_mid)
        col_ref[:, pl.ds(t * C_mid, C_mid)] = tap.astype(jnp.bfloat16)
    h2 = jnp.dot(col_ref[...], w2_ref[...], preferred_element_type=jnp.float32)
    h2 = jnp.maximum(h2 + b2_ref[...], 0.0)                              # (H*W, C_mid) f32

    # ---- conv3 (1x1 -> 1 channel) + BN3: lane reduction over the channel axis ----
    h2_3d = h2.reshape(H, W, C_mid)
    y = jnp.sum(h2_3d * w3_ref[...], axis=-1) + b3_ref[0]                # (H, W) f32

    if upsample_rate == 1:
        o_ref[...] = y.reshape(1, 1, H, W).astype(o_ref.dtype)
        return

    # ---- ConvTranspose2d(1, 1, k=2*s, stride=s, padding=s//2, bias=False) ----
    # Sub-pixel (phase) decomposition: output pixel (s*a + r, s*b + c) is a
    # 2x2-tap correlation of the single-channel map y (zero boundary via halo).
    s = upsample_rate
    p = s // 2
    up_pad_ref[...] = jnp.zeros_like(up_pad_ref)                         # tiny (H+2,W+2)
    up_pad_ref[pl.ds(1, H), pl.ds(1, W)] = y
    for r in range(s):
        dr = 1 if r >= p else 0
        ki0 = (r + p) % s
        for c in range(s):
            dc = 1 if c >= p else 0
            kj0 = (c + p) % s
            # 4 scalar taps read from SMEM, each broadcast-multiplied once.
            y_rc = (
                upw_ref[ki0, kj0] * up_pad_ref[pl.ds(1 + dr, H), pl.ds(1 + dc, W)]
                + upw_ref[ki0, kj0 + s] * up_pad_ref[pl.ds(1 + dr, H), pl.ds(dc, W)]
                + upw_ref[ki0 + s, kj0] * up_pad_ref[pl.ds(dr, H), pl.ds(1 + dc, W)]
                + upw_ref[ki0 + s, kj0 + s] * up_pad_ref[pl.ds(dr, H), pl.ds(dc, W)]
            )
            o_ref[0, r * s + c] = y_rc.astype(o_ref.dtype)


def side_residual_forward(x_nhwc, params, upsample_rate, eps=1e-5):
    """Forward pass. x_nhwc: (N, H, W, C_in) f32 channels-last.  Returns (N, 1, H*s, W*s) f32."""
    assert upsample_rate in (1, 2, 4, 8)
    N, H, W, C_in = x_nhwc.shape
    (w1, b1, bn1), (w2, b2, bn2), (w3, b3, bn3), up_w = params
    C_mid = w1.shape[1]

    w1e, b1e = _fold_bn(w1, b1, *bn1, eps=eps)   # (C_in, C_mid), (C_mid,)
    w2e, b2e = _fold_bn(w2, b2, *bn2, eps=eps)   # (3, 3, C_mid, C_mid), (C_mid,)
    w3e, b3e = _fold_bn(w3, b3, *bn3, eps=eps)   # (C_mid, 1), (1,)

    # bf16 storage for the big operands (memory-bound); math stays f32 on-chip.
    x_k = x_nhwc.astype(jnp.bfloat16)
    w1_k = w1e.astype(jnp.bfloat16)
    # im2col weight layout: row index = (ky*3 + kx)*C_mid + c_in, col = c_out.
    w2_k = w2e.reshape(9 * C_mid, C_mid).astype(jnp.bfloat16)
    b1_k = b1e.reshape(1, C_mid)
    b2_k = b2e.reshape(1, C_mid)
    w3_k = w3e.reshape(1, C_mid)
    b3_k = b3e.reshape(1)                         # SMEM scalar
    up_k = up_w.astype(jnp.float32)               # SMEM scalar table

    s = upsample_rate
    out_c = 1 if s == 1 else s * s
    out_shape = jax.ShapeDtypeStruct((N, out_c, H, W), jnp.float32)
    out_spec = pl.BlockSpec((1, out_c, H, W), lambda n: (n, 0, 0, 0))

    smem_spec = pl.BlockSpec(memory_space=pltpu.MemorySpace.SMEM)
    kernel = functools.partial(_side_residual_kernel, upsample_rate=s)

    out = pl.pallas_call(
        kernel,
        out_shape=out_shape,
        grid_spec=pltpu.PrefetchScalarGridSpec(
            num_scalar_prefetch=0,
            grid=(N,),
            in_specs=[
                pl.BlockSpec((1, H, W, C_in), lambda n: (n, 0, 0, 0)),   # x  (bf16)
                pl.BlockSpec((C_in, C_mid), lambda n: (0, 0)),           # w1 (bf16)
                pl.BlockSpec((1, C_mid), lambda n: (0, 0)),              # b1
                pl.BlockSpec((9 * C_mid, C_mid), lambda n: (0, 0)),      # w2 (bf16, im2col)
                pl.BlockSpec((1, C_mid), lambda n: (0, 0)),              # b2
                pl.BlockSpec((1, C_mid), lambda n: (0, 0)),              # w3 row
                smem_spec,                                               # b3   (SMEM)
                smem_spec,                                               # up_w (SMEM)
            ],
            out_specs=out_spec,
            scratch_shapes=[
                pltpu.VMEM((H + 2, W + 2, C_mid), jnp.float32),   # conv2 halo buffer
                pltpu.VMEM((H * W, 9 * C_mid), jnp.bfloat16),     # im2col staging (bf16)
                pltpu.VMEM((H + 2, W + 2), jnp.float32),          # upsample halo buffer
            ],
        ),
        compiler_params=pltpu.CompilerParams(dimension_semantics=("parallel",)),
    )(x_k, w1_k, b1_k, w2_k, b2_k, w3_k, b3_k, up_k)

    if s == 1:
        return out
    # Depth-to-space of the tiny single-channel output (s*s*H*W floats per image).
    out = out.reshape(N, s, s, H, W)
    return jnp.transpose(out, (0, 3, 1, 4, 2)).reshape(N, 1, H * s, W * s)


def _make_params(key, in_channels, inter_channels, upsample_rate):
    """Deterministic synthetic Conv2d/BatchNorm2d/ConvTranspose2d parameters."""
    def bn_params(k, c):
        k1, k2, k3, k4 = jax.random.split(k, 4)
        gamma = 1.0 + 0.1 * jax.random.normal(k1, (c,), jnp.float32)
        beta = 0.05 * jax.random.normal(k2, (c,), jnp.float32)
        mean = 0.05 * jax.random.normal(k3, (c,), jnp.float32)
        var = 0.5 + jax.nn.sigmoid(jax.random.normal(k4, (c,), jnp.float32))
        return (gamma, beta, mean, var)

    ks = jax.random.split(key, 10)
    w1 = 0.1 * jax.random.normal(ks[0], (in_channels, inter_channels), jnp.float32)
    b1 = 0.05 * jax.random.normal(ks[1], (inter_channels,), jnp.float32)
    w2 = 0.05 * jax.random.normal(ks[2], (3, 3, inter_channels, inter_channels), jnp.float32)
    b2 = 0.05 * jax.random.normal(ks[3], (inter_channels,), jnp.float32)
    w3 = 0.1 * jax.random.normal(ks[4], (inter_channels, 1), jnp.float32)
    b3 = 0.05 * jax.random.normal(ks[5], (1,), jnp.float32)
    if upsample_rate == 1:
        up_w = jnp.ones((1, 1), jnp.float32)     # unused dummy
    else:
        kk = 2 * upsample_rate
        up_w = 0.1 * jax.random.normal(ks[6], (kk, kk), jnp.float32)
    return (
        (w1, b1, bn_params(ks[7], inter_channels)),
        (w2, b2, bn_params(ks[8], inter_channels)),
        (w3, b3, bn_params(ks[9], 1)),
        up_w,
    )


def _reference(x_nhwc, params, upsample_rate, eps=1e-5):
    """Plain-JAX/XLA reference of the same forward pass (independent conv lowering)."""
    (w1, b1, bn1), (w2, b2, bn2), (w3, b3, bn3), up_w = params
    w1e, b1e = _fold_bn(w1, b1, *bn1, eps=eps)
    w2e, b2e = _fold_bn(w2, b2, *bn2, eps=eps)
    w3e, b3e = _fold_bn(w3, b3, *bn3, eps=eps)

    # Match the kernel's bf16 storage choices (x, w1, w2 and the conv2 taps h1).
    x = x_nhwc.astype(jnp.bfloat16).astype(jnp.float32)
    w1e = w1e.astype(jnp.bfloat16).astype(jnp.float32)
    w2e = w2e.astype(jnp.bfloat16).astype(jnp.float32)

    hp = lax.Precision.HIGHEST
    h1 = jnp.maximum(jnp.einsum('nhwc,cd->nhwd', x, w1e, precision=hp) + b1e, 0.0)
    h1 = h1.astype(jnp.bfloat16).astype(jnp.float32)          # bf16 taps, like the kernel
    h2 = lax.conv_general_dilated(h1, w2e, (1, 1), 'SAME',
                                  dimension_numbers=('NHWC', 'HWIO', 'NHWC'),
                                  precision=hp) + b2e
    h2 = jnp.maximum(h2, 0.0)
    y = jnp.einsum('nhwc,co->nhwo', h2, w3e, precision=hp) + b3e
    y = jnp.transpose(y, (0, 3, 1, 2))                        # (N, 1, H, W)
    if upsample_rate == 1:
        return y
    s = upsample_rate
    k = 2 * s
    p = s // 2
    wf = up_w[::-1, ::-1]                                     # flipped kernel
    return lax.conv_general_dilated(
        y, wf[None, None], (1, 1),
        padding=[(k - 1 - p, k - 1 - p)] * 2,
        lhs_dilation=(s, s),
        dimension_numbers=('NCHW', 'OIHW', 'NCHW'),
        precision=hp)


if __name__ == "__main__":
    # DFF-style side branch: 128 input channels, 128 intermediate channels
    # (lane-dense operands), 16x16 spatial, batch 2, 2x transposed-conv upsample.
    N, H, W = 2, 16, 16
    in_channels, inter_channels, upsample_rate = 128, 128, 2

    key = jax.random.PRNGKey(0)
    kx_, kp = jax.random.split(key)
    x = jax.random.normal(kx_, (N, H, W, in_channels), jnp.float32)   # channels-last input
    params = _make_params(kp, in_channels, inter_channels, upsample_rate)

    out = side_residual_forward(x, params, upsample_rate)
    out = jax.block_until_ready(out)

    ref = _reference(x, params, upsample_rate)
    assert out.shape == (N, 1, H * upsample_rate, W * upsample_rate), out.shape
    err = float(jnp.max(jnp.abs(out - ref)))
    # Tolerance accounts for bf16 storage of x / w1 / w2 / conv2 taps (mirrored
    # in the reference) plus f32 accumulation-order differences.
    assert jnp.allclose(out, ref, atol=2e-3, rtol=1e-3), err

    print("KERNEL_OK")
</pallas_src>

<mosaic_0001>
module attributes {stable_mosaic.version = 11 : i64} {
  func.func @_side_residual_kernel(%arg0: i32, %arg1: memref<1x16x16x128xbf16, #tpu.memory_space<vmem>>, %arg2: memref<128x128xbf16, #tpu.memory_space<vmem>>, %arg3: memref<1x128xf32, #tpu.memory_space<vmem>>, %arg4: memref<1152x128xbf16, #tpu.memory_space<vmem>>, %arg5: memref<1x128xf32, #tpu.memory_space<vmem>>, %arg6: memref<1x128xf32, #tpu.memory_space<vmem>>, %arg7: memref<1xf32, #tpu.memory_space<smem>>, %arg8: memref<4x4xf32, #tpu.memory_space<smem>>, %arg9: memref<1x4x16x16xf32, #tpu.memory_space<vmem>>, %arg10: memref<18x18x128xf32, #tpu.memory_space<vmem>>, %arg11: memref<256x1152xbf16, #tpu.memory_space<vmem>>, %arg12: memref<18x18xf32, #tpu.memory_space<vmem>>) attributes {dimension_semantics = [#tpu.dimension_semantics<parallel>], iteration_bounds = array<i64: 2>, scalar_prefetch = 0 : i64, scratch_operands = 3 : i64, tpu.core_type = #tpu.core_type<tc>, window_params = [{transform_indices = @transform_0, window_bounds = array<i64: 1, 16, 16, 128>}, {pipeline_mode = #tpu.pipeline_mode<synchronous>, transform_indices = @transform_1, window_bounds = array<i64: 128, 128>}, {pipeline_mode = #tpu.pipeline_mode<synchronous>, transform_indices = @transform_2, window_bounds = array<i64: 1, 128>}, {pipeline_mode = #tpu.pipeline_mode<synchronous>, transform_indices = @transform_3, window_bounds = array<i64: 1152, 128>}, {pipeline_mode = #tpu.pipeline_mode<synchronous>, transform_indices = @transform_4, window_bounds = array<i64: 1, 128>}, {pipeline_mode = #tpu.pipeline_mode<synchronous>, transform_indices = @transform_5, window_bounds = array<i64: 1, 128>}, {transform_indices = @transform_6, window_bounds = array<i64: 1>}, {transform_indices = @transform_7, window_bounds = array<i64: 4, 4>}, {transform_indices = @transform_8, window_bounds = array<i64: 1, 4, 16, 16>}]} {
    %c0 = arith.constant 0 : index
    %c0_0 = arith.constant 0 : index
    %c0_1 = arith.constant 0 : index
    %c0_2 = arith.constant 0 : index
    %0 = vector.load %arg1[%c0, %c0_0, %c0_1, %c0_2] : memref<1x16x16x128xbf16, #tpu.memory_space<vmem>>, vector<1x16x16x128xbf16>
    %1 = vector.shape_cast %0 : vector<1x16x16x128xbf16> to vector<16x16x128xbf16>
    %2 = vector.shape_cast %1 : vector<16x16x128xbf16> to vector<256x128xbf16>
    %c0_3 = arith.constant 0 : index
    %c0_4 = arith.constant 0 : index
    %3 = vector.load %arg2[%c0_3, %c0_4] : memref<128x128xbf16, #tpu.memory_space<vmem>>, vector<128x128xbf16>
    %cst = arith.constant dense<0.000000e+00> : vector<256x128xf32>
    %4 = tpu.matmul %2, %3, %cst {dimension_numbers = #tpu.dot_dimension_numbers<[1], [0], [0], [1], [0, 0, 1, 1], [], []>} : vector<256x128xbf16>, vector<128x128xbf16>, vector<256x128xf32> -> vector<256x128xf32>
    %c0_5 = arith.constant 0 : index
    %c0_6 = arith.constant 0 : index
    %5 = vector.load %arg3[%c0_5, %c0_6] : memref<1x128xf32, #tpu.memory_space<vmem>>, vector<1x128xf32>
    %6 = vector.broadcast %5 : vector<1x128xf32> to vector<256x128xf32>
    %7 = arith.addf %4, %6 : vector<256x128xf32>
    %cst_7 = arith.constant 0.000000e+00 : f32
    %8 = vector.broadcast %cst_7 : f32 to vector<256x128xf32>
    %9 = arith.maximumf %7, %8 : vector<256x128xf32>
    %cst_8 = arith.constant 0.000000e+00 : f32
    %10 = vector.broadcast %cst_8 : f32 to vector<1x18x128xf32>
    %cst_9 = arith.constant 0.000000e+00 : f32
    %11 = vector.broadcast %cst_9 : f32 to vector<18x1x128xf32>
    %c0_10 = arith.constant 0 : index
    %c0_11 = arith.constant 0 : index
    %c0_12 = arith.constant 0 : index
    %12 = vector.load %arg10[%c0_10, %c0_11, %c0_12] : memref<18x18x128xf32, #tpu.memory_space<vmem>>, vector<1x18x128xf32>
    tpu.vector_store %arg10[%c0_10, %c0_11, %c0_12], %10 {strides = array<i32>} : memref<18x18x128xf32, #tpu.memory_space<vmem>>, vector<1x18x128xf32>,
    %c17 = arith.constant 17 : index
    %c0_13 = arith.constant 0 : index
    %c0_14 = arith.constant 0 : index
    %13 = vector.load %arg10[%c17, %c0_13, %c0_14] : memref<18x18x128xf32, #tpu.memory_space<vmem>>, vector<1x18x128xf32>
    tpu.vector_store %arg10[%c17, %c0_13, %c0_14], %10 {strides = array<i32>} : memref<18x18x128xf32, #tpu.memory_space<vmem>>, vector<1x18x128xf32>,
    %c0_15 = arith.constant 0 : index
    %c0_16 = arith.constant 0 : index
    %c0_17 = arith.constant 0 : index
    %14 = vector.load %arg10[%c0_15, %c0_16, %c0_17] : memref<18x18x128xf32, #tpu.memory_space<vmem>>, vector<18x1x128xf32>
    tpu.vector_store %arg10[%c0_15, %c0_16, %c0_17], %11 {strides = array<i32>} : memref<18x18x128xf32, #tpu.memory_space<vmem>>, vector<18x1x128xf32>,
    %c0_18 = arith.constant 0 : index
    %c17_19 = arith.constant 17 : index
    %c0_20 = arith.constant 0 : index
    %15 = vector.load %arg10[%c0_18, %c17_19, %c0_20] : memref<18x18x128xf32, #tpu.memory_space<vmem>>, vector<18x1x128xf32>
    tpu.vector_store %arg10[%c0_18, %c17_19, %c0_20], %11 {strides = array<i32>} : memref<18x18x128xf32, #tpu.memory_space<vmem>>, vector<18x1x128xf32>,
    %16 = vector.shape_cast %9 : vector<256x128xf32> to vector<16x16x128xf32>
    %c1 = arith.constant 1 : index
    %c1_21 = arith.constant 1 : index
    %c0_22 = arith.constant 0 : index
    %17 = vector.load %arg10[%c1, %c1_21, %c0_22] : memref<18x18x128xf32, #tpu.memory_space<vmem>>, vector<16x16x128xf32>
    tpu.vector_store %arg10[%c1, %c1_21, %c0_22], %16 {strides = array<i32>} : memref<18x18x128xf32, #tpu.memory_space<vmem>>, vector<16x16x128xf32>,
    %c0_23 = arith.constant 0 : index
    %c0_24 = arith.constant 0 : index
    %c0_25 = arith.constant 0 : index
    %18 = vector.load %arg10[%c0_23, %c0_24, %c0_25] : memref<18x18x128xf32, #tpu.memory_space<vmem>>, vector<16x16x128xf32>
    %19 = vector.shape_cast %18 : vector<16x16x128xf32> to vector<256x128xf32>
    %20 = arith.truncf %19 : vector<256x128xf32> to vector<256x128xbf16>
    %c0_26 = arith.constant 0 : index
    %c0_27 = arith.constant 0 : index
    %21 = vector.load %arg11[%c0_26, %c0_27] : memref<256x1152xbf16, #tpu.memory_space<vmem>>, vector<256x128xbf16>
    tpu.vector_store %arg11[%c0_26, %c0_27], %20 {strides = array<i32>} : memref<256x1152xbf16, #tpu.memory_space<vmem>>, vector<256x128xbf16>,
    %c0_28 = arith.constant 0 : index
    %c1_29 = arith.constant 1 : index
    %c0_30 = arith.constant 0 : index
    %22 = vector.load %arg10[%c0_28, %c1_29, %c0_30] : memref<18x18x128xf32, #tpu.memory_space<vmem>>, vector<16x16x128xf32>
    %23 = vector.shape_cast %22 : vector<16x16x128xf32> to vector<256x128xf32>
    %24 = arith.truncf %23 : vector<256x128xf32> to vector<256x128xbf16>
    %c0_31 = arith.constant 0 : index
    %c128 = arith.constant 128 : index
    %25 = vector.load %arg11[%c0_31, %c128] : memref<256x1152xbf16, #tpu.memory_space<vmem>>, vector<256x128xbf16>
    tpu.vector_store %arg11[%c0_31, %c128], %24 {strides = array<i32>} : memref<256x1152xbf16, #tpu.memory_space<vmem>>, vector<256x128xbf16>,
    %c0_32 = arith.constant 0 : index
    %c2 = arith.constant 2 : index
    %c0_33 = arith.constant 0 : index
    %26 = vector.load %arg10[%c0_32, %c2, %c0_33] : memref<18x18x128xf32, #tpu.memory_space<vmem>>, vector<16x16x128xf32>
    %27 = vector.shape_cast %26 : vector<16x16x128xf32> to vector<256x128xf32>
    %28 = arith.truncf %27 : vector<256x128xf32> to vector<256x128xbf16>
    %c0_34 = arith.constant 0 : index
    %c256 = arith.constant 256 : index
    %29 = vector.load %arg11[%c0_34, %c256] : memref<256x1152xbf16, #tpu.memory_space<vmem>>, vector<256x128xbf16>
    tpu.vector_store %arg11[%c0_34, %c256], %28 {strides = array<i32>} : memref<256x1152xbf16, #tpu.memory_space<vmem>>, vector<256x128xbf16>,
    %c1_35 = arith.constant 1 : index
    %c0_36 = arith.constant 0 : index
    %c0_37 = arith.constant 0 : index
    %30 = vector.load %arg10[%c1_35, %c0_36, %c0_37] : memref<18x18x128xf32, #tpu.memory_space<vmem>>, vector<16x16x128xf32>
    %31 = vector.shape_cast %30 : vector<16x16x128xf32> to vector<256x128xf32>
    %32 = arith.truncf %31 : vector<256x128xf32> to vector<256x128xbf16>
    %c0_38 = arith.constant 0 : index
    %c384 = arith.constant 384 : index
    %33 = vector.load %arg11[%c0_38, %c384] : memref<256x1152xbf16, #tpu.memory_space<vmem>>, vector<256x128xbf16>
    tpu.vector_store %arg11[%c0_38, %c384], %32 {strides = array<i32>} : memref<256x1152xbf16, #tpu.memory_space<vmem>>, vector<256x128xbf16>,
    %c1_39 = arith.constant 1 : index
    %c1_40 = arith.constant 1 : index
    %c0_41 = arith.constant 0 : index
    %34 = vector.load %arg10[%c1_39, %c1_40, %c0_41] : memref<18x18x128xf32, #tpu.memory_space<vmem>>, vector<16x16x128xf32>
    %35 = vector.shape_cast %34 : vector<16x16x128xf32> to vector<256x128xf32>
    %36 = arith.truncf %35 : vector<256x128xf32> to vector<256x128xbf16>
    %c0_42 = arith.constant 0 : index
    %c512 = arith.constant 512 : index
    %37 = vector.load %arg11[%c0_42, %c512] : memref<256x1152xbf16, #tpu.memory_space<vmem>>, vector<256x128xbf16>
    tpu.vector_store %arg11[%c0_42, %c512], %36 {strides = array<i32>} : memref<256x1152xbf16, #tpu.memory_space<vmem>>, vector<256x128xbf16>,
    %c1_43 = arith.constant 1 : index
    %c2_44 = arith.constant 2 : index
    %c0_45 = arith.constant 0 : index
    %38 = vector.load %arg10[%c1_43, %c2_44, %c0_45] : memref<18x18x128xf32, #tpu.memory_space<vmem>>, vector<16x16x128xf32>
    %39 = vector.shape_cast %38 : vector<16x16x128xf32> to vector<256x128xf32>
    %40 = arith.truncf %39 : vector<256x128xf32> to vector<256x128xbf16>
    %c0_46 = arith.constant 0 : index
    %c640 = arith.constant 640 : index
    %41 = vector.load %arg11[%c0_46, %c640] : memref<256x1152xbf16, #tpu.memory_space<vmem>>, vector<256x128xbf16>
    tpu.vector_store %arg11[%c0_46, %c640], %40 {strides = array<i32>} : memref<256x1152xbf16, #tpu.memory_space<vmem>>, vector<256x128xbf16>,
    %c2_47 = arith.constant 2 : index
    %c0_48 = arith.constant 0 : index
    %c0_49 = arith.constant 0 : index
    %42 = vector.load %arg10[%c2_47, %c0_48, %c0_49] : memref<18x18x128xf32, #tpu.memory_space<vmem>>, vector<16x16x128xf32>
    %43 = vector.shape_cast %42 : vector<16x16x128xf32> to vector<256x128xf32>
    %44 = arith.truncf %43 : vector<256x128xf32> to vector<256x128xbf16>
    %c0_50 = arith.constant 0 : index
    %c768 = arith.constant 768 : index
    %45 = vector.load %arg11[%c0_50, %c768] : memref<256x1152xbf16, #tpu.memory_space<vmem>>, vector<256x128xbf16>
    tpu.vector_store %arg11[%c0_50, %c768], %44 {strides = array<i32>} : memref<256x1152xbf16, #tpu.memory_space<vmem>>, vector<256x128xbf16>,
    %c2_51 = arith.constant 2 : index
    %c1_52 = arith.constant 1 : index
    %c0_53 = arith.constant 0 : index
    %46 = vector.load %arg10[%c2_51, %c1_52, %c0_53] : memref<18x18x128xf32, #tpu.memory_space<vmem>>, vector<16x16x128xf32>
    %47 = vector.shape_cast %46 : vector<16x16x128xf32> to vector<256x128xf32>
    %48 = arith.truncf %47 : vector<256x128xf32> to vector<256x128xbf16>
    %c0_54 = arith.constant 0 : index
    %c896 = arith.constant 896 : index
    %49 = vector.load %arg11[%c0_54, %c896] : memref<256x1152xbf16, #tpu.memory_space<vmem>>, vector<256x128xbf16>
    tpu.vector_store %arg11[%c0_54, %c896], %48 {strides = array<i32>} : memref<256x1152xbf16, #tpu.memory_space<vmem>>, vector<256x128xbf16>,
    %c2_55 = arith.constant 2 : index
    %c2_56 = arith.constant 2 : index
    %c0_57 = arith.constant 0 : index
    %50 = vector.load %arg10[%c2_55, %c2_56, %c0_57] : memref<18x18x128xf32, #tpu.memory_space<vmem>>, vector<16x16x128xf32>
    %51 = vector.shape_cast %50 : vector<16x16x128xf32> to vector<256x128xf32>
    %52 = arith.truncf %51 : vector<256x128xf32> to vector<256x128xbf16>
    %c0_58 = arith.constant 0 : index
    %c1024 = arith.constant 1024 : index
    %53 = vector.load %arg11[%c0_58, %c1024] : memref<256x1152xbf16, #tpu.memory_space<vmem>>, vector<256x128xbf16>
    tpu.vector_store %arg11[%c0_58, %c1024], %52 {strides = array<i32>} : memref<256x1152xbf16, #tpu.memory_space<vmem>>, vector<256x128xbf16>,
    %c0_59 = arith.constant 0 : index
    %c0_60 = arith.constant 0 : index
    %54 = vector.load %arg11[%c0_59, %c0_60] : memref<256x1152xbf16, #tpu.memory_space<vmem>>, vector<256x1152xbf16>
    %c0_61 = arith.constant 0 : index
    %c0_62 = arith.constant 0 : index
    %55 = vector.load %arg4[%c0_61, %c0_62] : memref<1152x128xbf16, #tpu.memory_space<vmem>>, vector<1152x128xbf16>
    %cst_63 = arith.constant dense<0.000000e+00> : vector<256x128xf32>
    %56 = tpu.matmul %54, %55, %cst_63 {dimension_numbers = #tpu.dot_dimension_numbers<[1], [0], [0], [1], [0, 0, 1, 1], [], []>} : vector<256x1152xbf16>, vector<1152x128xbf16>, vector<256x128xf32> -> vector<256x128xf32>
    %c0_64 = arith.constant 0 : index
    %c0_65 = arith.constant 0 : index
    %57 = vector.load %arg5[%c0_64, %c0_65] : memref<1x128xf32, #tpu.memory_space<vmem>>, vector<1x128xf32>
    %58 = vector.broadcast %57 : vector<1x128xf32> to vector<256x128xf32>
    %59 = arith.addf %56, %58 : vector<256x128xf32>
    %cst_66 = arith.constant 0.000000e+00 : f32
    %60 = vector.broadcast %cst_66 : f32 to vector<256x128xf32>
    %61 = arith.maximumf %59, %60 : vector<256x128xf32>
    %62 = vector.shape_cast %61 : vector<256x128xf32> to vector<16x16x128xf32>
    %c0_67 = arith.constant 0 : index
    %c0_68 = arith.constant 0 : index
    %63 = vector.load %arg6[%c0_67, %c0_68] : memref<1x128xf32, #tpu.memory_space<vmem>>, vector<1x128xf32>
    %64 = vector.shape_cast %63 : vector<1x128xf32> to vector<1x1x128xf32>
    %65 = vector.broadcast %64 : vector<1x1x128xf32> to vector<16x16x128xf32>
    %66 = arith.mulf %62, %65 : vector<16x16x128xf32>
    %cst_69 = arith.constant dense<0.000000e+00> : vector<16x16xf32>
    %67 = vector.multi_reduction <add>, %66, %cst_69 [2] : vector<16x16x128xf32> to vector<16x16xf32>
    %c0_70 = arith.constant 0 : index
    %68 = memref.load %arg7[%c0_70] : memref<1xf32, #tpu.memory_space<smem>>
    %69 = vector.broadcast %68 : f32 to vector<16x16xf32>
    %70 = arith.addf %67, %69 : vector<16x16xf32>
    %cst_71 = arith.constant 0.000000e+00 : f32
    %71 = vector.broadcast %cst_71 : f32 to vector<18x18xf32>
    %c0_72 = arith.constant 0 : index
    %c0_73 = arith.constant 0 : index
    %72 = vector.load %arg12[%c0_72, %c0_73] : memref<18x18xf32, #tpu.memory_space<vmem>>, vector<18x18xf32>
    tpu.vector_store %arg12[%c0_72, %c0_73], %71 {strides = array<i32>} : memref<18x18xf32, #tpu.memory_space<vmem>>, vector<18x18xf32>,
    %c1_74 = arith.constant 1 : index
    %c1_75 = arith.constant 1 : index
    %73 = vector.load %arg12[%c1_74, %c1_75] : memref<18x18xf32, #tpu.memory_space<vmem>>, vector<16x16xf32>
    tpu.vector_store %arg12[%c1_74, %c1_75], %70 {strides = array<i32>} : memref<18x18xf32, #tpu.memory_space<vmem>>, vector<16x16xf32>,
    %c1_76 = arith.constant 1 : index
    %c1_77 = arith.constant 1 : index
    %74 = memref.load %arg8[%c1_76, %c1_77] : memref<4x4xf32, #tpu.memory_space<smem>>
    %c1_78 = arith.constant 1 : index
    %c1_79 = arith.constant 1 : index
    %75 = vector.load %arg12[%c1_78, %c1_79] : memref<18x18xf32, #tpu.memory_space<vmem>>, vector<16x16xf32>
    %76 = vector.broadcast %74 : f32 to vector<16x16xf32>
    %77 = arith.mulf %76, %75 : vector<16x16xf32>
    %c1_80 = arith.constant 1 : index
    %c3 = arith.constant 3 : index
    %78 = memref.load %arg8[%c1_80, %c3] : memref<4x4xf32, #tpu.memory_space<smem>>
    %c1_81 = arith.constant 1 : index
    %c0_82 = arith.constant 0 : index
    %79 = vector.load %arg12[%c1_81, %c0_82] : memref<18x18xf32, #tpu.memory_space<vmem>>, vector<16x16xf32>
    %80 = vector.broadcast %78 : f32 to vector<16x16xf32>
    %81 = arith.mulf %80, %79 : vector<16x16xf32>
    %82 = arith.addf %77, %81 : vector<16x16xf32>
    %c3_83 = arith.constant 3 : index
    %c1_84 = arith.constant 1 : index
    %83 = memref.load %arg8[%c3_83, %c1_84] : memref<4x4xf32, #tpu.memory_space<smem>>
    %c0_85 = arith.constant 0 : index
    %c1_86 = arith.constant 1 : index
    %84 = vector.load %arg12[%c0_85, %c1_86] : memref<18x18xf32, #tpu.memory_space<vmem>>, vector<16x16xf32>
    %85 = vector.broadcast %83 : f32 to vector<16x16xf32>
    %86 = arith.mulf %85, %84 : vector<16x16xf32>
    %87 = arith.addf %82, %86 : vector<16x16xf32>
    %c3_87 = arith.constant 3 : index
    %c3_88 = arith.constant 3 : index
    %88 = memref.load %arg8[%c3_87, %c3_88] : memref<4x4xf32, #tpu.memory_space<smem>>
    %c0_89 = arith.constant 0 : index
    %c0_90 = arith.constant 0 : index
    %89 = vector.load %arg12[%c0_89, %c0_90] : memref<18x18xf32, #tpu.memory_space<vmem>>, vector<16x16xf32>
    %90 = vector.broadcast %88 : f32 to vector<16x16xf32>
    %91 = arith.mulf %90, %89 : vector<16x16xf32>
    %92 = arith.addf %87, %91 : vector<16x16xf32>
    %c0_91 = arith.constant 0 : index
    %c0_92 = arith.constant 0 : index
    %c0_93 = arith.constant 0 : index
    %c0_94 = arith.constant 0 : index
    %93 = vector.load %arg9[%c0_91, %c0_92, %c0_93, %c0_94] : memref<1x4x16x16xf32, #tpu.memory_space<vmem>>, vector<1x1x16x16xf32>
    %94 = vector.shape_cast %93 : vector<1x1x16x16xf32> to vector<16x16xf32>
    %95 = vector.shape_cast %92 : vector<16x16xf32> to vector<1x1x16x16xf32>
    tpu.vector_store %arg9[%c0_91, %c0_92, %c0_93, %c0_94], %95 {strides = array<i32>} : memref<1x4x16x16xf32, #tpu.memory_space<vmem>>, vector<1x1x16x16xf32>,
    %c1_95 = arith.constant 1 : index
    %c0_96 = arith.constant 0 : index
    %96 = memref.load %arg8[%c1_95, %c0_96] : memref<4x4xf32, #tpu.memory_space<smem>>
    %c1_97 = arith.constant 1 : index
    %c2_98 = arith.constant 2 : index
    %97 = vector.load %arg12[%c1_97, %c2_98] : memref<18x18xf32, #tpu.memory_space<vmem>>, vector<16x16xf32>
    %98 = vector.broadcast %96 : f32 to vector<16x16xf32>
    %99 = arith.mulf %98, %97 : vector<16x16xf32>
    %c1_99 = arith.constant 1 : index
    %c2_100 = arith.constant 2 : index
    %100 = memref.load %arg8[%c1_99, %c2_100] : memref<4x4xf32, #tpu.memory_space<smem>>
    %c1_101 = arith.constant 1 : index
    %c1_102 = arith.constant 1 : index
    %101 = vector.load %arg12[%c1_101, %c1_102] : memref<18x18xf32, #tpu.memory_space<vmem>>, vector<16x16xf32>
    %102 = vector.broadcast %100 : f32 to vector<16x16xf32>
    %103 = arith.mulf %102, %101 : vector<16x16xf32>
    %104 = arith.addf %99, %103 : vector<16x16xf32>
    %c3_103 = arith.constant 3 : index
    %c0_104 = arith.constant 0 : index
    %105 = memref.load %arg8[%c3_103, %c0_104] : memref<4x4xf32, #tpu.memory_space<smem>>
    %c0_105 = arith.constant 0 : index
    %c2_106 = arith.constant 2 : index
    %106 = vector.load %arg12[%c0_105, %c2_106] : memref<18x18xf32, #tpu.memory_space<vmem>>, vector<16x16xf32>
    %107 = vector.broadcast %105 : f32 to vector<16x16xf32>
    %108 = arith.mulf %107, %106 : vector<16x16xf32>
    %109 = arith.addf %104, %108 : vector<16x16xf32>
    %c3_107 = arith.constant 3 : index
    %c2_108 = arith.constant 2 : index
    %110 = memref.load %arg8[%c3_107, %c2_108] : memref<4x4xf32, #tpu.memory_space<smem>>
    %c0_109 = arith.constant 0 : index
    %c1_110 = arith.constant 1 : index
    %111 = vector.load %arg12[%c0_109, %c1_110] : memref<18x18xf32, #tpu.memory_space<vmem>>, vector<16x16xf32>
    %112 = vector.broadcast %110 : f32 to vector<16x16xf32>
    %113 = arith.mulf %112, %111 : vector<16x16xf32>
    %114 = arith.addf %109, %113 : vector<16x16xf32>
    %c0_111 = arith.constant 0 : index
    %c1_112 = arith.constant 1 : index
    %c0_113 = arith.constant 0 : index
    %c0_114 = arith.constant 0 : index
    %115 = vector.load %arg9[%c0_111, %c1_112, %c0_113, %c0_114] : memref<1x4x16x16xf32, #tpu.memory_space<vmem>>, vector<1x1x16x16xf32>
    %116 = vector.shape_cast %115 : vector<1x1x16x16xf32> to vector<16x16xf32>
    %117 = vector.shape_cast %114 : vector<16x16xf32> to vector<1x1x16x16xf32>
    tpu.vector_store %arg9[%c0_111, %c1_112, %c0_113, %c0_114], %117 {strides = array<i32>} : memref<1x4x16x16xf32, #tpu.memory_space<vmem>>, vector<1x1x16x16xf32>,
    %c0_115 = arith.constant 0 : index
    %c1_116 = arith.constant 1 : index
    %118 = memref.load %arg8[%c0_115, %c1_116] : memref<4x4xf32, #tpu.memory_space<smem>>
    %c2_117 = arith.constant 2 : index
    %c1_118 = arith.constant 1 : index
    %119 = vector.load %arg12[%c2_117, %c1_118] : memref<18x18xf32, #tpu.memory_space<vmem>>, vector<16x16xf32>
    %120 = vector.broadcast %118 : f32 to vector<16x16xf32>
    %121 = arith.mulf %120, %119 : vector<16x16xf32>
    %c0_119 = arith.constant 0 : index
    %c3_120 = arith.constant 3 : index
    %122 = memref.load %arg8[%c0_119, %c3_120] : memref<4x4xf32, #tpu.memory_space<smem>>
    %c2_121 = arith.constant 2 : index
    %c0_122 = arith.constant 0 : index
    %123 = vector.load %arg12[%c2_121, %c0_122] : memref<18x18xf32, #tpu.memory_space<vmem>>, vector<16x16xf32>
    %124 = vector.broadcast %122 : f32 to vector<16x16xf32>
    %125 = arith.mulf %124, %123 : vector<16x16xf32>
    %126 = arith.addf %121, %125 : vector<16x16xf32>
    %c2_123 = arith.constant 2 : index
    %c1_124 = arith.constant 1 : index
    %127 = memref.load %arg8[%c2_123, %c1_124] : memref<4x4xf32, #tpu.memory_space<smem>>
    %c1_125 = arith.constant 1 : index
    %c1_126 = arith.constant 1 : index
    %128 = vector.load %arg12[%c1_125, %c1_126] : memref<18x18xf32, #tpu.memory_space<vmem>>, vector<16x16xf32>
    %129 = vector.broadcast %127 : f32 to vector<16x16xf32>
    %130 = arith.mulf %129, %128 : vector<16x16xf32>
    %131 = arith.addf %126, %130 : vector<16x16xf32>
    %c2_127 = arith.constant 2 : index
    %c3_128 = arith.constant 3 : index
    %132 = memref.load %arg8[%c2_127, %c3_128] : memref<4x4xf32, #tpu.memory_space<smem>>
    %c1_129 = arith.constant 1 : index
    %c0_130 = arith.constant 0 : index
    %133 = vector.load %arg12[%c1_129, %c0_130] : memref<18x18xf32, #tpu.memory_space<vmem>>, vector<16x16xf32>
    %134 = vector.broadcast %132 : f32 to vector<16x16xf32>
    %135 = arith.mulf %134, %133 : vector<16x16xf32>
    %136 = arith.addf %131, %135 : vector<16x16xf32>
    %c0_131 = arith.constant 0 : index
    %c2_132 = arith.constant 2 : index
    %c0_133 = arith.constant 0 : index
    %c0_134 = arith.constant 0 : index
    %137 = vector.load %arg9[%c0_131, %c2_132, %c0_133, %c0_134] : memref<1x4x16x16xf32, #tpu.memory_space<vmem>>, vector<1x1x16x16xf32>
    %138 = vector.shape_cast %137 : vector<1x1x16x16xf32> to vector<16x16xf32>
    %139 = vector.shape_cast %136 : vector<16x16xf32> to vector<1x1x16x16xf32>
    tpu.vector_store %arg9[%c0_131, %c2_132, %c0_133, %c0_134], %139 {strides = array<i32>} : memref<1x4x16x16xf32, #tpu.memory_space<vmem>>, vector<1x1x16x16xf32>,
    %c0_135 = arith.constant 0 : index
    %c0_136 = arith.constant 0 : index
    %140 = memref.load %arg8[%c0_135, %c0_136] : memref<4x4xf32, #tpu.memory_space<smem>>
    %c2_137 = arith.constant 2 : index
    %c2_138 = arith.constant 2 : index
    %141 = vector.load %arg12[%c2_137, %c2_138] : memref<18x18xf32, #tpu.memory_space<vmem>>, vector<16x16xf32>
    %142 = vector.broadcast %140 : f32 to vector<16x16xf32>
    %143 = arith.mulf %142, %141 : vector<16x16xf32>
    %c0_139 = arith.constant 0 : index
    %c2_140 = arith.constant 2 : index
    %144 = memref.load %arg8[%c0_139, %c2_140] : memref<4x4xf32, #tpu.memory_space<smem>>
    %c2_141 = arith.constant 2 : index
    %c1_142 = arith.constant 1 : index
    %145 = vector.load %arg12[%c2_141, %c1_142] : memref<18x18xf32, #tpu.memory_space<vmem>>, vector<16x16xf32>
    %146 = vector.broadcast %144 : f32 to vector<16x16xf32>
    %147 = arith.mulf %146, %145 : vector<16x16xf32>
    %148 = arith.addf %143, %147 : vector<16x16xf32>
    %c2_143 = arith.constant 2 : index
    %c0_144 = arith.constant 0 : index
    %149 = memref.load %arg8[%c2_143, %c0_144] : memref<4x4xf32, #tpu.memory_space<smem>>
    %c1_145 = arith.constant 1 : index
    %c2_146 = arith.constant 2 : index
    %150 = vector.load %arg12[%c1_145, %c2_146] : memref<18x18xf32, #tpu.memory_space<vmem>>, vector<16x16xf32>
    %151 = vector.broadcast %149 : f32 to vector<16x16xf32>
    %152 = arith.mulf %151, %150 : vector<16x16xf32>
    %153 = arith.addf %148, %152 : vector<16x16xf32>
    %c2_147 = arith.constant 2 : index
    %c2_148 = arith.constant 2 : index
    %154 = memref.load %arg8[%c2_147, %c2_148] : memref<4x4xf32, #tpu.memory_space<smem>>
    %c1_149 = arith.constant 1 : index
    %c1_150 = arith.constant 1 : index
    %155 = vector.load %arg12[%c1_149, %c1_150] : memref<18x18xf32, #tpu.memory_space<vmem>>, vector<16x16xf32>
    %156 = vector.broadcast %154 : f32 to vector<16x16xf32>
    %157 = arith.mulf %156, %155 : vector<16x16xf32>
    %158 = arith.addf %153, %157 : vector<16x16xf32>
    %c0_151 = arith.constant 0 : index
    %c3_152 = arith.constant 3 : index
    %c0_153 = arith.constant 0 : index
    %c0_154 = arith.constant 0 : index
    %159 = vector.load %arg9[%c0_151, %c3_152, %c0_153, %c0_154] : memref<1x4x16x16xf32, #tpu.memory_space<vmem>>, vector<1x1x16x16xf32>
    %160 = vector.shape_cast %159 : vector<1x1x16x16xf32> to vector<16x16xf32>
    %161 = vector.shape_cast %158 : vector<16x16xf32> to vector<1x1x16x16xf32>
    tpu.vector_store %arg9[%c0_151, %c3_152, %c0_153, %c0_154], %161 {strides = array<i32>} : memref<1x4x16x16xf32, #tpu.memory_space<vmem>>, vector<1x1x16x16xf32>,
    return
  }
  func.func @transform_0(%arg0: i32) -> (i32, i32, i32, i32) {
    %c0_i32 = arith.constant 0 : i32
    %c0_i32_0 = arith.constant 0 : i32
    %c0_i32_1 = arith.constant 0 : i32
    %c0_i32_2 = arith.constant 0 : i32
    return %arg0, %c0_i32, %c0_i32_0, %c0_i32_1 : i32, i32, i32, i32
  }
  func.func @transform_1(%arg0: i32) -> (i32, i32) {
    %c0_i32 = arith.constant 0 : i32
    %c0_i32_0 = arith.constant 0 : i32
    %c0_i32_1 = arith.constant 0 : i32
    return %c0_i32, %c0_i32_0 : i32, i32
  }
  func.func @transform_2(%arg0: i32) -> (i32, i32) {
    %c0_i32 = arith.constant 0 : i32
    %c0_i32_0 = arith.constant 0 : i32
    %c0_i32_1 = arith.constant 0 : i32
    return %c0_i32, %c0_i32_0 : i32, i32
  }
  func.func @transform_3(%arg0: i32) -> (i32, i32) {
    %c0_i32 = arith.constant 0 : i32
    %c0_i32_0 = arith.constant 0 : i32
    %c0_i32_1 = arith.constant 0 : i32
    return %c0_i32, %c0_i32_0 : i32, i32
  }
  func.func @transform_4(%arg0: i32) -> (i32, i32) {
    %c0_i32 = arith.constant 0 : i32
    %c0_i32_0 = arith.constant 0 : i32
    %c0_i32_1 = arith.constant 0 : i32
    return %c0_i32, %c0_i32_0 : i32, i32
  }
  func.func @transform_5(%arg0: i32) -> (i32, i32) {
    %c0_i32 = arith.constant 0 : i32
    %c0_i32_0 = arith.constant 0 : i32
    %c0_i32_1 = arith.constant 0 : i32
    return %c0_i32, %c0_i32_0 : i32, i32
  }
  func.func @transform_6(%arg0: i32) -> i32 {
    %c0_i32 = arith.constant 0 : i32
    %c0_i32_0 = arith.constant 0 : i32
    return %c0_i32 : i32
  }
  func.func @transform_7(%arg0: i32) -> (i32, i32) {
    %c0_i32 = arith.constant 0 : i32
    %c0_i32_0 = arith.constant 0 : i32
    %c0_i32_1 = arith.constant 0 : i32
    return %c0_i32, %c0_i32_0 : i32, i32
  }
  func.func @transform_8(%arg0: i32) -> (i32, i32, i32, i32) {
    %c0_i32 = arith.constant 0 : i32
    %c0_i32_0 = arith.constant 0 : i32
    %c0_i32_1 = arith.constant 0 : i32
    %c0_i32_2 = arith.constant 0 : i32
    return %arg0, %c0_i32, %c0_i32_0, %c0_i32_1 : i32, i32, i32, i32
  }
}

</mosaic_0001>

<llo_original>
// kernel: tpu_custom_call.1
$region0: #{tpu_custom_call.1}
  #allocation0 [shape = 'u32[]', space=smem, size = 0x4, offset = 0x4, fixed_abs, tag = 'smem constant byte address 0x4 - core index']
  #allocation1 [shape = 'u32[144,128]{1,0:T(1,128)}', space=vmem, size = 0x12000, scoped, tag = 'internal scratch']
  #allocation2 [shape = 'f32[18,18,128]{2,1,0:T(8,128)}', space=vmem, size = 0x36000, scoped, tag = 'scratch operand']
  #allocation3 [shape = 'bf16[256,1152]{1,0:T(8,128)(2,1)}', space=vmem, size = 0x90000, scoped, tag = 'scratch operand']
  #allocation4 [shape = 'f32[18,18]{1,0:T(8,128)}', space=vmem, size = 0x3000, scoped, tag = 'scratch operand']
  #allocation5 [shape = 'f32[1]{0:T(128)S(6)}', space=smem, size = 0x200, scoped, tag = 'scoped memory for tpu_custom_call.1']
  %s0 = inlined_call_operand.hbm [shape: bf16[2,16,16,128], index: 0, kind: input, shape index: {}]
  %s1 = inlined_call_operand.hbm [shape: bf16[128,128], index: 1, kind: input, shape index: {}]
  %s2 = inlined_call_operand.vmem [shape: f32[1,128], index: 2, kind: input, shape index: {}]
  %s3 = inlined_call_operand.hbm [shape: bf16[1152,128], index: 3, kind: input, shape index: {}]
  %s4 = inlined_call_operand.vmem [shape: f32[1,128], index: 4, kind: input, shape index: {}]
  %s5 = inlined_call_operand.vmem [shape: f32[1,128], index: 5, kind: input, shape index: {}]
  %s6 = inlined_call_operand.<no memory space> [shape: f32[1], index: 6, kind: input, shape index: {}]
  %s7 = inlined_call_operand.vmem [shape: f32[4,4], index: 7, kind: input, shape index: {}]
  %s8 = inlined_call_operand.hbm [shape: f32[2,4,16,16], index: 8, kind: output, shape index: {}]
  %s9 = sld [smem:[#allocation0]]
  $region81: #{tpu_custom_call.1} parent=0
    _
  %s11 = ssub.s32 1, %s9
  %s12 = scalar_select 0, %s11, %s9
  %13 = sst [smem:[#allocation5]] %s6
  $region1: #{tpu_custom_call.1} parent=0
    #allocation6 [shape = 'u8[131072]{0}', space=vmem, size = 0x20000, scoped, tag = 'input window, operand 0']
    #allocation7 [shape = 's32[2]{0}', space=sflag, size = 0x8, scoped, tag = 'scoped memory for tpu_custom_call.1']
    #allocation8 [shape = 's32[2]{0}', space=sflag, size = 0x8, scoped, tag = 'scoped memory for tpu_custom_call.1']
    #allocation9 [shape = 's32[2]{0}', space=sflag, size = 0x8, scoped, tag = 'scoped memory for tpu_custom_call.1']
    #allocation10 [shape = 'u8[32768]{0}', space=vmem, size = 0x8000, scoped, tag = 'input window, operand 1, single buffered']
    #allocation11 [shape = 's32[1]{0}', space=sflag, size = 0x4, scoped, tag = 'scoped memory for tpu_custom_call.1']
    #allocation12 [shape = 'u8[294912]{0}', space=vmem, size = 0x48000, scoped, tag = 'input window, operand 3, single buffered']
    #allocation13 [shape = 'u8[2048]{0}', space=smem, size = 0x800, scoped, tag = 'input window, operand 7, single buffered']
    #allocation14 [shape = 'u8[65536]{0}', space=vmem, size = 0x10000, scoped, tag = 'output window, operand 0']
    %14 = vsyncpa [#allocation7], 0
    %s15 = scalar_lea.sflag [#allocation7], 1
    %16 = vsyncpa %s15, 0
    %17 = vsyncpa [#allocation11], 0
    %18 = vsyncpa [#allocation9], 0
    %19 = vsyncpa [#allocation8], 0
    %s20 = scalar_lea.sflag [#allocation8], 1
    %21 = vsyncpa %s20, 0
    loop: start=0, step=1, limit=4
    $region2: #{tpu_custom_call.1} parent=1 // loop_pre_header
      _
    $region3: #{tpu_custom_call.1} parent=1 // loop_header
      %s23 = sphi 0, %s27
      %p24 = scmp.ge.s32.totalorder %s23, 4
      %s33 = sphi 0, %s35
      %s36 = sphi 0, %s33
      %s37 = sphi 0, %s36
      %s53 = sphi 0, %s37
      %s57 = sphi 0, %s57
      %s59 = sphi 0, %s57
      %s60 = sphi 0, %s59
      %s74 = sphi 0, %s60
      %s78 = sphi 0, %s78
      %s80 = sphi 0, %s78
      %s81 = sphi 0, %s80
      %s95 = sphi 0, %s81
      %s99 = sphi 0, %s99
      %s101 = sphi 0, %s99
      %s102 = sphi 0, %s101
      %s116 = sphi 0, %s102
      %s120 = sphi 0, %s120
      %s122 = sphi 0, %s120
      %s123 = sphi 0, %s122
      %s137 = sphi 0, %s123
      %s141 = sphi 0, %s141
      %s143 = sphi 0, %s141
      %s144 = sphi 0, %s143
      %s158 = sphi 0, %s144
      %s162 = sphi 0, %s162
      %s164 = sphi 0, %s162
      %s165 = sphi 0, %s164
      %s179 = sphi 0, %s165
      %s183 = sphi 0, %s183
      %s185 = sphi 0, %s183
      %s186 = sphi 0, %s185
      %s200 = sphi 0, %s186
      %s206 = sphi 0, %s208
      %s209 = sphi 0, %s206
      %s210 = sphi 0, %s209
      %s226 = sphi 0, %s210
    $region4: #{tpu_custom_call.1} parent=1 // loop_header_branch
      %26 = sbr.rel (%p24) target = $region8
    $region5: #{tpu_custom_call.1} parent=1 // loop_body
      %s28 = ssub.s32 %s23, 1
      %s29 = ssub.s32 %s23, 2
      %s30 = sadd.s32 %s23, 1
      %s31 = ssub.s32 %s23, %s30
      %p32 = scmp.eq.s32.totalorder %s31, 0
      %s34 = sadd.s32 %s33, 1
      %s35 = scalar_select %p32, %s33, %s34
      %p38 = pneg %p32
      %p39 = scmp.eq.s32.totalorder %s23, 1
      %p40 = por %p38, %p39
      %p41 = scmp.ne.s32.totalorder %s33, %s36
      %p42 = scmp.eq.s32.totalorder %s23, 0
      %p43 = por %p41, %p42
      %p44 = scmp.ne.s32.totalorder %s33, %s36
      %p45 = scmp.eq.s32.totalorder %s28, 1
      %p46 = por %p44, %p45
      %p47 = scmp.ne.s32.totalorder %s36, %s37
      %p48 = scmp.eq.s32.totalorder %s28, 0
      %p49 = por %p47, %p48
      %p50 = scmp.ne.s32.totalorder %s36, %s37
      %p51 = scmp.eq.s32.totalorder %s29, 1
      %p52 = por %p50, %p51
      %p54 = scmp.ne.s32.totalorder %s37, %s53
      %p55 = scmp.eq.s32.totalorder %s29, 0
      %p56 = por %p54, %p55
      %s58 = sadd.s32 %s57, 1
      %p61 = scmp.eq.s32.totalorder %s23, 1
      %p62 = scmp.ne.s32.totalorder %s57, %s59
      %p63 = scmp.eq.s32.totalorder %s23, 0
      %p64 = por %p62, %p63
      %p65 = scmp.ne.s32.totalorder %s57, %s59
      %p66 = scmp.eq.s32.totalorder %s28, 1
      %p67 = por %p65, %p66
      %p68 = scmp.ne.s32.totalorder %s59, %s60
      %p69 = scmp.eq.s32.totalorder %s28, 0
      %p70 = por %p68, %p69
      %p71 = scmp.ne.s32.totalorder %s59, %s60
      %p72 = scmp.eq.s32.totalorder %s29, 1
      %p73 = por %p71, %p72
      %p75 = scmp.ne.s32.totalorder %s60, %s74
      %p76 = scmp.eq.s32.totalorder %s29, 0
      %p77 = por %p75, %p76
      %s79 = sadd.s32 %s78, 1
      %p82 = scmp.eq.s32.totalorder %s23, 1
      %p83 = scmp.ne.s32.totalorder %s78, %s80
      %p84 = scmp.eq.s32.totalorder %s23, 0
      %p85 = por %p83, %p84
      %p86 = scmp.ne.s32.totalorder %s78, %s80
      %p87 = scmp.eq.s32.totalorder %s28, 1
      %p88 = por %p86, %p87
      %p89 = scmp.ne.s32.totalorder %s80, %s81
      %p90 = scmp.eq.s32.totalorder %s28, 0
      %p91 = por %p89, %p90
      %p92 = scmp.ne.s32.totalorder %s80, %s81
      %p93 = scmp.eq.s32.totalorder %s29, 1
      %p94 = por %p92, %p93
      %p96 = scmp.ne.s32.totalorder %s81, %s95
      %p97 = scmp.eq.s32.totalorder %s29, 0
      %p98 = por %p96, %p97
      %s100 = sadd.s32 %s99, 1
      %p103 = scmp.eq.s32.totalorder %s23, 1
      %p104 = scmp.ne.s32.totalorder %s99, %s101
      %p105 = scmp.eq.s32.totalorder %s23, 0
      %p106 = por %p104, %p105
      %p107 = scmp.ne.s32.totalorder %s99, %s101
      %p108 = scmp.eq.s32.totalorder %s28, 1
      %p109 = por %p107, %p108
      %p110 = scmp.ne.s32.totalorder %s101, %s102
      %p111 = scmp.eq.s32.totalorder %s28, 0
      %p112 = por %p110, %p111
      %p113 = scmp.ne.s32.totalorder %s101, %s102
      %p114 = scmp.eq.s32.totalorder %s29, 1
      %p115 = por %p113, %p114
      %p117 = scmp.ne.s32.totalorder %s102, %s116
      %p118 = scmp.eq.s32.totalorder %s29, 0
      %p119 = por %p117, %p118
      %s121 = sadd.s32 %s120, 1
      %p124 = scmp.eq.s32.totalorder %s23, 1
      %p125 = scmp.ne.s32.totalorder %s120, %s122
      %p126 = scmp.eq.s32.totalorder %s23, 0
      %p127 = por %p125, %p126
      %p128 = scmp.ne.s32.totalorder %s120, %s122
      %p129 = scmp.eq.s32.totalorder %s28, 1
      %p130 = por %p128, %p129
      %p131 = scmp.ne.s32.totalorder %s122, %s123
      %p132 = scmp.eq.s32.totalorder %s28, 0
      %p133 = por %p131, %p132
      %p134 = scmp.ne.s32.totalorder %s122, %s123
      %p135 = scmp.eq.s32.totalorder %s29, 1
      %p136 = por %p134, %p135
      %p138 = scmp.ne.s32.totalorder %s123, %s137
      %p139 = scmp.eq.s32.totalorder %s29, 0
      %p140 = por %p138, %p139
      %s142 = sadd.s32 %s141, 1
      %p145 = scmp.eq.s32.totalorder %s23, 1
      %p146 = scmp.ne.s32.totalorder %s141, %s143
      %p147 = scmp.eq.s32.totalorder %s23, 0
      %p148 = por %p146, %p147
      %p149 = scmp.ne.s32.totalorder %s141, %s143
      %p150 = scmp.eq.s32.totalorder %s28, 1
      %p151 = por %p149, %p150
      %p152 = scmp.ne.s32.totalorder %s143, %s144
      %p153 = scmp.eq.s32.totalorder %s28, 0
      %p154 = por %p152, %p153
      %p155 = scmp.ne.s32.totalorder %s143, %s144
      %p156 = scmp.eq.s32.totalorder %s29, 1
      %p157 = por %p155, %p156
      %p159 = scmp.ne.s32.totalorder %s144, %s158
      %p160 = scmp.eq.s32.totalorder %s29, 0
      %p161 = por %p159, %p160
      %s163 = sadd.s32 %s162, 1
      %p166 = scmp.eq.s32.totalorder %s23, 1
      %p167 = scmp.ne.s32.totalorder %s162, %s164
      %p168 = scmp.eq.s32.totalorder %s23, 0
      %p169 = por %p167, %p168
      %p170 = scmp.ne.s32.totalorder %s162, %s164
      %p171 = scmp.eq.s32.totalorder %s28, 1
      %p172 = por %p170, %p171
      %p173 = scmp.ne.s32.totalorder %s164, %s165
      %p174 = scmp.eq.s32.totalorder %s28, 0
      %p175 = por %p173, %p174
      %p176 = scmp.ne.s32.totalorder %s164, %s165
      %p177 = scmp.eq.s32.totalorder %s29, 1
      %p178 = por %p176, %p177
      %p180 = scmp.ne.s32.totalorder %s165, %s179
      %p181 = scmp.eq.s32.totalorder %s29, 0
      %p182 = por %p180, %p181
      %s184 = sadd.s32 %s183, 1
      %p187 = scmp.eq.s32.totalorder %s23, 1
      %p188 = scmp.ne.s32.totalorder %s183, %s185
      %p189 = scmp.eq.s32.totalorder %s23, 0
      %p190 = por %p188, %p189
      %p191 = scmp.ne.s32.totalorder %s183, %s185
      %p192 = scmp.eq.s32.totalorder %s28, 1
      %p193 = por %p191, %p192
      %p194 = scmp.ne.s32.totalorder %s185, %s186
      %p195 = scmp.eq.s32.totalorder %s28, 0
      %p196 = por %p194, %p195
      %p197 = scmp.ne.s32.totalorder %s185, %s186
      %p198 = scmp.eq.s32.totalorder %s29, 1
      %p199 = por %p197, %p198
      %p201 = scmp.ne.s32.totalorder %s186, %s200
      %p202 = scmp.eq.s32.totalorder %s29, 0
      %p203 = por %p201, %p202
      %s204 = ssub.s32 %s23, %s30
      %p205 = scmp.eq.s32.totalorder %s204, 0
      %s207 = sadd.s32 %s206, 1
      %s208 = scalar_select %p205, %s206, %s207
      %p211 = pneg %p205
      %p212 = scmp.eq.s32.totalorder %s23, 1
      %p213 = por %p211, %p212
      %p214 = scmp.ne.s32.totalorder %s206, %s209
      %p215 = scmp.eq.s32.totalorder %s23, 0
      %p216 = por %p214, %p215
      %p217 = scmp.ne.s32.totalorder %s206, %s209
      %p218 = scmp.eq.s32.totalorder %s28, 1
      %p219 = por %p217, %p218
      %p220 = scmp.ne.s32.totalorder %s209, %s210
      %p221 = scmp.eq.s32.totalorder %s28, 0
      %p222 = por %p220, %p221
      %p223 = scmp.ne.s32.totalorder %s209, %s210
      %p224 = scmp.eq.s32.totalorder %s29, 1
      %p225 = por %p223, %p224
      %p227 = scmp.ne.s32.totalorder %s210, %s226
      %p228 = scmp.eq.s32.totalorder %s29, 0
      %p229 = por %p227, %p228
      %p230 = scmp.le.s32.totalorder 1, %s23
      %p231 = scmp.lt.s32.totalorder %s23, 3
      %p232 = pnand %p230, %p231
      %p233 = pneg %p232
      // Predicated region
      $region9: #{tpu_custom_call.1} parent=5 // pred_check
        _
      $region10: #{tpu_custom_call.1} parent=5 // pred_check_branch
        %235 = sbr.rel (%p232) target = $region12
      $region11: #{tpu_custom_call.1} parent=5 // pred_region
        %s236 = ssub.s32 %s23, 1
        // Predicated region
        $region13: #{tpu_custom_call.1} parent=11 // pred_check
          %p237 = pneg %p70
        $region14: #{tpu_custom_call.1} parent=11 // pred_check_branch
          %239 = sbr.rel (%p237) target = $region16
        $region15: #{tpu_custom_call.1} parent=11 // pred_region
          %s241 = ssub.s32 1024, 1024
          %242 = vsyncadd [#allocation11], %s241
          %s243 = sshll.u32 [#allocation10], 4
          %s244 = int_to_ptr.vmem [resolvable:$true] %s243
          %249 = dma.hbm_to_vmem [thread:$0]  %s1, 1024, %s244, [#allocation11], 64, 64, 4
        $region16: #{tpu_custom_call.1} parent=11 // pred_fallthru
          _
        // Predicated region
        $region17: #{tpu_custom_call.1} parent=11 // pred_check
          %p250 = pneg %p91
        $region18: #{tpu_custom_call.1} parent=11 // pred_check_branch
          %252 = sbr.rel (%p250) target = $region20
        $region19: #{tpu_custom_call.1} parent=11 // pred_region
          _
        $region20: #{tpu_custom_call.1} parent=11 // pred_fallthru
          _
        // Predicated region
        $region21: #{tpu_custom_call.1} parent=11 // pred_check
          %p253 = pneg %p112
        $region22: #{tpu_custom_call.1} parent=11 // pred_check_branch
          %255 = sbr.rel (%p253) target = $region24
        $region23: #{tpu_custom_call.1} parent=11 // pred_region
          %s257 = ssub.s32 9216, 9216
          %258 = vsyncadd [#allocation11], %s257
          %s259 = sshll.u32 [#allocation12], 4
          %s260 = int_to_ptr.vmem [resolvable:$true] %s259
          %265 = dma.hbm_to_vmem [thread:$0]  %s3, 9216, %s260, [#allocation11], 64, 64, 4
        $region24: #{tpu_custom_call.1} parent=11 // pred_fallthru
          _
        // Predicated region
        $region25: #{tpu_custom_call.1} parent=11 // pred_check
          %p266 = pneg %p133
        $region26: #{tpu_custom_call.1} parent=11 // pred_check_branch
          %268 = sbr.rel (%p266) target = $region28
        $region27: #{tpu_custom_call.1} parent=11 // pred_region
          _
        $region28: #{tpu_custom_call.1} parent=11 // pred_fallthru
          _
        // Predicated region
        $region29: #{tpu_custom_call.1} parent=11 // pred_check
          %p269 = pneg %p154
        $region30: #{tpu_custom_call.1} parent=11 // pred_check_branch
          %271 = sbr.rel (%p269) target = $region32
        $region31: #{tpu_custom_call.1} parent=11 // pred_region
          _
        $region32: #{tpu_custom_call.1} parent=11 // pred_fallthru
          _
        // Predicated region
        $region33: #{tpu_custom_call.1} parent=11 // pred_check
          %p272 = pneg %p175
        $region34: #{tpu_custom_call.1} parent=11 // pred_check_branch
          %274 = sbr.rel (%p272) target = $region36
        $region35: #{tpu_custom_call.1} parent=11 // pred_region
          _
        $region36: #{tpu_custom_call.1} parent=11 // pred_fallthru
          _
        // Predicated region
        $region37: #{tpu_custom_call.1} parent=11 // pred_check
          %p275 = pneg %p196
        $region38: #{tpu_custom_call.1} parent=11 // pred_check_branch
          %277 = sbr.rel (%p275) target = $region40
        $region39: #{tpu_custom_call.1} parent=11 // pred_region
          %s279 = ssub.s32 64, 64
          %280 = vsyncadd [#allocation9], %s279
          %s282 = sshll.u32 %s7, 4
          %s283 = int_to_ptr.vmem [resolvable:$true] %s282
          %285 = dma.vmem_to_smem %s283, 64, [#allocation13], [#allocation9]
        $region40: #{tpu_custom_call.1} parent=11 // pred_fallthru
          _
      $region12: #{tpu_custom_call.1} parent=5 // pred_fallthru
        _
      %p286 = scmp.lt.s32.totalorder %s23, 2
      // Predicated region
      $region41: #{tpu_custom_call.1} parent=5 // pred_check
        %p287 = pneg %p286
      $region42: #{tpu_custom_call.1} parent=5 // pred_check_branch
        %289 = sbr.rel (%p287) target = $region44
      $region43: #{tpu_custom_call.1} parent=5 // pred_region
        // Predicated region
        $region45: #{tpu_custom_call.1} parent=43 // pred_check
          %p290 = pneg %p43
        $region46: #{tpu_custom_call.1} parent=43 // pred_check_branch
          %292 = sbr.rel (%p290) target = $region48
        $region47: #{tpu_custom_call.1} parent=43 // pred_region
          %s293 = sand.u32 %s33, 1
          %s294 = scalar_lea.sflag [#allocation7], %s293
          %s295 = sand.u32 %s33, 1
          %s296 = smul.addr %s295, 128
          %s297 = scalar_lea.vmem [#allocation6], %s296
          %s299 = ssub.s32 2048, 2048
          %300 = vsyncadd %s294, %s299
          %s301 = smul.addr %s23, 32
          %s302 = smul.addr %s301, 64
          %s303 = scalar_lea.hbm %s0, %s302
          %s304 = sshll.u32 %s297, 4
          %s305 = int_to_ptr.vmem [resolvable:$true] %s304
          %310 = dma.hbm_to_vmem [thread:$0]  %s303, 2048, %s305, %s294, 64, 64, 4
        $region48: #{tpu_custom_call.1} parent=43 // pred_fallthru
          _
      $region44: #{tpu_custom_call.1} parent=5 // pred_fallthru
        _
      %p311 = scmp.le.s32.totalorder 1, %s23
      %p312 = scmp.lt.s32.totalorder %s23, 3
      %p313 = pnand %p311, %p312
      %p314 = pneg %p313
      // Predicated region
      $region49: #{tpu_custom_call.1} parent=5 // pred_check
        _
      $region50: #{tpu_custom_call.1} parent=5 // pred_check_branch
        %316 = sbr.rel (%p313) target = $region52
      $region51: #{tpu_custom_call.1} parent=5 // pred_region
        %s317 = ssub.s32 %s23, 1
        %s318 = sand.u32 %s36, 1
        %s319 = scalar_lea.sflag [#allocation7], %s318
        %s320 = sand.u32 %s36, 1
        %s321 = smul.addr %s320, 128
        %s322 = scalar_lea.vmem [#allocation6], %s321
        // Predicated region
        $region53: #{tpu_custom_call.1} parent=51 // pred_check
          %p323 = pneg %p49
        $region54: #{tpu_custom_call.1} parent=51 // pred_check_branch
          %325 = sbr.rel (%p323) target = $region56
        $region55: #{tpu_custom_call.1} parent=51 // pred_region
          %326 = dma.done %s319, 2048
        $region56: #{tpu_custom_call.1} parent=51 // pred_fallthru
          _
        // Predicated region
        $region57: #{tpu_custom_call.1} parent=51 // pred_check
          %p327 = pneg %p70
        $region58: #{tpu_custom_call.1} parent=51 // pred_check_branch
          %329 = sbr.rel (%p327) target = $region60
        $region59: #{tpu_custom_call.1} parent=51 // pred_region
          %330 = dma.done [#allocation11], 1024
        $region60: #{tpu_custom_call.1} parent=51 // pred_fallthru
          _
        // Predicated region
        $region61: #{tpu_custom_call.1} parent=51 // pred_check
          %p331 = pneg %p112
        $region62: #{tpu_custom_call.1} parent=51 // pred_check_branch
          %333 = sbr.rel (%p331) target = $region64
        $region63: #{tpu_custom_call.1} parent=51 // pred_region
          %334 = dma.done [#allocation11], 9216
        $region64: #{tpu_custom_call.1} parent=51 // pred_fallthru
          _
        // Predicated region
        $region65: #{tpu_custom_call.1} parent=51 // pred_check
          %p335 = pneg %p196
        $region66: #{tpu_custom_call.1} parent=51 // pred_check_branch
          %337 = sbr.rel (%p335) target = $region68
        $region67: #{tpu_custom_call.1} parent=51 // pred_region
          %338 = dma.done [#allocation9], 64
        $region68: #{tpu_custom_call.1} parent=51 // pred_fallthru
          _
        %339 = sfence
        %s340 = sand.u32 %s36, 1
        %s341 = scalar_lea.sflag [#allocation7], %s340
        %s342 = sand.u32 %s36, 1
        %s343 = smul.addr %s342, 128
        %s344 = scalar_lea.vmem [#allocation6], %s343
        %p345 = pneg %p49
        %p346 = pneg %p46
        %p347 = pneg %p70
        %p348 = pneg %p67
        %p349 = pneg %p91
        %p350 = pneg %p88
        %p351 = pneg %p112
        %p352 = pneg %p109
        %p353 = pneg %p133
        %p354 = pneg %p130
        %p355 = pneg %p154
        %p356 = pneg %p151
        %p357 = pneg %p175
        %p358 = pneg %p172
        %p359 = pneg %p196
        %p360 = pneg %p193
        %p361 = pneg %p222
        %p362 = pneg %p219
        %s363 = sand.u32 %s209, 1
        %s364 = scalar_lea.sflag [#allocation8], %s363
        %s365 = sand.u32 %s209, 1
        %s366 = smul.addr %s365, 64
        %s367 = scalar_lea.vmem [#allocation14], %s366
        %v369 = vld [vmem:[%s322] sm:$0xf]
        %v370 = vld [vmem:[%s322 + $0x4] sm:$0xf]
        %v371 = vld [vmem:[%s322 + $0x8] sm:$0xf]
        %v372 = vld [vmem:[%s322 + $0xc] sm:$0xf]
        %v373 = vld [vmem:[%s322 + $0x10] sm:$0xf]
        %v374 = vld [vmem:[%s322 + $0x14] sm:$0xf]
        %v375 = vld [vmem:[%s322 + $0x18] sm:$0xf]
        %v376 = vld [vmem:[%s322 + $0x1c] sm:$0xf]
        %v377 = vld [vmem:[%s322 + $0x20] sm:$0xf]
        %v378 = vld [vmem:[%s322 + $0x24] sm:$0xf]
        %v379 = vld [vmem:[%s322 + $0x28] sm:$0xf]
        %v380 = vld [vmem:[%s322 + $0x2c] sm:$0xf]
        %v381 = vld [vmem:[%s322 + $0x30] sm:$0xf]
        %v382 = vld [vmem:[%s322 + $0x34] sm:$0xf]
        %v383 = vld [vmem:[%s322 + $0x38] sm:$0xf]
        %v384 = vld [vmem:[%s322 + $0x3c] sm:$0xf]
        %v385 = vld [vmem:[%s322 + $0x40] sm:$0xf]
        %v386 = vld [vmem:[%s322 + $0x44] sm:$0xf]
        %v387 = vld [vmem:[%s322 + $0x48] sm:$0xf]
        %v388 = vld [vmem:[%s322 + $0x4c] sm:$0xf]
        %v389 = vld [vmem:[%s322 + $0x50] sm:$0xf]
        %v390 = vld [vmem:[%s322 + $0x54] sm:$0xf]
        %v391 = vld [vmem:[%s322 + $0x58] sm:$0xf]
        %v392 = vld [vmem:[%s322 + $0x5c] sm:$0xf]
        %v393 = vld [vmem:[%s322 + $0x60] sm:$0xf]
        %v394 = vld [vmem:[%s322 + $0x64] sm:$0xf]
        %v395 = vld [vmem:[%s322 + $0x68] sm:$0xf]
        %v396 = vld [vmem:[%s322 + $0x6c] sm:$0xf]
        %v397 = vld [vmem:[%s322 + $0x70] sm:$0xf]
        %v398 = vld [vmem:[%s322 + $0x74] sm:$0xf]
        %v399 = vld [vmem:[%s322 + $0x78] sm:$0xf]
        %v400 = vld [vmem:[%s322 + $0x7c] sm:$0xf]
        %v401 = vld [vmem:[#allocation10] sm:$0xf]
        %v402 = vld [vmem:[#allocation10 + $0x4] sm:$0xf]
        %v403 = vld [vmem:[#allocation10 + $0x8] sm:$0xf]
        %v404 = vld [vmem:[#allocation10 + $0xc] sm:$0xf]
        %v405 = vld [vmem:[#allocation10 + $0x10] sm:$0xf]
        %v406 = vld [vmem:[#allocation10 + $0x14] sm:$0xf]
        %v407 = vld [vmem:[#allocation10 + $0x18] sm:$0xf]
        %v408 = vld [vmem:[#allocation10 + $0x1c] sm:$0xf]
        %v409 = vld [vmem:[#allocation10 + $0x20] sm:$0xf]
        %v410 = vld [vmem:[#allocation10 + $0x24] sm:$0xf]
        %v411 = vld [vmem:[#allocation10 + $0x28] sm:$0xf]
        %v412 = vld [vmem:[#allocation10 + $0x2c] sm:$0xf]
        %v413 = vld [vmem:[#allocation10 + $0x30] sm:$0xf]
        %v414 = vld [vmem:[#allocation10 + $0x34] sm:$0xf]
        %v415 = vld [vmem:[#allocation10 + $0x38] sm:$0xf]
        %v416 = vld [vmem:[#allocation10 + $0x3c] sm:$0xf]
        %v417 = vld [vmem:[%s2] sm:$0x1]
        %v419 = vlaneseq
        %v420 = vshrl.u32 %v419, 7
        %v421 = vsub.s32 0, %v420
        %v422 = vrot.slane %v417, %v421
        %v456 = vunpack.c.l.b16 %v369
        %v457 = vunpack.c.l.b16 %v370
        %v458 = vunpack.c.l.b16 %v371
        %v459 = vunpack.c.l.b16 %v372
        %v460 = vunpack.c.l.b16 %v373
        %v461 = vunpack.c.l.b16 %v374
        %v462 = vunpack.c.l.b16 %v375
        %v463 = vunpack.c.l.b16 %v376
        %v464 = vunpack.c.l.b16 %v377
        %v465 = vunpack.c.l.b16 %v378
        %v466 = vunpack.c.l.b16 %v379
        %v467 = vunpack.c.l.b16 %v380
        %v468 = vunpack.c.l.b16 %v381
        %v469 = vunpack.c.l.b16 %v382
        %v470 = vunpack.c.l.b16 %v383
        %v471 = vunpack.c.l.b16 %v384
        %v472 = vunpack.c.l.b16 %v385
        %v473 = vunpack.c.l.b16 %v386
        %v474 = vunpack.c.l.b16 %v387
        %v475 = vunpack.c.l.b16 %v388
        %v476 = vunpack.c.l.b16 %v389
        %v477 = vunpack.c.l.b16 %v390
        %v478 = vunpack.c.l.b16 %v391
        %v479 = vunpack.c.l.b16 %v392
        %v480 = vunpack.c.l.b16 %v393
        %v481 = vunpack.c.l.b16 %v394
        %v482 = vunpack.c.l.b16 %v395
        %v483 = vunpack.c.l.b16 %v396
        %v484 = vunpack.c.l.b16 %v397
        %v485 = vunpack.c.l.b16 %v398
        %v486 = vunpack.c.l.b16 %v399
        %v487 = vunpack.c.l.b16 %v400
        %v488 = vpack.c.b16 %v457, %v456
        %v489 = vpack.c.b16 %v459, %v458
        %v490 = vpack.c.b16 %v461, %v460
        %v491 = vpack.c.b16 %v463, %v462
        %v492 = vpack.c.b16 %v465, %v464
        %v493 = vpack.c.b16 %v467, %v466
        %v494 = vpack.c.b16 %v469, %v468
        %v495 = vpack.c.b16 %v471, %v470
        %v496 = vpack.c.b16 %v473, %v472
        %v497 = vpack.c.b16 %v475, %v474
        %v498 = vpack.c.b16 %v477, %v476
        %v499 = vpack.c.b16 %v479, %v478
        %v500 = vpack.c.b16 %v481, %v480
        %v501 = vpack.c.b16 %v483, %v482
        %v502 = vpack.c.b16 %v485, %v484
        %v503 = vpack.c.b16 %v487, %v486
        %v536 = vunpack.c.l.b16 %v401
        %v537 = vunpack.c.l.b16 %v402
        %v538 = vunpack.c.l.b16 %v403
        %v539 = vunpack.c.l.b16 %v404
        %v540 = vunpack.c.l.b16 %v405
        %v541 = vunpack.c.l.b16 %v406
        %v542 = vunpack.c.l.b16 %v407
        %v543 = vunpack.c.l.b16 %v408
        %v544 = vunpack.c.l.b16 %v409
        %v545 = vunpack.c.l.b16 %v410
        %v546 = vunpack.c.l.b16 %v411
        %v547 = vunpack.c.l.b16 %v412
        %v548 = vunpack.c.l.b16 %v413
        %v549 = vunpack.c.l.b16 %v414
        %v550 = vunpack.c.l.b16 %v415
        %v551 = vunpack.c.l.b16 %v416
        %v552 = vpack.c.b16 %v537, %v536
        %v553 = vpack.c.b16 %v539, %v538
        %v554 = vpack.c.b16 %v541, %v540
        %v555 = vpack.c.b16 %v543, %v542
        %v556 = vpack.c.b16 %v545, %v544
        %v557 = vpack.c.b16 %v547, %v546
        %v558 = vpack.c.b16 %v549, %v548
        %v559 = vpack.c.b16 %v551, %v550
        %568 = vmatprep.subr.bf16.mxu0 0
        %569 = vmatpush1.bf16.msra.mxu0 %v559
        %570 = vmatprep.subr.bf16.mxu0 0
        %571 = vmatpush1.bf16.msra.mxu0 %v558
        %572 = vmatprep.subr.bf16.mxu0 0
        %573 = vmatpush1.bf16.msra.mxu0 %v557
        %574 = vmatprep.subr.bf16.mxu0 0
        %575 = vmatpush1.bf16.msra.mxu0 %v556
        %576 = vmatprep.subr.bf16.mxu0 0
        %577 = vmatpush1.bf16.msra.mxu0 %v555
        %578 = vmatprep.subr.bf16.mxu0 0
        %579 = vmatpush1.bf16.msra.mxu0 %v554
        %580 = vmatprep.subr.bf16.mxu0 0
        %581 = vmatpush1.bf16.msra.mxu0 %v553
        %582 = vmatprep.subr.bf16.mxu0 0
        %583 = vmatpush1.bf16.msra.mxu0 %v552
        %584 = vmatprep.subr.bf16.mxu0 0
        %585 = vmatpush2.bf16.msra.mxu0 0
        %586 = vmatprep.subr.bf16.mxu0 0
        %587 = vmatpush2.bf16.msra.mxu0 0
        %588 = vmatprep.subr.bf16.mxu0 0
        %589 = vmatpush2.bf16.msra.mxu0 0
        %590 = vmatprep.subr.bf16.mxu0 0
        %591 = vmatpush2.bf16.msra.mxu0 0
        %592 = vmatprep.subr.bf16.mxu0 0
        %593 = vmatpush2.bf16.msra.mxu0 0
        %594 = vmatprep.subr.bf16.mxu0 0
        %595 = vmatpush2.bf16.msra.mxu0 0
        %596 = vmatprep.subr.bf16.mxu0 0
        %597 = vmatpush2.bf16.msra.mxu0 0
        %598 = vmatprep.subr.bf16.mxu0 0
        %599 = vmatpush2.bf16.msra.mxu0 0
        %600 = vmatprep.mubr.bf16.mxu0 0
        %601 = vmatmul.mubr.bf16.gmra.mxu0 %v488
        %v602 = vpop.f32.mrf.mxu0
        %v603 = vadd.f32 %v422, %v602
        %v604 = vpop.f32.mrf.mxu0
        %v605 = vpop.f32.mrf.mxu0
        %v606 = vadd.f32 %v422, %v605
        %v607 = vpop.f32.mrf.mxu0
        %608 = vmatprep.mubr.bf16.mxu0 0
        %609 = vmatmul.mubr.bf16.gmra.mxu0 %v489
        %v610 = vpop.f32.mrf.mxu0
        %v611 = vadd.f32 %v422, %v610
        %v612 = vpop.f32.mrf.mxu0
        %v613 = vpop.f32.mrf.mxu0
        %v614 = vadd.f32 %v422, %v613
        %v615 = vpop.f32.mrf.mxu0
        %616 = vmatprep.mubr.bf16.mxu0 0
        %617 = vmatmul.mubr.bf16.gmra.mxu0 %v490
        %v618 = vpop.f32.mrf.mxu0
        %v619 = vadd.f32 %v422, %v618
        %v620 = vpop.f32.mrf.mxu0
        %v621 = vpop.f32.mrf.mxu0
        %v622 = vadd.f32 %v422, %v621
        %v623 = vpop.f32.mrf.mxu0
        %624 = vmatprep.mubr.bf16.mxu0 0
        %625 = vmatmul.mubr.bf16.gmra.mxu0 %v491
        %v626 = vpop.f32.mrf.mxu0
        %v627 = vadd.f32 %v422, %v626
        %v628 = vpop.f32.mrf.mxu0
        %v629 = vpop.f32.mrf.mxu0
        %v630 = vadd.f32 %v422, %v629
        %v631 = vpop.f32.mrf.mxu0
        %632 = vmatprep.mubr.bf16.mxu0 0
        %633 = vmatmul.mubr.bf16.gmra.mxu0 %v492
        %v634 = vpop.f32.mrf.mxu0
        %v635 = vadd.f32 %v422, %v634
        %v636 = vpop.f32.mrf.mxu0
        %v637 = vpop.f32.mrf.mxu0
        %v638 = vadd.f32 %v422, %v637
        %v639 = vpop.f32.mrf.mxu0
        %640 = vmatprep.mubr.bf16.mxu0 0
        %641 = vmatmul.mubr.bf16.gmra.mxu0 %v493
        %v642 = vpop.f32.mrf.mxu0
        %v643 = vadd.f32 %v422, %v642
        %v644 = vpop.f32.mrf.mxu0
        %v645 = vpop.f32.mrf.mxu0
        %v646 = vadd.f32 %v422, %v645
        %v647 = vpop.f32.mrf.mxu0
        %648 = vmatprep.mubr.bf16.mxu0 0
        %649 = vmatmul.mubr.bf16.gmra.mxu0 %v494
        %v650 = vpop.f32.mrf.mxu0
        %v651 = vadd.f32 %v422, %v650
        %v652 = vpop.f32.mrf.mxu0
        %v653 = vpop.f32.mrf.mxu0
        %v654 = vadd.f32 %v422, %v653
        %v655 = vpop.f32.mrf.mxu0
        %656 = vmatprep.mubr.bf16.mxu0 0
        %657 = vmatmul.mubr.bf16.gmra.mxu0 %v495
        %v658 = vpop.f32.mrf.mxu0
        %v659 = vadd.f32 %v422, %v658
        %v660 = vpop.f32.mrf.mxu0
        %v661 = vpop.f32.mrf.mxu0
        %v662 = vadd.f32 %v422, %v661
        %v663 = vpop.f32.mrf.mxu0
        %664 = vmatprep.mubr.bf16.mxu0 0
        %665 = vmatmul.mubr.bf16.gmra.mxu0 %v496
        %v666 = vpop.f32.mrf.mxu0
        %v667 = vadd.f32 %v422, %v666
        %v668 = vpop.f32.mrf.mxu0
        %v669 = vpop.f32.mrf.mxu0
        %v670 = vadd.f32 %v422, %v669
        %v671 = vpop.f32.mrf.mxu0
        %672 = vmatprep.mubr.bf16.mxu0 0
        %673 = vmatmul.mubr.bf16.gmra.mxu0 %v497
        %v674 = vpop.f32.mrf.mxu0
        %v675 = vadd.f32 %v422, %v674
        %v676 = vpop.f32.mrf.mxu0
        %v677 = vpop.f32.mrf.mxu0
        %v678 = vadd.f32 %v422, %v677
        %v679 = vpop.f32.mrf.mxu0
        %680 = vmatprep.mubr.bf16.mxu0 0
        %681 = vmatmul.mubr.bf16.gmra.mxu0 %v498
        %v682 = vpop.f32.mrf.mxu0
        %v683 = vadd.f32 %v422, %v682
        %v684 = vpop.f32.mrf.mxu0
        %v685 = vpop.f32.mrf.mxu0
        %v686 = vadd.f32 %v422, %v685
        %v687 = vpop.f32.mrf.mxu0
        %688 = vmatprep.mubr.bf16.mxu0 0
        %689 = vmatmul.mubr.bf16.gmra.mxu0 %v499
        %v690 = vpop.f32.mrf.mxu0
        %v691 = vadd.f32 %v422, %v690
        %v692 = vpop.f32.mrf.mxu0
        %v693 = vpop.f32.mrf.mxu0
        %v694 = vadd.f32 %v422, %v693
        %v695 = vpop.f32.mrf.mxu0
        %696 = vmatprep.mubr.bf16.mxu0 0
        %697 = vmatmul.mubr.bf16.gmra.mxu0 %v500
        %v698 = vpop.f32.mrf.mxu0
        %v699 = vadd.f32 %v422, %v698
        %v700 = vpop.f32.mrf.mxu0
        %v701 = vpop.f32.mrf.mxu0
        %v702 = vadd.f32 %v422, %v701
        %v703 = vpop.f32.mrf.mxu0
        %704 = vmatprep.mubr.bf16.mxu0 0
        %705 = vmatmul.mubr.bf16.gmra.mxu0 %v501
        %v706 = vpop.f32.mrf.mxu0
        %v707 = vadd.f32 %v422, %v706
        %v708 = vpop.f32.mrf.mxu0
        %v709 = vpop.f32.mrf.mxu0
        %v710 = vadd.f32 %v422, %v709
        %v711 = vpop.f32.mrf.mxu0
        %712 = vmatprep.mubr.bf16.mxu0 0
        %713 = vmatmul.mubr.bf16.gmra.mxu0 %v502
        %v714 = vpop.f32.mrf.mxu0
        %v715 = vadd.f32 %v422, %v714
        %v716 = vpop.f32.mrf.mxu0
        %v717 = vpop.f32.mrf.mxu0
        %v718 = vadd.f32 %v422, %v717
        %v719 = vpop.f32.mrf.mxu0
        %720 = vmatprep.mubr.bf16.mxu0 0
        %721 = vmatmul.mubr.bf16.gmra.mxu0 %v503
        %v722 = vpop.f32.mrf.mxu0
        %v723 = vadd.f32 %v422, %v722
        %v724 = vpop.f32.mrf.mxu0
        %v725 = vpop.f32.mrf.mxu0
        %v726 = vadd.f32 %v422, %v725
        %v727 = vpop.f32.mrf.mxu0
        %728 = vdwg.mxu0
        %v729 = vmax.f32 %v603, 0.0
        %v730 = vmax.f32 %v606, 0.0
        %v731 = vmax.f32 %v611, 0.0
        %v732 = vmax.f32 %v614, 0.0
        %v733 = vmax.f32 %v619, 0.0
        %v734 = vmax.f32 %v622, 0.0
        %v735 = vmax.f32 %v627, 0.0
        %v736 = vmax.f32 %v630, 0.0
        %v737 = vmax.f32 %v635, 0.0
        %v738 = vmax.f32 %v638, 0.0
        %v739 = vmax.f32 %v643, 0.0
        %v740 = vmax.f32 %v646, 0.0
        %v741 = vmax.f32 %v651, 0.0
        %v742 = vmax.f32 %v654, 0.0
        %v743 = vmax.f32 %v659, 0.0
        %v744 = vmax.f32 %v662, 0.0
        %v745 = vmax.f32 %v667, 0.0
        %v746 = vmax.f32 %v670, 0.0
        %v747 = vmax.f32 %v675, 0.0
        %v748 = vmax.f32 %v678, 0.0
        %v749 = vmax.f32 %v683, 0.0
        %v750 = vmax.f32 %v686, 0.0
        %v751 = vmax.f32 %v691, 0.0
        %v752 = vmax.f32 %v694, 0.0
        %v753 = vmax.f32 %v699, 0.0
        %v754 = vmax.f32 %v702, 0.0
        %v755 = vmax.f32 %v707, 0.0
        %v756 = vmax.f32 %v710, 0.0
        %v757 = vmax.f32 %v715, 0.0
        %v758 = vmax.f32 %v718, 0.0
        %v759 = vmax.f32 %v723, 0.0
        %v760 = vmax.f32 %v726, 0.0
        %761 = vst [vmem:[#allocation2] sm:$0xff] 0.0
        %762 = vst [vmem:[#allocation2 + $0x8] sm:$0xff] 0.0
        %763 = vst [vmem:[#allocation2 + $0x10] sm:$0x3] 0.0
        %s764 = scalar_lea.vmem [#allocation2], 408
        %765 = vst [vmem:[%s764] sm:$0xff] 0.0
        %766 = vst [vmem:[%s764 + $0x8] sm:$0xff] 0.0
        %767 = vst [vmem:[%s764 + $0x10] sm:$0x3] 0.0
        %768 = vst [vmem:[#allocation2] sm:$0x1] 0.0
        %769 = vst [vmem:[#allocation2 + $0x18] sm:$0x1] 0.0
        %770 = vst [vmem:[#allocation2 + $0x30] sm:$0x1] 0.0
        %771 = vst [vmem:[#allocation2 + $0x48] sm:$0x1] 0.0
        %772 = vst [vmem:[#allocation2 + $0x60] sm:$0x1] 0.0
        %773 = vst [vmem:[#allocation2 + $0x78] sm:$0x1] 0.0
        %774 = vst [vmem:[#allocation2 + $0x90] sm:$0x1] 0.0
        %775 = vst [vmem:[#allocation2 + $0xa8] sm:$0x1] 0.0
        %776 = vst [vmem:[#allocation2 + $0xc0] sm:$0x1] 0.0
        %777 = vst [vmem:[#allocation2 + $0xd8] sm:$0x1] 0.0
        %778 = vst [vmem:[#allocation2 + $0xf0] sm:$0x1] 0.0
        %779 = vst [vmem:[#allocation2 + $0x108] sm:$0x1] 0.0
        %780 = vst [vmem:[#allocation2 + $0x120] sm:$0x1] 0.0
        %781 = vst [vmem:[#allocation2 + $0x138] sm:$0x1] 0.0
        %782 = vst [vmem:[#allocation2 + $0x150] sm:$0x1] 0.0
        %783 = vst [vmem:[#allocation2 + $0x168] sm:$0x1] 0.0
        %784 = vst [vmem:[#allocation2 + $0x180] sm:$0x1] 0.0
        %785 = vst [vmem:[#allocation2 + $0x198] sm:$0x1] 0.0
        %786 = vst [vmem:[#allocation2 + $0x11] sm:$0x1] 0.0
        %787 = vst [vmem:[#allocation2 + $0x29] sm:$0x1] 0.0
        %788 = vst [vmem:[#allocation2 + $0x41] sm:$0x1] 0.0
        %789 = vst [vmem:[#allocation2 + $0x59] sm:$0x1] 0.0
        %790 = vst [vmem:[#allocation2 + $0x71] sm:$0x1] 0.0
        %791 = vst [vmem:[#allocation2 + $0x89] sm:$0x1] 0.0
        %792 = vst [vmem:[#allocation2 + $0xa1] sm:$0x1] 0.0
        %793 = vst [vmem:[#allocation2 + $0xb9] sm:$0x1] 0.0
        %794 = vst [vmem:[#allocation2 + $0xd1] sm:$0x1] 0.0
        %795 = vst [vmem:[#allocation2 + $0xe9] sm:$0x1] 0.0
        %796 = vst [vmem:[#allocation2 + $0x101] sm:$0x1] 0.0
        %797 = vst [vmem:[#allocation2 + $0x119] sm:$0x1] 0.0
        %798 = vst [vmem:[#allocation2 + $0x131] sm:$0x1] 0.0
        %799 = vst [vmem:[#allocation2 + $0x149] sm:$0x1] 0.0
        %800 = vst [vmem:[#allocation2 + $0x161] sm:$0x1] 0.0
        %801 = vst [vmem:[#allocation2 + $0x179] sm:$0x1] 0.0
        %802 = vst [vmem:[#allocation2 + $0x191] sm:$0x1] 0.0
        %803 = vst [vmem:[#allocation2 + $0x1a9] sm:$0x1] 0.0
        %s804 = scalar_lea.vmem [#allocation2], 24
        %805 = vst [vmem:[%s804 + $0x1] sm:$0xff] %v729
        %806 = vst [vmem:[%s804 + $0x9] sm:$0xff] %v730
        %807 = vst [vmem:[%s804 + $0x19] sm:$0xff] %v731
        %808 = vst [vmem:[%s804 + $0x21] sm:$0xff] %v732
        %809 = vst [vmem:[%s804 + $0x31] sm:$0xff] %v733
        %810 = vst [vmem:[%s804 + $0x39] sm:$0xff] %v734
        %811 = vst [vmem:[%s804 + $0x49] sm:$0xff] %v735
        %812 = vst [vmem:[%s804 + $0x51] sm:$0xff] %v736
        %813 = vst [vmem:[%s804 + $0x61] sm:$0xff] %v737
        %814 = vst [vmem:[%s804 + $0x69] sm:$0xff] %v738
        %815 = vst [vmem:[%s804 + $0x79] sm:$0xff] %v739
        %816 = vst [vmem:[%s804 + $0x81] sm:$0xff] %v740
        %817 = vst [vmem:[%s804 + $0x91] sm:$0xff] %v741
        %818 = vst [vmem:[%s804 + $0x99] sm:$0xff] %v742
        %819 = vst [vmem:[%s804 + $0xa9] sm:$0xff] %v743
        %820 = vst [vmem:[%s804 + $0xb1] sm:$0xff] %v744
        %821 = vst [vmem:[%s804 + $0xc1] sm:$0xff] %v745
        %822 = vst [vmem:[%s804 + $0xc9] sm:$0xff] %v746
        %823 = vst [vmem:[%s804 + $0xd9] sm:$0xff] %v747
        %824 = vst [vmem:[%s804 + $0xe1] sm:$0xff] %v748
        %825 = vst [vmem:[%s804 + $0xf1] sm:$0xff] %v749
        %826 = vst [vmem:[%s804 + $0xf9] sm:$0xff] %v750
        %827 = vst [vmem:[%s804 + $0x109] sm:$0xff] %v751
        %828 = vst [vmem:[%s804 + $0x111] sm:$0xff] %v752
        %829 = vst [vmem:[%s804 + $0x121] sm:$0xff] %v753
        %830 = vst [vmem:[%s804 + $0x129] sm:$0xff] %v754
        %831 = vst [vmem:[%s804 + $0x139] sm:$0xff] %v755
        %832 = vst [vmem:[%s804 + $0x141] sm:$0xff] %v756
        %833 = vst [vmem:[%s804 + $0x151] sm:$0xff] %v757
        %834 = vst [vmem:[%s804 + $0x159] sm:$0xff] %v758
        %835 = vst [vmem:[%s804 + $0x169] sm:$0xff] %v759
        %836 = vst [vmem:[%s804 + $0x171] sm:$0xff] %v760
        %v837 = vld [vmem:[#allocation2] sm:$0xff]
        %v838 = vld [vmem:[#allocation2 + $0x8] sm:$0xff]
        %v839 = vld [vmem:[#allocation2 + $0x18] sm:$0xff]
        %v840 = vld [vmem:[#allocation2 + $0x20] sm:$0xff]
        %v841 = vld [vmem:[#allocation2 + $0x30] sm:$0xff]
        %v842 = vld [vmem:[#allocation2 + $0x38] sm:$0xff]
        %v843 = vld [vmem:[#allocation2 + $0x48] sm:$0xff]
        %v844 = vld [vmem:[#allocation2 + $0x50] sm:$0xff]
        %v845 = vld [vmem:[#allocation2 + $0x60] sm:$0xff]
        %v846 = vld [vmem:[#allocation2 + $0x68] sm:$0xff]
        %v847 = vld [vmem:[#allocation2 + $0x78] sm:$0xff]
        %v848 = vld [vmem:[#allocation2 + $0x80] sm:$0xff]
        %v849 = vld [vmem:[#allocation2 + $0x90] sm:$0xff]
        %v850 = vld [vmem:[#allocation2 + $0x98] sm:$0xff]
        %v851 = vld [vmem:[#allocation2 + $0xa8] sm:$0xff]
        %v852 = vld [vmem:[#allocation2 + $0xb0] sm:$0xff]
        %v853 = vld [vmem:[#allocation2 + $0xc0] sm:$0xff]
        %v854 = vld [vmem:[#allocation2 + $0xc8] sm:$0xff]
        %v855 = vld [vmem:[#allocation2 + $0xd8] sm:$0xff]
        %v856 = vld [vmem:[#allocation2 + $0xe0] sm:$0xff]
        %v857 = vld [vmem:[#allocation2 + $0xf0] sm:$0xff]
        %v858 = vld [vmem:[#allocation2 + $0xf8] sm:$0xff]
        %v859 = vld [vmem:[#allocation2 + $0x108] sm:$0xff]
        %v860 = vld [vmem:[#allocation2 + $0x110] sm:$0xff]
        %v861 = vld [vmem:[#allocation2 + $0x120] sm:$0xff]
        %v862 = vld [vmem:[#allocation2 + $0x128] sm:$0xff]
        %v863 = vld [vmem:[#allocation2 + $0x138] sm:$0xff]
        %v864 = vld [vmem:[#allocation2 + $0x140] sm:$0xff]
        %v865 = vld [vmem:[#allocation2 + $0x150] sm:$0xff]
        %v866 = vld [vmem:[#allocation2 + $0x158] sm:$0xff]
        %v867 = vld [vmem:[#allocation2 + $0x168] sm:$0xff]
        %v868 = vld [vmem:[#allocation2 + $0x170] sm:$0xff]
        %v869 = vpack.c.bf16 %v838, %v837
        %v870 = vpack.c.bf16 %v840, %v839
        %v871 = vpack.c.bf16 %v842, %v841
        %v872 = vpack.c.bf16 %v844, %v843
        %v873 = vpack.c.bf16 %v846, %v845
        %v874 = vpack.c.bf16 %v848, %v847
        %v875 = vpack.c.bf16 %v850, %v849
        %v876 = vpack.c.bf16 %v852, %v851
        %v877 = vpack.c.bf16 %v854, %v853
        %v878 = vpack.c.bf16 %v856, %v855
        %v879 = vpack.c.bf16 %v858, %v857
        %v880 = vpack.c.bf16 %v860, %v859
        %v881 = vpack.c.bf16 %v862, %v861
        %v882 = vpack.c.bf16 %v864, %v863
        %v883 = vpack.c.bf16 %v866, %v865
        %v884 = vpack.c.bf16 %v868, %v867
        %v901 = vunpack.c.l.b16 %v869
        %v902 = vunpack.c.h.b16 %v869
        %v903 = vunpack.c.l.b16 %v870
        %v904 = vunpack.c.h.b16 %v870
        %v905 = vunpack.c.l.b16 %v871
        %v906 = vunpack.c.h.b16 %v871
        %v907 = vunpack.c.l.b16 %v872
        %v908 = vunpack.c.h.b16 %v872
        %v909 = vunpack.c.l.b16 %v873
        %v910 = vunpack.c.h.b16 %v873
        %v911 = vunpack.c.l.b16 %v874
        %v912 = vunpack.c.h.b16 %v874
        %v913 = vunpack.c.l.b16 %v875
        %v914 = vunpack.c.h.b16 %v875
        %v915 = vunpack.c.l.b16 %v876
        %v916 = vunpack.c.h.b16 %v876
        %v917 = vunpack.c.l.b16 %v877
        %v918 = vunpack.c.h.b16 %v877
        %v919 = vunpack.c.l.b16 %v878
        %v920 = vunpack.c.h.b16 %v878
        %v921 = vunpack.c.l.b16 %v879
        %v922 = vunpack.c.h.b16 %v879
        %v923 = vunpack.c.l.b16 %v880
        %v924 = vunpack.c.h.b16 %v880
        %v925 = vunpack.c.l.b16 %v881
        %v926 = vunpack.c.h.b16 %v881
        %v927 = vunpack.c.l.b16 %v882
        %v928 = vunpack.c.h.b16 %v882
        %v929 = vunpack.c.l.b16 %v883
        %v930 = vunpack.c.h.b16 %v883
        %v931 = vunpack.c.l.b16 %v884
        %v932 = vunpack.c.h.b16 %v884
        %v933 = vpack.c.b16 %v901, %v901
        %v934 = vpack.c.b16 %v902, %v902
        %v935 = vpack.c.b16 %v903, %v903
        %v936 = vpack.c.b16 %v904, %v904
        %v937 = vpack.c.b16 %v905, %v905
        %v938 = vpack.c.b16 %v906, %v906
        %v939 = vpack.c.b16 %v907, %v907
        %v940 = vpack.c.b16 %v908, %v908
        %v941 = vpack.c.b16 %v909, %v909
        %v942 = vpack.c.b16 %v910, %v910
        %v943 = vpack.c.b16 %v911, %v911
        %v944 = vpack.c.b16 %v912, %v912
        %v945 = vpack.c.b16 %v913, %v913
        %v946 = vpack.c.b16 %v914, %v914
        %v947 = vpack.c.b16 %v915, %v915
        %v948 = vpack.c.b16 %v916, %v916
        %v949 = vpack.c.b16 %v917, %v917
        %v950 = vpack.c.b16 %v918, %v918
        %v951 = vpack.c.b16 %v919, %v919
        %v952 = vpack.c.b16 %v920, %v920
        %v953 = vpack.c.b16 %v921, %v921
        %v954 = vpack.c.b16 %v922, %v922
        %v955 = vpack.c.b16 %v923, %v923
        %v956 = vpack.c.b16 %v924, %v924
        %v957 = vpack.c.b16 %v925, %v925
        %v958 = vpack.c.b16 %v926, %v926
        %v959 = vpack.c.b16 %v927, %v927
        %v960 = vpack.c.b16 %v928, %v928
        %v961 = vpack.c.b16 %v929, %v929
        %v962 = vpack.c.b16 %v930, %v930
        %v963 = vpack.c.b16 %v931, %v931
        %v964 = vpack.c.b16 %v932, %v932
        %997 = vst [vmem:[#allocation3] sm:$0xf] %v933
        %998 = vst [vmem:[#allocation3 + $0x24] sm:$0xf] %v934
        %999 = vst [vmem:[#allocation3 + $0x48] sm:$0xf] %v935
        %1000 = vst [vmem:[#allocation3 + $0x6c] sm:$0xf] %v936
        %1001 = vst [vmem:[#allocation3 + $0x90] sm:$0xf] %v937
        %1002 = vst [vmem:[#allocation3 + $0xb4] sm:$0xf] %v938
        %1003 = vst [vmem:[#allocation3 + $0xd8] sm:$0xf] %v939
        %1004 = vst [vmem:[#allocation3 + $0xfc] sm:$0xf] %v940
        %1005 = vst [vmem:[#allocation3 + $0x120] sm:$0xf] %v941
        %1006 = vst [vmem:[#allocation3 + $0x144] sm:$0xf] %v942
        %1007 = vst [vmem:[#allocation3 + $0x168] sm:$0xf] %v943
        %1008 = vst [vmem:[#allocation3 + $0x18c] sm:$0xf] %v944
        %1009 = vst [vmem:[#allocation3 + $0x1b0] sm:$0xf] %v945
        %1010 = vst [vmem:[#allocation3 + $0x1d4] sm:$0xf] %v946
        %1011 = vst [vmem:[#allocation3 + $0x1f8] sm:$0xf] %v947
        %1012 = vst [vmem:[#allocation3 + $0x21c] sm:$0xf] %v948
        %1013 = vst [vmem:[#allocation3 + $0x240] sm:$0xf] %v949
        %1014 = vst [vmem:[#allocation3 + $0x264] sm:$0xf] %v950
        %1015 = vst [vmem:[#allocation3 + $0x288] sm:$0xf] %v951
        %1016 = vst [vmem:[#allocation3 + $0x2ac] sm:$0xf] %v952
        %1017 = vst [vmem:[#allocation3 + $0x2d0] sm:$0xf] %v953
        %1018 = vst [vmem:[#allocation3 + $0x2f4] sm:$0xf] %v954
        %1019 = vst [vmem:[#allocation3 + $0x318] sm:$0xf] %v955
        %1020 = vst [vmem:[#allocation3 + $0x33c] sm:$0xf] %v956
        %1021 = vst [vmem:[#allocation3 + $0x360] sm:$0xf] %v957
        %1022 = vst [vmem:[#allocation3 + $0x384] sm:$0xf] %v958
        %1023 = vst [vmem:[#allocation3 + $0x3a8] sm:$0xf] %v959
        %1024 = vst [vmem:[#allocation3 + $0x3cc] sm:$0xf] %v960
        %1025 = vst [vmem:[#allocation3 + $0x3f0] sm:$0xf] %v961
        %1026 = vst [vmem:[#allocation3 + $0x414] sm:$0xf] %v962
        %1027 = vst [vmem:[#allocation3 + $0x438] sm:$0xf] %v963
        %1028 = vst [vmem:[#allocation3 + $0x45c] sm:$0xf] %v964
        %v1029 = vld [vmem:[#allocation2 + $0x1] sm:$0xff]
        %v1030 = vld [vmem:[#allocation2 + $0x9] sm:$0xff]
        %v1031 = vld [vmem:[#allocation2 + $0x19] sm:$0xff]
        %v1032 = vld [vmem:[#allocation2 + $0x21] sm:$0xff]
        %v1033 = vld [vmem:[#allocation2 + $0x31] sm:$0xff]
        %v1034 = vld [vmem:[#allocation2 + $0x39] sm:$0xff]
        %v1035 = vld [vmem:[#allocation2 + $0x49] sm:$0xff]
        %v1036 = vld [vmem:[#allocation2 + $0x51] sm:$0xff]
        %v1037 = vld [vmem:[#allocation2 + $0x61] sm:$0xff]
        %v1038 = vld [vmem:[#allocation2 + $0x69] sm:$0xff]
        %v1039 = vld [vmem:[#allocation2 + $0x79] sm:$0xff]
        %v1040 = vld [vmem:[#allocation2 + $0x81] sm:$0xff]
        %v1041 = vld [vmem:[#allocation2 + $0x91] sm:$0xff]
        %v1042 = vld [vmem:[#allocation2 + $0x99] sm:$0xff]
        %v1043 = vld [vmem:[#allocation2 + $0xa9] sm:$0xff]
        %v1044 = vld [vmem:[#allocation2 + $0xb1] sm:$0xff]
        %v1045 = vld [vmem:[#allocation2 + $0xc1] sm:$0xff]
        %v1046 = vld [vmem:[#allocation2 + $0xc9] sm:$0xff]
        %v1047 = vld [vmem:[#allocation2 + $0xd9] sm:$0xff]
        %v1048 = vld [vmem:[#allocation2 + $0xe1] sm:$0xff]
        %v1049 = vld [vmem:[#allocation2 + $0xf1] sm:$0xff]
        %v1050 = vld [vmem:[#allocation2 + $0xf9] sm:$0xff]
        %v1051 = vld [vmem:[#allocation2 + $0x109] sm:$0xff]
        %v1052 = vld [vmem:[#allocation2 + $0x111] sm:$0xff]
        %v1053 = vld [vmem:[#allocation2 + $0x121] sm:$0xff]
        %v1054 = vld [vmem:[#allocation2 + $0x129] sm:$0xff]
        %v1055 = vld [vmem:[#allocation2 + $0x139] sm:$0xff]
        %v1056 = vld [vmem:[#allocation2 + $0x141] sm:$0xff]
        %v1057 = vld [vmem:[#allocation2 + $0x151] sm:$0xff]
        %v1058 = vld [vmem:[#allocation2 + $0x159] sm:$0xff]
        %v1059 = vld [vmem:[#allocation2 + $0x169] sm:$0xff]
        %v1060 = vld [vmem:[#allocation2 + $0x171] sm:$0xff]
        %v1061 = vpack.c.bf16 %v1030, %v1029
        %v1062 = vpack.c.bf16 %v1032, %v1031
        %v1063 = vpack.c.bf16 %v1034, %v1033
        %v1064 = vpack.c.bf16 %v1036, %v1035
        %v1065 = vpack.c.bf16 %v1038, %v1037
        %v1066 = vpack.c.bf16 %v1040, %v1039
        %v1067 = vpack.c.bf16 %v1042, %v1041
        %v1068 = vpack.c.bf16 %v1044, %v1043
        %v1069 = vpack.c.bf16 %v1046, %v1045
        %v1070 = vpack.c.bf16 %v1048, %v1047
        %v1071 = vpack.c.bf16 %v1050, %v1049
        %v1072 = vpack.c.bf16 %v1052, %v1051
        %v1073 = vpack.c.bf16 %v1054, %v1053
        %v1074 = vpack.c.bf16 %v1056, %v1055
        %v1075 = vpack.c.bf16 %v1058, %v1057
        %v1076 = vpack.c.bf16 %v1060, %v1059
        %v1093 = vunpack.c.l.b16 %v1061
        %v1094 = vunpack.c.h.b16 %v1061
        %v1095 = vunpack.c.l.b16 %v1062
        %v1096 = vunpack.c.h.b16 %v1062
        %v1097 = vunpack.c.l.b16 %v1063
        %v1098 = vunpack.c.h.b16 %v1063
        %v1099 = vunpack.c.l.b16 %v1064
        %v1100 = vunpack.c.h.b16 %v1064
        %v1101 = vunpack.c.l.b16 %v1065
        %v1102 = vunpack.c.h.b16 %v1065
        %v1103 = vunpack.c.l.b16 %v1066
        %v1104 = vunpack.c.h.b16 %v1066
        %v1105 = vunpack.c.l.b16 %v1067
        %v1106 = vunpack.c.h.b16 %v1067
        %v1107 = vunpack.c.l.b16 %v1068
        %v1108 = vunpack.c.h.b16 %v1068
        %v1109 = vunpack.c.l.b16 %v1069
        %v1110 = vunpack.c.h.b16 %v1069
        %v1111 = vunpack.c.l.b16 %v1070
        %v1112 = vunpack.c.h.b16 %v1070
        %v1113 = vunpack.c.l.b16 %v1071
        %v1114 = vunpack.c.h.b16 %v1071
        %v1115 = vunpack.c.l.b16 %v1072
        %v1116 = vunpack.c.h.b16 %v1072
        %v1117 = vunpack.c.l.b16 %v1073
        %v1118 = vunpack.c.h.b16 %v1073
        %v1119 = vunpack.c.l.b16 %v1074
        %v1120 = vunpack.c.h.b16 %v1074
        %v1121 = vunpack.c.l.b16 %v1075
        %v1122 = vunpack.c.h.b16 %v1075
        %v1123 = vunpack.c.l.b16 %v1076
        %v1124 = vunpack.c.h.b16 %v1076
        %v1125 = vpack.c.b16 %v1093, %v1093
        %v1126 = vpack.c.b16 %v1094, %v1094
        %v1127 = vpack.c.b16 %v1095, %v1095
        %v1128 = vpack.c.b16 %v1096, %v1096
        %v1129 = vpack.c.b16 %v1097, %v1097
        %v1130 = vpack.c.b16 %v1098, %v1098
        %v1131 = vpack.c.b16 %v1099, %v1099
        %v1132 = vpack.c.b16 %v1100, %v1100
        %v1133 = vpack.c.b16 %v1101, %v1101
        %v1134 = vpack.c.b16 %v1102, %v1102
        %v1135 = vpack.c.b16 %v1103, %v1103
        %v1136 = vpack.c.b16 %v1104, %v1104
        %v1137 = vpack.c.b16 %v1105, %v1105
        %v1138 = vpack.c.b16 %v1106, %v1106
        %v1139 = vpack.c.b16 %v1107, %v1107
        %v1140 = vpack.c.b16 %v1108, %v1108
        %v1141 = vpack.c.b16 %v1109, %v1109
        %v1142 = vpack.c.b16 %v1110, %v1110
        %v1143 = vpack.c.b16 %v1111, %v1111
        %v1144 = vpack.c.b16 %v1112, %v1112
        %v1145 = vpack.c.b16 %v1113, %v1113
        %v1146 = vpack.c.b16 %v1114, %v1114
        %v1147 = vpack.c.b16 %v1115, %v1115
        %v1148 = vpack.c.b16 %v1116, %v1116
        %v1149 = vpack.c.b16 %v1117, %v1117
        %v1150 = vpack.c.b16 %v1118, %v1118
        %v1151 = vpack.c.b16 %v1119, %v1119
        %v1152 = vpack.c.b16 %v1120, %v1120
        %v1153 = vpack.c.b16 %v1121, %v1121
        %v1154 = vpack.c.b16 %v1122, %v1122
        %v1155 = vpack.c.b16 %v1123, %v1123
        %v1156 = vpack.c.b16 %v1124, %v1124
        %1189 = vst [vmem:[#allocation3 + $0x4] sm:$0xf] %v1125
        %1190 = vst [vmem:[#allocation3 + $0x28] sm:$0xf] %v1126
        %1191 = vst [vmem:[#allocation3 + $0x4c] sm:$0xf] %v1127
        %1192 = vst [vmem:[#allocation3 + $0x70] sm:$0xf] %v1128
        %1193 = vst [vmem:[#allocation3 + $0x94] sm:$0xf] %v1129
        %1194 = vst [vmem:[#allocation3 + $0xb8] sm:$0xf] %v1130
        %1195 = vst [vmem:[#allocation3 + $0xdc] sm:$0xf] %v1131
        %1196 = vst [vmem:[#allocation3 + $0x100] sm:$0xf] %v1132
        %1197 = vst [vmem:[#allocation3 + $0x124] sm:$0xf] %v1133
        %1198 = vst [vmem:[#allocation3 + $0x148] sm:$0xf] %v1134
        %1199 = vst [vmem:[#allocation3 + $0x16c] sm:$0xf] %v1135
        %1200 = vst [vmem:[#allocation3 + $0x190] sm:$0xf] %v1136
        %1201 = vst [vmem:[#allocation3 + $0x1b4] sm:$0xf] %v1137
        %1202 = vst [vmem:[#allocation3 + $0x1d8] sm:$0xf] %v1138
        %1203 = vst [vmem:[#allocation3 + $0x1fc] sm:$0xf] %v1139
        %1204 = vst [vmem:[#allocation3 + $0x220] sm:$0xf] %v1140
        %1205 = vst [vmem:[#allocation3 + $0x244] sm:$0xf] %v1141
        %1206 = vst [vmem:[#allocation3 + $0x268] sm:$0xf] %v1142
        %1207 = vst [vmem:[#allocation3 + $0x28c] sm:$0xf] %v1143
        %1208 = vst [vmem:[#allocation3 + $0x2b0] sm:$0xf] %v1144
        %1209 = vst [vmem:[#allocation3 + $0x2d4] sm:$0xf] %v1145
        %1210 = vst [vmem:[#allocation3 + $0x2f8] sm:$0xf] %v1146
        %1211 = vst [vmem:[#allocation3 + $0x31c] sm:$0xf] %v1147
        %1212 = vst [vmem:[#allocation3 + $0x340] sm:$0xf] %v1148
        %1213 = vst [vmem:[#allocation3 + $0x364] sm:$0xf] %v1149
        %1214 = vst [vmem:[#allocation3 + $0x388] sm:$0xf] %v1150
        %1215 = vst [vmem:[#allocation3 + $0x3ac] sm:$0xf] %v1151
        %1216 = vst [vmem:[#allocation3 + $0x3d0] sm:$0xf] %v1152
        %1217 = vst [vmem:[#allocation3 + $0x3f4] sm:$0xf] %v1153
        %1218 = vst [vmem:[#allocation3 + $0x418] sm:$0xf] %v1154
        %1219 = vst [vmem:[#allocation3 + $0x43c] sm:$0xf] %v1155
        %1220 = vst [vmem:[#allocation3 + $0x460] sm:$0xf] %v1156
        %v1221 = vld [vmem:[#allocation2 + $0x2] sm:$0xff]
        %v1222 = vld [vmem:[#allocation2 + $0xa] sm:$0xff]
        %v1223 = vld [vmem:[#allocation2 + $0x1a] sm:$0xff]
        %v1224 = vld [vmem:[#allocation2 + $0x22] sm:$0xff]
        %v1225 = vld [vmem:[#allocation2 + $0x32] sm:$0xff]
        %v1226 = vld [vmem:[#allocation2 + $0x3a] sm:$0xff]
        %v1227 = vld [vmem:[#allocation2 + $0x4a] sm:$0xff]
        %v1228 = vld [vmem:[#allocation2 + $0x52] sm:$0xff]
        %v1229 = vld [vmem:[#allocation2 + $0x62] sm:$0xff]
        %v1230 = vld [vmem:[#allocation2 + $0x6a] sm:$0xff]
        %v1231 = vld [vmem:[#allocation2 + $0x7a] sm:$0xff]
        %v1232 = vld [vmem:[#allocation2 + $0x82] sm:$0xff]
        %v1233 = vld [vmem:[#allocation2 + $0x92] sm:$0xff]
        %v1234 = vld [vmem:[#allocation2 + $0x9a] sm:$0xff]
        %v1235 = vld [vmem:[#allocation2 + $0xaa] sm:$0xff]
        %v1236 = vld [vmem:[#allocation2 + $0xb2] sm:$0xff]
        %v1237 = vld [vmem:[#allocation2 + $0xc2] sm:$0xff]
        %v1238 = vld [vmem:[#allocation2 + $0xca] sm:$0xff]
        %v1239 = vld [vmem:[#allocation2 + $0xda] sm:$0xff]
        %v1240 = vld [vmem:[#allocation2 + $0xe2] sm:$0xff]
        %v1241 = vld [vmem:[#allocation2 + $0xf2] sm:$0xff]
        %v1242 = vld [vmem:[#allocation2 + $0xfa] sm:$0xff]
        %v1243 = vld [vmem:[#allocation2 + $0x10a] sm:$0xff]
        %v1244 = vld [vmem:[#allocation2 + $0x112] sm:$0xff]
        %v1245 = vld [vmem:[#allocation2 + $0x122] sm:$0xff]
        %v1246 = vld [vmem:[#allocation2 + $0x12a] sm:$0xff]
        %v1247 = vld [vmem:[#allocation2 + $0x13a] sm:$0xff]
        %v1248 = vld [vmem:[#allocation2 + $0x142] sm:$0xff]
        %v1249 = vld [vmem:[#allocation2 + $0x152] sm:$0xff]
        %v1250 = vld [vmem:[#allocation2 + $0x15a] sm:$0xff]
        %v1251 = vld [vmem:[#allocation2 + $0x16a] sm:$0xff]
        %v1252 = vld [vmem:[#allocation2 + $0x172] sm:$0xff]
        %v1253 = vpack.c.bf16 %v1222, %v1221
        %v1254 = vpack.c.bf16 %v1224, %v1223
        %v1255 = vpack.c.bf16 %v1226, %v1225
        %v1256 = vpack.c.bf16 %v1228, %v1227
        %v1257 = vpack.c.bf16 %v1230, %v1229
        %v1258 = vpack.c.bf16 %v1232, %v1231
        %v1259 = vpack.c.bf16 %v1234, %v1233
        %v1260 = vpack.c.bf16 %v1236, %v1235
        %v1261 = vpack.c.bf16 %v1238, %v1237
        %v1262 = vpack.c.bf16 %v1240, %v1239
        %v1263 = vpack.c.bf16 %v1242, %v1241
        %v1264 = vpack.c.bf16 %v1244, %v1243
        %v1265 = vpack.c.bf16 %v1246, %v1245
        %v1266 = vpack.c.bf16 %v1248, %v1247
        %v1267 = vpack.c.bf16 %v1250, %v1249
        %v1268 = vpack.c.bf16 %v1252, %v1251
        %v1285 = vunpack.c.l.b16 %v1253
        %v1286 = vunpack.c.h.b16 %v1253
        %v1287 = vunpack.c.l.b16 %v1254
        %v1288 = vunpack.c.h.b16 %v1254
        %v1289 = vunpack.c.l.b16 %v1255
        %v1290 = vunpack.c.h.b16 %v1255
        %v1291 = vunpack.c.l.b16 %v1256
        %v1292 = vunpack.c.h.b16 %v1256
        %v1293 = vunpack.c.l.b16 %v1257
        %v1294 = vunpack.c.h.b16 %v1257
        %v1295 = vunpack.c.l.b16 %v1258
        %v1296 = vunpack.c.h.b16 %v1258
        %v1297 = vunpack.c.l.b16 %v1259
        %v1298 = vunpack.c.h.b16 %v1259
        %v1299 = vunpack.c.l.b16 %v1260
        %v1300 = vunpack.c.h.b16 %v1260
        %v1301 = vunpack.c.l.b16 %v1261
        %v1302 = vunpack.c.h.b16 %v1261
        %v1303 = vunpack.c.l.b16 %v1262
        %v1304 = vunpack.c.h.b16 %v1262
        %v1305 = vunpack.c.l.b16 %v1263
        %v1306 = vunpack.c.h.b16 %v1263
        %v1307 = vunpack.c.l.b16 %v1264
        %v1308 = vunpack.c.h.b16 %v1264
        %v1309 = vunpack.c.l.b16 %v1265
        %v1310 = vunpack.c.h.b16 %v1265
        %v1311 = vunpack.c.l.b16 %v1266
        %v1312 = vunpack.c.h.b16 %v1266
        %v1313 = vunpack.c.l.b16 %v1267
        %v1314 = vunpack.c.h.b16 %v1267
        %v1315 = vunpack.c.l.b16 %v1268
        %v1316 = vunpack.c.h.b16 %v1268
        %v1317 = vpack.c.b16 %v1285, %v1285
        %v1318 = vpack.c.b16 %v1286, %v1286
        %v1319 = vpack.c.b16 %v1287, %v1287
        %v1320 = vpack.c.b16 %v1288, %v1288
        %v1321 = vpack.c.b16 %v1289, %v1289
        %v1322 = vpack.c.b16 %v1290, %v1290
        %v1323 = vpack.c.b16 %v1291, %v1291
        %v1324 = vpack.c.b16 %v1292, %v1292
        %v1325 = vpack.c.b16 %v1293, %v1293
        %v1326 = vpack.c.b16 %v1294, %v1294
        %v1327 = vpack.c.b16 %v1295, %v1295
        %v1328 = vpack.c.b16 %v1296, %v1296
        %v1329 = vpack.c.b16 %v1297, %v1297
        %v1330 = vpack.c.b16 %v1298, %v1298
        %v1331 = vpack.c.b16 %v1299, %v1299
        %v1332 = vpack.c.b16 %v1300, %v1300
        %v1333 = vpack.c.b16 %v1301, %v1301
        %v1334 = vpack.c.b16 %v1302, %v1302
        %v1335 = vpack.c.b16 %v1303, %v1303
        %v1336 = vpack.c.b16 %v1304, %v1304
        %v1337 = vpack.c.b16 %v1305, %v1305
        %v1338 = vpack.c.b16 %v1306, %v1306
        %v1339 = vpack.c.b16 %v1307, %v1307
        %v1340 = vpack.c.b16 %v1308, %v1308
        %v1341 = vpack.c.b16 %v1309, %v1309
        %v1342 = vpack.c.b16 %v1310, %v1310
        %v1343 = vpack.c.b16 %v1311, %v1311
        %v1344 = vpack.c.b16 %v1312, %v1312
        %v1345 = vpack.c.b16 %v1313, %v1313
        %v1346 = vpack.c.b16 %v1314, %v1314
        %v1347 = vpack.c.b16 %v1315, %v1315
        %v1348 = vpack.c.b16 %v1316, %v1316
        %1381 = vst [vmem:[#allocation3 + $0x8] sm:$0xf] %v1317
        %1382 = vst [vmem:[#allocation3 + $0x2c] sm:$0xf] %v1318
        %1383 = vst [vmem:[#allocation3 + $0x50] sm:$0xf] %v1319
        %1384 = vst [vmem:[#allocation3 + $0x74] sm:$0xf] %v1320
        %1385 = vst [vmem:[#allocation3 + $0x98] sm:$0xf] %v1321
        %1386 = vst [vmem:[#allocation3 + $0xbc] sm:$0xf] %v1322
        %1387 = vst [vmem:[#allocation3 + $0xe0] sm:$0xf] %v1323
        %1388 = vst [vmem:[#allocation3 + $0x104] sm:$0xf] %v1324
        %1389 = vst [vmem:[#allocation3 + $0x128] sm:$0xf] %v1325
        %1390 = vst [vmem:[#allocation3 + $0x14c] sm:$0xf] %v1326
        %1391 = vst [vmem:[#allocation3 + $0x170] sm:$0xf] %v1327
        %1392 = vst [vmem:[#allocation3 + $0x194] sm:$0xf] %v1328
        %1393 = vst [vmem:[#allocation3 + $0x1b8] sm:$0xf] %v1329
        %1394 = vst [vmem:[#allocation3 + $0x1dc] sm:$0xf] %v1330
        %1395 = vst [vmem:[#allocation3 + $0x200] sm:$0xf] %v1331
        %1396 = vst [vmem:[#allocation3 + $0x224] sm:$0xf] %v1332
        %1397 = vst [vmem:[#allocation3 + $0x248] sm:$0xf] %v1333
        %1398 = vst [vmem:[#allocation3 + $0x26c] sm:$0xf] %v1334
        %1399 = vst [vmem:[#allocation3 + $0x290] sm:$0xf] %v1335
        %1400 = vst [vmem:[#allocation3 + $0x2b4] sm:$0xf] %v1336
        %1401 = vst [vmem:[#allocation3 + $0x2d8] sm:$0xf] %v1337
        %1402 = vst [vmem:[#allocation3 + $0x2fc] sm:$0xf] %v1338
        %1403 = vst [vmem:[#allocation3 + $0x320] sm:$0xf] %v1339
        %1404 = vst [vmem:[#allocation3 + $0x344] sm:$0xf] %v1340
        %1405 = vst [vmem:[#allocation3 + $0x368] sm:$0xf] %v1341
        %1406 = vst [vmem:[#allocation3 + $0x38c] sm:$0xf] %v1342
        %1407 = vst [vmem:[#allocation3 + $0x3b0] sm:$0xf] %v1343
        %1408 = vst [vmem:[#allocation3 + $0x3d4] sm:$0xf] %v1344
        %1409 = vst [vmem:[#allocation3 + $0x3f8] sm:$0xf] %v1345
        %1410 = vst [vmem:[#allocation3 + $0x41c] sm:$0xf] %v1346
        %1411 = vst [vmem:[#allocation3 + $0x440] sm:$0xf] %v1347
        %1412 = vst [vmem:[#allocation3 + $0x464] sm:$0xf] %v1348
        %v1413 = vld [vmem:[%s804] sm:$0xff]
        %v1414 = vld [vmem:[%s804 + $0x8] sm:$0xff]
        %v1415 = vld [vmem:[%s804 + $0x18] sm:$0xff]
        %v1416 = vld [vmem:[%s804 + $0x20] sm:$0xff]
        %v1417 = vld [vmem:[%s804 + $0x30] sm:$0xff]
        %v1418 = vld [vmem:[%s804 + $0x38] sm:$0xff]
        %v1419 = vld [vmem:[%s804 + $0x48] sm:$0xff]
        %v1420 = vld [vmem:[%s804 + $0x50] sm:$0xff]
        %v1421 = vld [vmem:[%s804 + $0x60] sm:$0xff]
        %v1422 = vld [vmem:[%s804 + $0x68] sm:$0xff]
        %v1423 = vld [vmem:[%s804 + $0x78] sm:$0xff]
        %v1424 = vld [vmem:[%s804 + $0x80] sm:$0xff]
        %v1425 = vld [vmem:[%s804 + $0x90] sm:$0xff]
        %v1426 = vld [vmem:[%s804 + $0x98] sm:$0xff]
        %v1427 = vld [vmem:[%s804 + $0xa8] sm:$0xff]
        %v1428 = vld [vmem:[%s804 + $0xb0] sm:$0xff]
        %v1429 = vld [vmem:[%s804 + $0xc0] sm:$0xff]
        %v1430 = vld [vmem:[%s804 + $0xc8] sm:$0xff]
        %v1431 = vld [vmem:[%s804 + $0xd8] sm:$0xff]
        %v1432 = vld [vmem:[%s804 + $0xe0] sm:$0xff]
        %v1433 = vld [vmem:[%s804 + $0xf0] sm:$0xff]
        %v1434 = vld [vmem:[%s804 + $0xf8] sm:$0xff]
        %v1435 = vld [vmem:[%s804 + $0x108] sm:$0xff]
        %v1436 = vld [vmem:[%s804 + $0x110] sm:$0xff]
        %v1437 = vld [vmem:[%s804 + $0x120] sm:$0xff]
        %v1438 = vld [vmem:[%s804 + $0x128] sm:$0xff]
        %v1439 = vld [vmem:[%s804 + $0x138] sm:$0xff]
        %v1440 = vld [vmem:[%s804 + $0x140] sm:$0xff]
        %v1441 = vld [vmem:[%s804 + $0x150] sm:$0xff]
        %v1442 = vld [vmem:[%s804 + $0x158] sm:$0xff]
        %v1443 = vld [vmem:[%s804 + $0x168] sm:$0xff]
        %v1444 = vld [vmem:[%s804 + $0x170] sm:$0xff]
        %v1445 = vpack.c.bf16 %v1414, %v1413
        %v1446 = vpack.c.bf16 %v1416, %v1415
        %v1447 = vpack.c.bf16 %v1418, %v1417
        %v1448 = vpack.c.bf16 %v1420, %v1419
        %v1449 = vpack.c.bf16 %v1422, %v1421
        %v1450 = vpack.c.bf16 %v1424, %v1423
        %v1451 = vpack.c.bf16 %v1426, %v1425
        %v1452 = vpack.c.bf16 %v1428, %v1427
        %v1453 = vpack.c.bf16 %v1430, %v1429
        %v1454 = vpack.c.bf16 %v1432, %v1431
        %v1455 = vpack.c.bf16 %v1434, %v1433
        %v1456 = vpack.c.bf16 %v1436, %v1435
        %v1457 = vpack.c.bf16 %v1438, %v1437
        %v1458 = vpack.c.bf16 %v1440, %v1439
        %v1459 = vpack.c.bf16 %v1442, %v1441
        %v1460 = vpack.c.bf16 %v1444, %v1443
        %v1477 = vunpack.c.l.b16 %v1445
        %v1478 = vunpack.c.h.b16 %v1445
        %v1479 = vunpack.c.l.b16 %v1446
        %v1480 = vunpack.c.h.b16 %v1446
        %v1481 = vunpack.c.l.b16 %v1447
        %v1482 = vunpack.c.h.b16 %v1447
        %v1483 = vunpack.c.l.b16 %v1448
        %v1484 = vunpack.c.h.b16 %v1448
        %v1485 = vunpack.c.l.b16 %v1449
        %v1486 = vunpack.c.h.b16 %v1449
        %v1487 = vunpack.c.l.b16 %v1450
        %v1488 = vunpack.c.h.b16 %v1450
        %v1489 = vunpack.c.l.b16 %v1451
        %v1490 = vunpack.c.h.b16 %v1451
        %v1491 = vunpack.c.l.b16 %v1452
        %v1492 = vunpack.c.h.b16 %v1452
        %v1493 = vunpack.c.l.b16 %v1453
        %v1494 = vunpack.c.h.b16 %v1453
        %v1495 = vunpack.c.l.b16 %v1454
        %v1496 = vunpack.c.h.b16 %v1454
        %v1497 = vunpack.c.l.b16 %v1455
        %v1498 = vunpack.c.h.b16 %v1455
        %v1499 = vunpack.c.l.b16 %v1456
        %v1500 = vunpack.c.h.b16 %v1456
        %v1501 = vunpack.c.l.b16 %v1457
        %v1502 = vunpack.c.h.b16 %v1457
        %v1503 = vunpack.c.l.b16 %v1458
        %v1504 = vunpack.c.h.b16 %v1458
        %v1505 = vunpack.c.l.b16 %v1459
        %v1506 = vunpack.c.h.b16 %v1459
        %v1507 = vunpack.c.l.b16 %v1460
        %v1508 = vunpack.c.h.b16 %v1460
        %v1509 = vpack.c.b16 %v1477, %v1477
        %v1510 = vpack.c.b16 %v1478, %v1478
        %v1511 = vpack.c.b16 %v1479, %v1479
        %v1512 = vpack.c.b16 %v1480, %v1480
        %v1513 = vpack.c.b16 %v1481, %v1481
        %v1514 = vpack.c.b16 %v1482, %v1482
        %v1515 = vpack.c.b16 %v1483, %v1483
        %v1516 = vpack.c.b16 %v1484, %v1484
        %v1517 = vpack.c.b16 %v1485, %v1485
        %v1518 = vpack.c.b16 %v1486, %v1486
        %v1519 = vpack.c.b16 %v1487, %v1487
        %v1520 = vpack.c.b16 %v1488, %v1488
        %v1521 = vpack.c.b16 %v1489, %v1489
        %v1522 = vpack.c.b16 %v1490, %v1490
        %v1523 = vpack.c.b16 %v1491, %v1491
        %v1524 = vpack.c.b16 %v1492, %v1492
        %v1525 = vpack.c.b16 %v1493, %v1493
        %v1526 = vpack.c.b16 %v1494, %v1494
        %v1527 = vpack.c.b16 %v1495, %v1495
        %v1528 = vpack.c.b16 %v1496, %v1496
        %v1529 = vpack.c.b16 %v1497, %v1497
        %v1530 = vpack.c.b16 %v1498, %v1498
        %v1531 = vpack.c.b16 %v1499, %v1499
        %v1532 = vpack.c.b16 %v1500, %v1500
        %v1533 = vpack.c.b16 %v1501, %v1501
        %v1534 = vpack.c.b16 %v1502, %v1502
        %v1535 = vpack.c.b16 %v1503, %v1503
        %v1536 = vpack.c.b16 %v1504, %v1504
        %v1537 = vpack.c.b16 %v1505, %v1505
        %v1538 = vpack.c.b16 %v1506, %v1506
        %v1539 = vpack.c.b16 %v1507, %v1507
        %v1540 = vpack.c.b16 %v1508, %v1508
        %1573 = vst [vmem:[#allocation3 + $0xc] sm:$0xf] %v1509
        %1574 = vst [vmem:[#allocation3 + $0x30] sm:$0xf] %v1510
        %1575 = vst [vmem:[#allocation3 + $0x54] sm:$0xf] %v1511
        %1576 = vst [vmem:[#allocation3 + $0x78] sm:$0xf] %v1512
        %1577 = vst [vmem:[#allocation3 + $0x9c] sm:$0xf] %v1513
        %1578 = vst [vmem:[#allocation3 + $0xc0] sm:$0xf] %v1514
        %1579 = vst [vmem:[#allocation3 + $0xe4] sm:$0xf] %v1515
        %1580 = vst [vmem:[#allocation3 + $0x108] sm:$0xf] %v1516
        %1581 = vst [vmem:[#allocation3 + $0x12c] sm:$0xf] %v1517
        %1582 = vst [vmem:[#allocation3 + $0x150] sm:$0xf] %v1518
        %1583 = vst [vmem:[#allocation3 + $0x174] sm:$0xf] %v1519
        %1584 = vst [vmem:[#allocation3 + $0x198] sm:$0xf] %v1520
        %1585 = vst [vmem:[#allocation3 + $0x1bc] sm:$0xf] %v1521
        %1586 = vst [vmem:[#allocation3 + $0x1e0] sm:$0xf] %v1522
        %1587 = vst [vmem:[#allocation3 + $0x204] sm:$0xf] %v1523
        %1588 = vst [vmem:[#allocation3 + $0x228] sm:$0xf] %v1524
        %1589 = vst [vmem:[#allocation3 + $0x24c] sm:$0xf] %v1525
        %1590 = vst [vmem:[#allocation3 + $0x270] sm:$0xf] %v1526
        %1591 = vst [vmem:[#allocation3 + $0x294] sm:$0xf] %v1527
        %1592 = vst [vmem:[#allocation3 + $0x2b8] sm:$0xf] %v1528
        %1593 = vst [vmem:[#allocation3 + $0x2dc] sm:$0xf] %v1529
        %1594 = vst [vmem:[#allocation3 + $0x300] sm:$0xf] %v1530
        %1595 = vst [vmem:[#allocation3 + $0x324] sm:$0xf] %v1531
        %1596 = vst [vmem:[#allocation3 + $0x348] sm:$0xf] %v1532
        %1597 = vst [vmem:[#allocation3 + $0x36c] sm:$0xf] %v1533
        %1598 = vst [vmem:[#allocation3 + $0x390] sm:$0xf] %v1534
        %1599 = vst [vmem:[#allocation3 + $0x3b4] sm:$0xf] %v1535
        %1600 = vst [vmem:[#allocation3 + $0x3d8] sm:$0xf] %v1536
        %1601 = vst [vmem:[#allocation3 + $0x3fc] sm:$0xf] %v1537
        %1602 = vst [vmem:[#allocation3 + $0x420] sm:$0xf] %v1538
        %1603 = vst [vmem:[#allocation3 + $0x444] sm:$0xf] %v1539
        %1604 = vst [vmem:[#allocation3 + $0x468] sm:$0xf] %v1540
        %v1605 = vld [vmem:[%s804 + $0x1] sm:$0xff]
        %v1606 = vld [vmem:[%s804 + $0x9] sm:$0xff]
        %v1607 = vld [vmem:[%s804 + $0x19] sm:$0xff]
        %v1608 = vld [vmem:[%s804 + $0x21] sm:$0xff]
        %v1609 = vld [vmem:[%s804 + $0x31] sm:$0xff]
        %v1610 = vld [vmem:[%s804 + $0x39] sm:$0xff]
        %v1611 = vld [vmem:[%s804 + $0x49] sm:$0xff]
        %v1612 = vld [vmem:[%s804 + $0x51] sm:$0xff]
        %v1613 = vld [vmem:[%s804 + $0x61] sm:$0xff]
        %v1614 = vld [vmem:[%s804 + $0x69] sm:$0xff]
        %v1615 = vld [vmem:[%s804 + $0x79] sm:$0xff]
        %v1616 = vld [vmem:[%s804 + $0x81] sm:$0xff]
        %v1617 = vld [vmem:[%s804 + $0x91] sm:$0xff]
        %v1618 = vld [vmem:[%s804 + $0x99] sm:$0xff]
        %v1619 = vld [vmem:[%s804 + $0xa9] sm:$0xff]
        %v1620 = vld [vmem:[%s804 + $0xb1] sm:$0xff]
        %v1621 = vld [vmem:[%s804 + $0xc1] sm:$0xff]
        %v1622 = vld [vmem:[%s804 + $0xc9] sm:$0xff]
        %v1623 = vld [vmem:[%s804 + $0xd9] sm:$0xff]
        %v1624 = vld [vmem:[%s804 + $0xe1] sm:$0xff]
        %v1625 = vld [vmem:[%s804 + $0xf1] sm:$0xff]
        %v1626 = vld [vmem:[%s804 + $0xf9] sm:$0xff]
        %v1627 = vld [vmem:[%s804 + $0x109] sm:$0xff]
        %v1628 = vld [vmem:[%s804 + $0x111] sm:$0xff]
        %v1629 = vld [vmem:[%s804 + $0x121] sm:$0xff]
        %v1630 = vld [vmem:[%s804 + $0x129] sm:$0xff]
        %v1631 = vld [vmem:[%s804 + $0x139] sm:$0xff]
        %v1632 = vld [vmem:[%s804 + $0x141] sm:$0xff]
        %v1633 = vld [vmem:[%s804 + $0x151] sm:$0xff]
        %v1634 = vld [vmem:[%s804 + $0x159] sm:$0xff]
        %v1635 = vld [vmem:[%s804 + $0x169] sm:$0xff]
        %v1636 = vld [vmem:[%s804 + $0x171] sm:$0xff]
        %v1637 = vpack.c.bf16 %v1606, %v1605
        %v1638 = vpack.c.bf16 %v1608, %v1607
        %v1639 = vpack.c.bf16 %v1610, %v1609
        %v1640 = vpack.c.bf16 %v1612, %v1611
        %v1641 = vpack.c.bf16 %v1614, %v1613
        %v1642 = vpack.c.bf16 %v1616, %v1615
        %v1643 = vpack.c.bf16 %v1618, %v1617
        %v1644 = vpack.c.bf16 %v1620, %v1619
        %v1645 = vpack.c.bf16 %v1622, %v1621
        %v1646 = vpack.c.bf16 %v1624, %v1623
        %v1647 = vpack.c.bf16 %v1626, %v1625
        %v1648 = vpack.c.bf16 %v1628, %v1627
        %v1649 = vpack.c.bf16 %v1630, %v1629
        %v1650 = vpack.c.bf16 %v1632, %v1631
        %v1651 = vpack.c.bf16 %v1634, %v1633
        %v1652 = vpack.c.bf16 %v1636, %v1635
        %v1669 = vunpack.c.l.b16 %v1637
        %v1670 = vunpack.c.h.b16 %v1637
        %v1671 = vunpack.c.l.b16 %v1638
        %v1672 = vunpack.c.h.b16 %v1638
        %v1673 = vunpack.c.l.b16 %v1639
        %v1674 = vunpack.c.h.b16 %v1639
        %v1675 = vunpack.c.l.b16 %v1640
        %v1676 = vunpack.c.h.b16 %v1640
        %v1677 = vunpack.c.l.b16 %v1641
        %v1678 = vunpack.c.h.b16 %v1641
        %v1679 = vunpack.c.l.b16 %v1642
        %v1680 = vunpack.c.h.b16 %v1642
        %v1681 = vunpack.c.l.b16 %v1643
        %v1682 = vunpack.c.h.b16 %v1643
        %v1683 = vunpack.c.l.b16 %v1644
        %v1684 = vunpack.c.h.b16 %v1644
        %v1685 = vunpack.c.l.b16 %v1645
        %v1686 = vunpack.c.h.b16 %v1645
        %v1687 = vunpack.c.l.b16 %v1646
        %v1688 = vunpack.c.h.b16 %v1646
        %v1689 = vunpack.c.l.b16 %v1647
        %v1690 = vunpack.c.h.b16 %v1647
        %v1691 = vunpack.c.l.b16 %v1648
        %v1692 = vunpack.c.h.b16 %v1648
        %v1693 = vunpack.c.l.b16 %v1649
        %v1694 = vunpack.c.h.b16 %v1649
        %v1695 = vunpack.c.l.b16 %v1650
        %v1696 = vunpack.c.h.b16 %v1650
        %v1697 = vunpack.c.l.b16 %v1651
        %v1698 = vunpack.c.h.b16 %v1651
        %v1699 = vunpack.c.l.b16 %v1652
        %v1700 = vunpack.c.h.b16 %v1652
        %v1701 = vpack.c.b16 %v1669, %v1669
        %v1702 = vpack.c.b16 %v1670, %v1670
        %v1703 = vpack.c.b16 %v1671, %v1671
        %v1704 = vpack.c.b16 %v1672, %v1672
        %v1705 = vpack.c.b16 %v1673, %v1673
        %v1706 = vpack.c.b16 %v1674, %v1674
        %v1707 = vpack.c.b16 %v1675, %v1675
        %v1708 = vpack.c.b16 %v1676, %v1676
        %v1709 = vpack.c.b16 %v1677, %v1677
        %v1710 = vpack.c.b16 %v1678, %v1678
        %v1711 = vpack.c.b16 %v1679, %v1679
        %v1712 = vpack.c.b16 %v1680, %v1680
        %v1713 = vpack.c.b16 %v1681, %v1681
        %v1714 = vpack.c.b16 %v1682, %v1682
        %v1715 = vpack.c.b16 %v1683, %v1683
        %v1716 = vpack.c.b16 %v1684, %v1684
        %v1717 = vpack.c.b16 %v1685, %v1685
        %v1718 = vpack.c.b16 %v1686, %v1686
        %v1719 = vpack.c.b16 %v1687, %v1687
        %v1720 = vpack.c.b16 %v1688, %v1688
        %v1721 = vpack.c.b16 %v1689, %v1689
        %v1722 = vpack.c.b16 %v1690, %v1690
        %v1723 = vpack.c.b16 %v1691, %v1691
        %v1724 = vpack.c.b16 %v1692, %v1692
        %v1725 = vpack.c.b16 %v1693, %v1693
        %v1726 = vpack.c.b16 %v1694, %v1694
        %v1727 = vpack.c.b16 %v1695, %v1695
        %v1728 = vpack.c.b16 %v1696, %v1696
        %v1729 = vpack.c.b16 %v1697, %v1697
        %v1730 = vpack.c.b16 %v1698, %v1698
        %v1731 = vpack.c.b16 %v1699, %v1699
        %v1732 = vpack.c.b16 %v1700, %v1700
        %1765 = vst [vmem:[#allocation3 + $0x10] sm:$0xf] %v1701
        %1766 = vst [vmem:[#allocation3 + $0x34] sm:$0xf] %v1702
        %1767 = vst [vmem:[#allocation3 + $0x58] sm:$0xf] %v1703
        %1768 = vst [vmem:[#allocation3 + $0x7c] sm:$0xf] %v1704
        %1769 = vst [vmem:[#allocation3 + $0xa0] sm:$0xf] %v1705
        %1770 = vst [vmem:[#allocation3 + $0xc4] sm:$0xf] %v1706
        %1771 = vst [vmem:[#allocation3 + $0xe8] sm:$0xf] %v1707
        %1772 = vst [vmem:[#allocation3 + $0x10c] sm:$0xf] %v1708
        %1773 = vst [vmem:[#allocation3 + $0x130] sm:$0xf] %v1709
        %1774 = vst [vmem:[#allocation3 + $0x154] sm:$0xf] %v1710
        %1775 = vst [vmem:[#allocation3 + $0x178] sm:$0xf] %v1711
        %1776 = vst [vmem:[#allocation3 + $0x19c] sm:$0xf] %v1712
        %1777 = vst [vmem:[#allocation3 + $0x1c0] sm:$0xf] %v1713
        %1778 = vst [vmem:[#allocation3 + $0x1e4] sm:$0xf] %v1714
        %1779 = vst [vmem:[#allocation3 + $0x208] sm:$0xf] %v1715
        %1780 = vst [vmem:[#allocation3 + $0x22c] sm:$0xf] %v1716
        %1781 = vst [vmem:[#allocation3 + $0x250] sm:$0xf] %v1717
        %1782 = vst [vmem:[#allocation3 + $0x274] sm:$0xf] %v1718
        %1783 = vst [vmem:[#allocation3 + $0x298] sm:$0xf] %v1719
        %1784 = vst [vmem:[#allocation3 + $0x2bc] sm:$0xf] %v1720
        %1785 = vst [vmem:[#allocation3 + $0x2e0] sm:$0xf] %v1721
        %1786 = vst [vmem:[#allocation3 + $0x304] sm:$0xf] %v1722
        %1787 = vst [vmem:[#allocation3 + $0x328] sm:$0xf] %v1723
        %1788 = vst [vmem:[#allocation3 + $0x34c] sm:$0xf] %v1724
        %1789 = vst [vmem:[#allocation3 + $0x370] sm:$0xf] %v1725
        %1790 = vst [vmem:[#allocation3 + $0x394] sm:$0xf] %v1726
        %1791 = vst [vmem:[#allocation3 + $0x3b8] sm:$0xf] %v1727
        %1792 = vst [vmem:[#allocation3 + $0x3dc] sm:$0xf] %v1728
        %1793 = vst [vmem:[#allocation3 + $0x400] sm:$0xf] %v1729
        %1794 = vst [vmem:[#allocation3 + $0x424] sm:$0xf] %v1730
        %1795 = vst [vmem:[#allocation3 + $0x448] sm:$0xf] %v1731
        %1796 = vst [vmem:[#allocation3 + $0x46c] sm:$0xf] %v1732
        %v1797 = vld [vmem:[%s804 + $0x2] sm:$0xff]
        %v1798 = vld [vmem:[%s804 + $0xa] sm:$0xff]
        %v1799 = vld [vmem:[%s804 + $0x1a] sm:$0xff]
        %v1800 = vld [vmem:[%s804 + $0x22] sm:$0xff]
        %v1801 = vld [vmem:[%s804 + $0x32] sm:$0xff]
        %v1802 = vld [vmem:[%s804 + $0x3a] sm:$0xff]
        %v1803 = vld [vmem:[%s804 + $0x4a] sm:$0xff]
        %v1804 = vld [vmem:[%s804 + $0x52] sm:$0xff]
        %v1805 = vld [vmem:[%s804 + $0x62] sm:$0xff]
        %v1806 = vld [vmem:[%s804 + $0x6a] sm:$0xff]
        %v1807 = vld [vmem:[%s804 + $0x7a] sm:$0xff]
        %v1808 = vld [vmem:[%s804 + $0x82] sm:$0xff]
        %v1809 = vld [vmem:[%s804 + $0x92] sm:$0xff]
        %v1810 = vld [vmem:[%s804 + $0x9a] sm:$0xff]
        %v1811 = vld [vmem:[%s804 + $0xaa] sm:$0xff]
        %v1812 = vld [vmem:[%s804 + $0xb2] sm:$0xff]
        %v1813 = vld [vmem:[%s804 + $0xc2] sm:$0xff]
        %v1814 = vld [vmem:[%s804 + $0xca] sm:$0xff]
        %v1815 = vld [vmem:[%s804 + $0xda] sm:$0xff]
        %v1816 = vld [vmem:[%s804 + $0xe2] sm:$0xff]
        %v1817 = vld [vmem:[%s804 + $0xf2] sm:$0xff]
        %v1818 = vld [vmem:[%s804 + $0xfa] sm:$0xff]
        %v1819 = vld [vmem:[%s804 + $0x10a] sm:$0xff]
        %v1820 = vld [vmem:[%s804 + $0x112] sm:$0xff]
        %v1821 = vld [vmem:[%s804 + $0x122] sm:$0xff]
        %v1822 = vld [vmem:[%s804 + $0x12a] sm:$0xff]
        %v1823 = vld [vmem:[%s804 + $0x13a] sm:$0xff]
        %v1824 = vld [vmem:[%s804 + $0x142] sm:$0xff]
        %v1825 = vld [vmem:[%s804 + $0x152] sm:$0xff]
        %v1826 = vld [vmem:[%s804 + $0x15a] sm:$0xff]
        %v1827 = vld [vmem:[%s804 + $0x16a] sm:$0xff]
        %v1828 = vld [vmem:[%s804 + $0x172] sm:$0xff]
        %v1829 = vpack.c.bf16 %v1798, %v1797
        %v1830 = vpack.c.bf16 %v1800, %v1799
        %v1831 = vpack.c.bf16 %v1802, %v1801
        %v1832 = vpack.c.bf16 %v1804, %v1803
        %v1833 = vpack.c.bf16 %v1806, %v1805
        %v1834 = vpack.c.bf16 %v1808, %v1807
        %v1835 = vpack.c.bf16 %v1810, %v1809
        %v1836 = vpack.c.bf16 %v1812, %v1811
        %v1837 = vpack.c.bf16 %v1814, %v1813
        %v1838 = vpack.c.bf16 %v1816, %v1815
        %v1839 = vpack.c.bf16 %v1818, %v1817
        %v1840 = vpack.c.bf16 %v1820, %v1819
        %v1841 = vpack.c.bf16 %v1822, %v1821
        %v1842 = vpack.c.bf16 %v1824, %v1823
        %v1843 = vpack.c.bf16 %v1826, %v1825
        %v1844 = vpack.c.bf16 %v1828, %v1827
        %v1861 = vunpack.c.l.b16 %v1829
        %v1862 = vunpack.c.h.b16 %v1829
        %v1863 = vunpack.c.l.b16 %v1830
        %v1864 = vunpack.c.h.b16 %v1830
        %v1865 = vunpack.c.l.b16 %v1831
        %v1866 = vunpack.c.h.b16 %v1831
        %v1867 = vunpack.c.l.b16 %v1832
        %v1868 = vunpack.c.h.b16 %v1832
        %v1869 = vunpack.c.l.b16 %v1833
        %v1870 = vunpack.c.h.b16 %v1833
        %v1871 = vunpack.c.l.b16 %v1834
        %v1872 = vunpack.c.h.b16 %v1834
        %v1873 = vunpack.c.l.b16 %v1835
        %v1874 = vunpack.c.h.b16 %v1835
        %v1875 = vunpack.c.l.b16 %v1836
        %v1876 = vunpack.c.h.b16 %v1836
        %v1877 = vunpack.c.l.b16 %v1837
        %v1878 = vunpack.c.h.b16 %v1837
        %v1879 = vunpack.c.l.b16 %v1838
        %v1880 = vunpack.c.h.b16 %v1838
        %v1881 = vunpack.c.l.b16 %v1839
        %v1882 = vunpack.c.h.b16 %v1839
        %v1883 = vunpack.c.l.b16 %v1840
        %v1884 = vunpack.c.h.b16 %v1840
        %v1885 = vunpack.c.l.b16 %v1841
        %v1886 = vunpack.c.h.b16 %v1841
        %v1887 = vunpack.c.l.b16 %v1842
        %v1888 = vunpack.c.h.b16 %v1842
        %v1889 = vunpack.c.l.b16 %v1843
        %v1890 = vunpack.c.h.b16 %v1843
        %v1891 = vunpack.c.l.b16 %v1844
        %v1892 = vunpack.c.h.b16 %v1844
        %v1893 = vpack.c.b16 %v1861, %v1861
        %v1894 = vpack.c.b16 %v1862, %v1862
        %v1895 = vpack.c.b16 %v1863, %v1863
        %v1896 = vpack.c.b16 %v1864, %v1864
        %v1897 = vpack.c.b16 %v1865, %v1865
        %v1898 = vpack.c.b16 %v1866, %v1866
        %v1899 = vpack.c.b16 %v1867, %v1867
        %v1900 = vpack.c.b16 %v1868, %v1868
        %v1901 = vpack.c.b16 %v1869, %v1869
        %v1902 = vpack.c.b16 %v1870, %v1870
        %v1903 = vpack.c.b16 %v1871, %v1871
        %v1904 = vpack.c.b16 %v1872, %v1872
        %v1905 = vpack.c.b16 %v1873, %v1873
        %v1906 = vpack.c.b16 %v1874, %v1874
        %v1907 = vpack.c.b16 %v1875, %v1875
        %v1908 = vpack.c.b16 %v1876, %v1876
        %v1909 = vpack.c.b16 %v1877, %v1877
        %v1910 = vpack.c.b16 %v1878, %v1878
        %v1911 = vpack.c.b16 %v1879, %v1879
        %v1912 = vpack.c.b16 %v1880, %v1880
        %v1913 = vpack.c.b16 %v1881, %v1881
        %v1914 = vpack.c.b16 %v1882, %v1882
        %v1915 = vpack.c.b16 %v1883, %v1883
        %v1916 = vpack.c.b16 %v1884, %v1884
        %v1917 = vpack.c.b16 %v1885, %v1885
        %v1918 = vpack.c.b16 %v1886, %v1886
        %v1919 = vpack.c.b16 %v1887, %v1887
        %v1920 = vpack.c.b16 %v1888, %v1888
        %v1921 = vpack.c.b16 %v1889, %v1889
        %v1922 = vpack.c.b16 %v1890, %v1890
        %v1923 = vpack.c.b16 %v1891, %v1891
        %v1924 = vpack.c.b16 %v1892, %v1892
        %1957 = vst [vmem:[#allocation3 + $0x14] sm:$0xf] %v1893
        %1958 = vst [vmem:[#allocation3 + $0x38] sm:$0xf] %v1894
        %1959 = vst [vmem:[#allocation3 + $0x5c] sm:$0xf] %v1895
        %1960 = vst [vmem:[#allocation3 + $0x80] sm:$0xf] %v1896
        %1961 = vst [vmem:[#allocation3 + $0xa4] sm:$0xf] %v1897
        %1962 = vst [vmem:[#allocation3 + $0xc8] sm:$0xf] %v1898
        %1963 = vst [vmem:[#allocation3 + $0xec] sm:$0xf] %v1899
        %1964 = vst [vmem:[#allocation3 + $0x110] sm:$0xf] %v1900
        %1965 = vst [vmem:[#allocation3 + $0x134] sm:$0xf] %v1901
        %1966 = vst [vmem:[#allocation3 + $0x158] sm:$0xf] %v1902
        %1967 = vst [vmem:[#allocation3 + $0x17c] sm:$0xf] %v1903
        %1968 = vst [vmem:[#allocation3 + $0x1a0] sm:$0xf] %v1904
        %1969 = vst [vmem:[#allocation3 + $0x1c4] sm:$0xf] %v1905
        %1970 = vst [vmem:[#allocation3 + $0x1e8] sm:$0xf] %v1906
        %1971 = vst [vmem:[#allocation3 + $0x20c] sm:$0xf] %v1907
        %1972 = vst [vmem:[#allocation3 + $0x230] sm:$0xf] %v1908
        %1973 = vst [vmem:[#allocation3 + $0x254] sm:$0xf] %v1909
        %1974 = vst [vmem:[#allocation3 + $0x278] sm:$0xf] %v1910
        %1975 = vst [vmem:[#allocation3 + $0x29c] sm:$0xf] %v1911
        %1976 = vst [vmem:[#allocation3 + $0x2c0] sm:$0xf] %v1912
        %1977 = vst [vmem:[#allocation3 + $0x2e4] sm:$0xf] %v1913
        %1978 = vst [vmem:[#allocation3 + $0x308] sm:$0xf] %v1914
        %1979 = vst [vmem:[#allocation3 + $0x32c] sm:$0xf] %v1915
        %1980 = vst [vmem:[#allocation3 + $0x350] sm:$0xf] %v1916
        %1981 = vst [vmem:[#allocation3 + $0x374] sm:$0xf] %v1917
        %1982 = vst [vmem:[#allocation3 + $0x398] sm:$0xf] %v1918
        %1983 = vst [vmem:[#allocation3 + $0x3bc] sm:$0xf] %v1919
        %1984 = vst [vmem:[#allocation3 + $0x3e0] sm:$0xf] %v1920
        %1985 = vst [vmem:[#allocation3 + $0x404] sm:$0xf] %v1921
        %1986 = vst [vmem:[#allocation3 + $0x428] sm:$0xf] %v1922
        %1987 = vst [vmem:[#allocation3 + $0x44c] sm:$0xf] %v1923
        %1988 = vst [vmem:[#allocation3 + $0x470] sm:$0xf] %v1924
        %s1989 = scalar_lea.vmem [#allocation2], 48
        %v1990 = vld [vmem:[%s1989] sm:$0xff]
        %v1991 = vld [vmem:[%s1989 + $0x8] sm:$0xff]
        %v1992 = vld [vmem:[%s1989 + $0x18] sm:$0xff]
        %v1993 = vld [vmem:[%s1989 + $0x20] sm:$0xff]
        %v1994 = vld [vmem:[%s1989 + $0x30] sm:$0xff]
        %v1995 = vld [vmem:[%s1989 + $0x38] sm:$0xff]
        %v1996 = vld [vmem:[%s1989 + $0x48] sm:$0xff]
        %v1997 = vld [vmem:[%s1989 + $0x50] sm:$0xff]
        %v1998 = vld [vmem:[%s1989 + $0x60] sm:$0xff]
        %v1999 = vld [vmem:[%s1989 + $0x68] sm:$0xff]
        %v2000 = vld [vmem:[%s1989 + $0x78] sm:$0xff]
        %v2001 = vld [vmem:[%s1989 + $0x80] sm:$0xff]
        %v2002 = vld [vmem:[%s1989 + $0x90] sm:$0xff]
        %v2003 = vld [vmem:[%s1989 + $0x98] sm:$0xff]
        %v2004 = vld [vmem:[%s1989 + $0xa8] sm:$0xff]
        %v2005 = vld [vmem:[%s1989 + $0xb0] sm:$0xff]
        %v2006 = vld [vmem:[%s1989 + $0xc0] sm:$0xff]
        %v2007 = vld [vmem:[%s1989 + $0xc8] sm:$0xff]
        %v2008 = vld [vmem:[%s1989 + $0xd8] sm:$0xff]
        %v2009 = vld [vmem:[%s1989 + $0xe0] sm:$0xff]
        %v2010 = vld [vmem:[%s1989 + $0xf0] sm:$0xff]
        %v2011 = vld [vmem:[%s1989 + $0xf8] sm:$0xff]
        %v2012 = vld [vmem:[%s1989 + $0x108] sm:$0xff]
        %v2013 = vld [vmem:[%s1989 + $0x110] sm:$0xff]
        %v2014 = vld [vmem:[%s1989 + $0x120] sm:$0xff]
        %v2015 = vld [vmem:[%s1989 + $0x128] sm:$0xff]
        %v2016 = vld [vmem:[%s1989 + $0x138] sm:$0xff]
        %v2017 = vld [vmem:[%s1989 + $0x140] sm:$0xff]
        %v2018 = vld [vmem:[%s1989 + $0x150] sm:$0xff]
        %v2019 = vld [vmem:[%s1989 + $0x158] sm:$0xff]
        %v2020 = vld [vmem:[%s1989 + $0x168] sm:$0xff]
        %v2021 = vld [vmem:[%s1989 + $0x170] sm:$0xff]
        %v2022 = vpack.c.bf16 %v1991, %v1990
        %v2023 = vpack.c.bf16 %v1993, %v1992
        %v2024 = vpack.c.bf16 %v1995, %v1994
        %v2025 = vpack.c.bf16 %v1997, %v1996
        %v2026 = vpack.c.bf16 %v1999, %v1998
        %v2027 = vpack.c.bf16 %v2001, %v2000
        %v2028 = vpack.c.bf16 %v2003, %v2002
        %v2029 = vpack.c.bf16 %v2005, %v2004
        %v2030 = vpack.c.bf16 %v2007, %v2006
        %v2031 = vpack.c.bf16 %v2009, %v2008
        %v2032 = vpack.c.bf16 %v2011, %v2010
        %v2033 = vpack.c.bf16 %v2013, %v2012
        %v2034 = vpack.c.bf16 %v2015, %v2014
        %v2035 = vpack.c.bf16 %v2017, %v2016
        %v2036 = vpack.c.bf16 %v2019, %v2018
        %v2037 = vpack.c.bf16 %v2021, %v2020
        %v2054 = vunpack.c.l.b16 %v2022
        %v2055 = vunpack.c.h.b16 %v2022
        %v2056 = vunpack.c.l.b16 %v2023
        %v2057 = vunpack.c.h.b16 %v2023
        %v2058 = vunpack.c.l.b16 %v2024
        %v2059 = vunpack.c.h.b16 %v2024
        %v2060 = vunpack.c.l.b16 %v2025
        %v2061 = vunpack.c.h.b16 %v2025
        %v2062 = vunpack.c.l.b16 %v2026
        %v2063 = vunpack.c.h.b16 %v2026
        %v2064 = vunpack.c.l.b16 %v2027
        %v2065 = vunpack.c.h.b16 %v2027
        %v2066 = vunpack.c.l.b16 %v2028
        %v2067 = vunpack.c.h.b16 %v2028
        %v2068 = vunpack.c.l.b16 %v2029
        %v2069 = vunpack.c.h.b16 %v2029
        %v2070 = vunpack.c.l.b16 %v2030
        %v2071 = vunpack.c.h.b16 %v2030
        %v2072 = vunpack.c.l.b16 %v2031
        %v2073 = vunpack.c.h.b16 %v2031
        %v2074 = vunpack.c.l.b16 %v2032
        %v2075 = vunpack.c.h.b16 %v2032
        %v2076 = vunpack.c.l.b16 %v2033
        %v2077 = vunpack.c.h.b16 %v2033
        %v2078 = vunpack.c.l.b16 %v2034
        %v2079 = vunpack.c.h.b16 %v2034
        %v2080 = vunpack.c.l.b16 %v2035
        %v2081 = vunpack.c.h.b16 %v2035
        %v2082 = vunpack.c.l.b16 %v2036
        %v2083 = vunpack.c.h.b16 %v2036
        %v2084 = vunpack.c.l.b16 %v2037
        %v2085 = vunpack.c.h.b16 %v2037
        %v2086 = vpack.c.b16 %v2054, %v2054
        %v2087 = vpack.c.b16 %v2055, %v2055
        %v2088 = vpack.c.b16 %v2056, %v2056
        %v2089 = vpack.c.b16 %v2057, %v2057
        %v2090 = vpack.c.b16 %v2058, %v2058
        %v2091 = vpack.c.b16 %v2059, %v2059
        %v2092 = vpack.c.b16 %v2060, %v2060
        %v2093 = vpack.c.b16 %v2061, %v2061
        %v2094 = vpack.c.b16 %v2062, %v2062
        %v2095 = vpack.c.b16 %v2063, %v2063
        %v2096 = vpack.c.b16 %v2064, %v2064
        %v2097 = vpack.c.b16 %v2065, %v2065
        %v2098 = vpack.c.b16 %v2066, %v2066
        %v2099 = vpack.c.b16 %v2067, %v2067
        %v2100 = vpack.c.b16 %v2068, %v2068
        %v2101 = vpack.c.b16 %v2069, %v2069
        %v2102 = vpack.c.b16 %v2070, %v2070
        %v2103 = vpack.c.b16 %v2071, %v2071
        %v2104 = vpack.c.b16 %v2072, %v2072
        %v2105 = vpack.c.b16 %v2073, %v2073
        %v2106 = vpack.c.b16 %v2074, %v2074
        %v2107 = vpack.c.b16 %v2075, %v2075
        %v2108 = vpack.c.b16 %v2076, %v2076
        %v2109 = vpack.c.b16 %v2077, %v2077
        %v2110 = vpack.c.b16 %v2078, %v2078
        %v2111 = vpack.c.b16 %v2079, %v2079
        %v2112 = vpack.c.b16 %v2080, %v2080
        %v2113 = vpack.c.b16 %v2081, %v2081
        %v2114 = vpack.c.b16 %v2082, %v2082
        %v2115 = vpack.c.b16 %v2083, %v2083
        %v2116 = vpack.c.b16 %v2084, %v2084
        %v2117 = vpack.c.b16 %v2085, %v2085
        %2150 = vst [vmem:[#allocation3 + $0x18] sm:$0xf] %v2086
        %2151 = vst [vmem:[#allocation3 + $0x3c] sm:$0xf] %v2087
        %2152 = vst [vmem:[#allocation3 + $0x60] sm:$0xf] %v2088
        %2153 = vst [vmem:[#allocation3 + $0x84] sm:$0xf] %v2089
        %2154 = vst [vmem:[#allocation3 + $0xa8] sm:$0xf] %v2090
        %2155 = vst [vmem:[#allocation3 + $0xcc] sm:$0xf] %v2091
        %2156 = vst [vmem:[#allocation3 + $0xf0] sm:$0xf] %v2092
        %2157 = vst [vmem:[#allocation3 + $0x114] sm:$0xf] %v2093
        %2158 = vst [vmem:[#allocation3 + $0x138] sm:$0xf] %v2094
        %2159 = vst [vmem:[#allocation3 + $0x15c] sm:$0xf] %v2095
        %2160 = vst [vmem:[#allocation3 + $0x180] sm:$0xf] %v2096
        %2161 = vst [vmem:[#allocation3 + $0x1a4] sm:$0xf] %v2097
        %2162 = vst [vmem:[#allocation3 + $0x1c8] sm:$0xf] %v2098
        %2163 = vst [vmem:[#allocation3 + $0x1ec] sm:$0xf] %v2099
        %2164 = vst [vmem:[#allocation3 + $0x210] sm:$0xf] %v2100
        %2165 = vst [vmem:[#allocation3 + $0x234] sm:$0xf] %v2101
        %2166 = vst [vmem:[#allocation3 + $0x258] sm:$0xf] %v2102
        %2167 = vst [vmem:[#allocation3 + $0x27c] sm:$0xf] %v2103
        %2168 = vst [vmem:[#allocation3 + $0x2a0] sm:$0xf] %v2104
        %2169 = vst [vmem:[#allocation3 + $0x2c4] sm:$0xf] %v2105
        %2170 = vst [vmem:[#allocation3 + $0x2e8] sm:$0xf] %v2106
        %2171 = vst [vmem:[#allocation3 + $0x30c] sm:$0xf] %v2107
        %2172 = vst [vmem:[#allocation3 + $0x330] sm:$0xf] %v2108
        %2173 = vst [vmem:[#allocation3 + $0x354] sm:$0xf] %v2109
        %2174 = vst [vmem:[#allocation3 + $0x378] sm:$0xf] %v2110
        %2175 = vst [vmem:[#allocation3 + $0x39c] sm:$0xf] %v2111
        %2176 = vst [vmem:[#allocation3 + $0x3c0] sm:$0xf] %v2112
        %2177 = vst [vmem:[#allocation3 + $0x3e4] sm:$0xf] %v2113
        %2178 = vst [vmem:[#allocation3 + $0x408] sm:$0xf] %v2114
        %2179 = vst [vmem:[#allocation3 + $0x42c] sm:$0xf] %v2115
        %2180 = vst [vmem:[#allocation3 + $0x450] sm:$0xf] %v2116
        %2181 = vst [vmem:[#allocation3 + $0x474] sm:$0xf] %v2117
        %v2182 = vld [vmem:[%s1989 + $0x1] sm:$0xff]
        %v2183 = vld [vmem:[%s1989 + $0x9] sm:$0xff]
        %v2184 = vld [vmem:[%s1989 + $0x19] sm:$0xff]
        %v2185 = vld [vmem:[%s1989 + $0x21] sm:$0xff]
        %v2186 = vld [vmem:[%s1989 + $0x31] sm:$0xff]
        %v2187 = vld [vmem:[%s1989 + $0x39] sm:$0xff]
        %v2188 = vld [vmem:[%s1989 + $0x49] sm:$0xff]
        %v2189 = vld [vmem:[%s1989 + $0x51] sm:$0xff]
        %v2190 = vld [vmem:[%s1989 + $0x61] sm:$0xff]
        %v2191 = vld [vmem:[%s1989 + $0x69] sm:$0xff]
        %v2192 = vld [vmem:[%s1989 + $0x79] sm:$0xff]
        %v2193 = vld [vmem:[%s1989 + $0x81] sm:$0xff]
        %v2194 = vld [vmem:[%s1989 + $0x91] sm:$0xff]
        %v2195 = vld [vmem:[%s1989 + $0x99] sm:$0xff]
        %v2196 = vld [vmem:[%s1989 + $0xa9] sm:$0xff]
        %v2197 = vld [vmem:[%s1989 + $0xb1] sm:$0xff]
        %v2198 = vld [vmem:[%s1989 + $0xc1] sm:$0xff]
        %v2199 = vld [vmem:[%s1989 + $0xc9] sm:$0xff]
        %v2200 = vld [vmem:[%s1989 + $0xd9] sm:$0xff]
        %v2201 = vld [vmem:[%s1989 + $0xe1] sm:$0xff]
        %v2202 = vld [vmem:[%s1989 + $0xf1] sm:$0xff]
        %v2203 = vld [vmem:[%s1989 + $0xf9] sm:$0xff]
        %v2204 = vld [vmem:[%s1989 + $0x109] sm:$0xff]
        %v2205 = vld [vmem:[%s1989 + $0x111] sm:$0xff]
        %v2206 = vld [vmem:[%s1989 + $0x121] sm:$0xff]
        %v2207 = vld [vmem:[%s1989 + $0x129] sm:$0xff]
        %v2208 = vld [vmem:[%s1989 + $0x139] sm:$0xff]
        %v2209 = vld [vmem:[%s1989 + $0x141] sm:$0xff]
        %v2210 = vld [vmem:[%s1989 + $0x151] sm:$0xff]
        %v2211 = vld [vmem:[%s1989 + $0x159] sm:$0xff]
        %v2212 = vld [vmem:[%s1989 + $0x169] sm:$0xff]
        %v2213 = vld [vmem:[%s1989 + $0x171] sm:$0xff]
        %v2214 = vpack.c.bf16 %v2183, %v2182
        %v2215 = vpack.c.bf16 %v2185, %v2184
        %v2216 = vpack.c.bf16 %v2187, %v2186
        %v2217 = vpack.c.bf16 %v2189, %v2188
        %v2218 = vpack.c.bf16 %v2191, %v2190
        %v2219 = vpack.c.bf16 %v2193, %v2192
        %v2220 = vpack.c.bf16 %v2195, %v2194
        %v2221 = vpack.c.bf16 %v2197, %v2196
        %v2222 = vpack.c.bf16 %v2199, %v2198
        %v2223 = vpack.c.bf16 %v2201, %v2200
        %v2224 = vpack.c.bf16 %v2203, %v2202
        %v2225 = vpack.c.bf16 %v2205, %v2204
        %v2226 = vpack.c.bf16 %v2207, %v2206
        %v2227 = vpack.c.bf16 %v2209, %v2208
        %v2228 = vpack.c.bf16 %v2211, %v2210
        %v2229 = vpack.c.bf16 %v2213, %v2212
        %v2246 = vunpack.c.l.b16 %v2214
        %v2247 = vunpack.c.h.b16 %v2214
        %v2248 = vunpack.c.l.b16 %v2215
        %v2249 = vunpack.c.h.b16 %v2215
        %v2250 = vunpack.c.l.b16 %v2216
        %v2251 = vunpack.c.h.b16 %v2216
        %v2252 = vunpack.c.l.b16 %v2217
        %v2253 = vunpack.c.h.b16 %v2217
        %v2254 = vunpack.c.l.b16 %v2218
        %v2255 = vunpack.c.h.b16 %v2218
        %v2256 = vunpack.c.l.b16 %v2219
        %v2257 = vunpack.c.h.b16 %v2219
        %v2258 = vunpack.c.l.b16 %v2220
        %v2259 = vunpack.c.h.b16 %v2220
        %v2260 = vunpack.c.l.b16 %v2221
        %v2261 = vunpack.c.h.b16 %v2221
        %v2262 = vunpack.c.l.b16 %v2222
        %v2263 = vunpack.c.h.b16 %v2222
        %v2264 = vunpack.c.l.b16 %v2223
        %v2265 = vunpack.c.h.b16 %v2223
        %v2266 = vunpack.c.l.b16 %v2224
        %v2267 = vunpack.c.h.b16 %v2224
        %v2268 = vunpack.c.l.b16 %v2225
        %v2269 = vunpack.c.h.b16 %v2225
        %v2270 = vunpack.c.l.b16 %v2226
        %v2271 = vunpack.c.h.b16 %v2226
        %v2272 = vunpack.c.l.b16 %v2227
        %v2273 = vunpack.c.h.b16 %v2227
        %v2274 = vunpack.c.l.b16 %v2228
        %v2275 = vunpack.c.h.b16 %v2228
        %v2276 = vunpack.c.l.b16 %v2229
        %v2277 = vunpack.c.h.b16 %v2229
        %v2278 = vpack.c.b16 %v2246, %v2246
        %v2279 = vpack.c.b16 %v2247, %v2247
        %v2280 = vpack.c.b16 %v2248, %v2248
        %v2281 = vpack.c.b16 %v2249, %v2249
        %v2282 = vpack.c.b16 %v2250, %v2250
        %v2283 = vpack.c.b16 %v2251, %v2251
        %v2284 = vpack.c.b16 %v2252, %v2252
        %v2285 = vpack.c.b16 %v2253, %v2253
        %v2286 = vpack.c.b16 %v2254, %v2254
        %v2287 = vpack.c.b16 %v2255, %v2255
        %v2288 = vpack.c.b16 %v2256, %v2256
        %v2289 = vpack.c.b16 %v2257, %v2257
        %v2290 = vpack.c.b16 %v2258, %v2258
        %v2291 = vpack.c.b16 %v2259, %v2259
        %v2292 = vpack.c.b16 %v2260, %v2260
        %v2293 = vpack.c.b16 %v2261, %v2261
        %v2294 = vpack.c.b16 %v2262, %v2262
        %v2295 = vpack.c.b16 %v2263, %v2263
        %v2296 = vpack.c.b16 %v2264, %v2264
        %v2297 = vpack.c.b16 %v2265, %v2265
        %v2298 = vpack.c.b16 %v2266, %v2266
        %v2299 = vpack.c.b16 %v2267, %v2267
        %v2300 = vpack.c.b16 %v2268, %v2268
        %v2301 = vpack.c.b16 %v2269, %v2269
        %v2302 = vpack.c.b16 %v2270, %v2270
        %v2303 = vpack.c.b16 %v2271, %v2271
        %v2304 = vpack.c.b16 %v2272, %v2272
        %v2305 = vpack.c.b16 %v2273, %v2273
        %v2306 = vpack.c.b16 %v2274, %v2274
        %v2307 = vpack.c.b16 %v2275, %v2275
        %v2308 = vpack.c.b16 %v2276, %v2276
        %v2309 = vpack.c.b16 %v2277, %v2277
        %2342 = vst [vmem:[#allocation3 + $0x1c] sm:$0xf] %v2278
        %2343 = vst [vmem:[#allocation3 + $0x40] sm:$0xf] %v2279
        %2344 = vst [vmem:[#allocation3 + $0x64] sm:$0xf] %v2280
        %2345 = vst [vmem:[#allocation3 + $0x88] sm:$0xf] %v2281
        %2346 = vst [vmem:[#allocation3 + $0xac] sm:$0xf] %v2282
        %2347 = vst [vmem:[#allocation3 + $0xd0] sm:$0xf] %v2283
        %2348 = vst [vmem:[#allocation3 + $0xf4] sm:$0xf] %v2284
        %2349 = vst [vmem:[#allocation3 + $0x118] sm:$0xf] %v2285
        %2350 = vst [vmem:[#allocation3 + $0x13c] sm:$0xf] %v2286
        %2351 = vst [vmem:[#allocation3 + $0x160] sm:$0xf] %v2287
        %2352 = vst [vmem:[#allocation3 + $0x184] sm:$0xf] %v2288
        %2353 = vst [vmem:[#allocation3 + $0x1a8] sm:$0xf] %v2289
        %2354 = vst [vmem:[#allocation3 + $0x1cc] sm:$0xf] %v2290
        %2355 = vst [vmem:[#allocation3 + $0x1f0] sm:$0xf] %v2291
        %2356 = vst [vmem:[#allocation3 + $0x214] sm:$0xf] %v2292
        %2357 = vst [vmem:[#allocation3 + $0x238] sm:$0xf] %v2293
        %2358 = vst [vmem:[#allocation3 + $0x25c] sm:$0xf] %v2294
        %2359 = vst [vmem:[#allocation3 + $0x280] sm:$0xf] %v2295
        %2360 = vst [vmem:[#allocation3 + $0x2a4] sm:$0xf] %v2296
        %2361 = vst [vmem:[#allocation3 + $0x2c8] sm:$0xf] %v2297
        %2362 = vst [vmem:[#allocation3 + $0x2ec] sm:$0xf] %v2298
        %2363 = vst [vmem:[#allocation3 + $0x310] sm:$0xf] %v2299
        %2364 = vst [vmem:[#allocation3 + $0x334] sm:$0xf] %v2300
        %2365 = vst [vmem:[#allocation3 + $0x358] sm:$0xf] %v2301
        %2366 = vst [vmem:[#allocation3 + $0x37c] sm:$0xf] %v2302
        %2367 = vst [vmem:[#allocation3 + $0x3a0] sm:$0xf] %v2303
        %2368 = vst [vmem:[#allocation3 + $0x3c4] sm:$0xf] %v2304
        %2369 = vst [vmem:[#allocation3 + $0x3e8] sm:$0xf] %v2305
        %2370 = vst [vmem:[#allocation3 + $0x40c] sm:$0xf] %v2306
        %2371 = vst [vmem:[#allocation3 + $0x430] sm:$0xf] %v2307
        %2372 = vst [vmem:[#allocation3 + $0x454] sm:$0xf] %v2308
        %2373 = vst [vmem:[#allocation3 + $0x478] sm:$0xf] %v2309
        %v2374 = vld [vmem:[%s1989 + $0x2] sm:$0xff]
        %v2375 = vld [vmem:[%s1989 + $0xa] sm:$0xff]
        %v2376 = vld [vmem:[%s1989 + $0x1a] sm:$0xff]
        %v2377 = vld [vmem:[%s1989 + $0x22] sm:$0xff]
        %v2378 = vld [vmem:[%s1989 + $0x32] sm:$0xff]
        %v2379 = vld [vmem:[%s1989 + $0x3a] sm:$0xff]
        %v2380 = vld [vmem:[%s1989 + $0x4a] sm:$0xff]
        %v2381 = vld [vmem:[%s1989 + $0x52] sm:$0xff]
        %v2382 = vld [vmem:[%s1989 + $0x62] sm:$0xff]
        %v2383 = vld [vmem:[%s1989 + $0x6a] sm:$0xff]
        %v2384 = vld [vmem:[%s1989 + $0x7a] sm:$0xff]
        %v2385 = vld [vmem:[%s1989 + $0x82] sm:$0xff]
        %v2386 = vld [vmem:[%s1989 + $0x92] sm:$0xff]
        %v2387 = vld [vmem:[%s1989 + $0x9a] sm:$0xff]
        %v2388 = vld [vmem:[%s1989 + $0xaa] sm:$0xff]
        %v2389 = vld [vmem:[%s1989 + $0xb2] sm:$0xff]
        %v2390 = vld [vmem:[%s1989 + $0xc2] sm:$0xff]
        %v2391 = vld [vmem:[%s1989 + $0xca] sm:$0xff]
        %v2392 = vld [vmem:[%s1989 + $0xda] sm:$0xff]
        %v2393 = vld [vmem:[%s1989 + $0xe2] sm:$0xff]
        %v2394 = vld [vmem:[%s1989 + $0xf2] sm:$0xff]
        %v2395 = vld [vmem:[%s1989 + $0xfa] sm:$0xff]
        %v2396 = vld [vmem:[%s1989 + $0x10a] sm:$0xff]
        %v2397 = vld [vmem:[%s1989 + $0x112] sm:$0xff]
        %v2398 = vld [vmem:[%s1989 + $0x122] sm:$0xff]
        %v2399 = vld [vmem:[%s1989 + $0x12a] sm:$0xff]
        %v2400 = vld [vmem:[%s1989 + $0x13a] sm:$0xff]
        %v2401 = vld [vmem:[%s1989 + $0x142] sm:$0xff]
        %v2402 = vld [vmem:[%s1989 + $0x152] sm:$0xff]
        %v2403 = vld [vmem:[%s1989 + $0x15a] sm:$0xff]
        %v2404 = vld [vmem:[%s1989 + $0x16a] sm:$0xff]
        %v2405 = vld [vmem:[%s1989 + $0x172] sm:$0xff]
        %v2406 = vpack.c.bf16 %v2375, %v2374
        %v2407 = vpack.c.bf16 %v2377, %v2376
        %v2408 = vpack.c.bf16 %v2379, %v2378
        %v2409 = vpack.c.bf16 %v2381, %v2380
        %v2410 = vpack.c.bf16 %v2383, %v2382
        %v2411 = vpack.c.bf16 %v2385, %v2384
        %v2412 = vpack.c.bf16 %v2387, %v2386
        %v2413 = vpack.c.bf16 %v2389, %v2388
        %v2414 = vpack.c.bf16 %v2391, %v2390
        %v2415 = vpack.c.bf16 %v2393, %v2392
        %v2416 = vpack.c.bf16 %v2395, %v2394
        %v2417 = vpack.c.bf16 %v2397, %v2396
        %v2418 = vpack.c.bf16 %v2399, %v2398
        %v2419 = vpack.c.bf16 %v2401, %v2400
        %v2420 = vpack.c.bf16 %v2403, %v2402
        %v2421 = vpack.c.bf16 %v2405, %v2404
        %v2438 = vunpack.c.l.b16 %v2406
        %v2439 = vunpack.c.h.b16 %v2406
        %v2440 = vunpack.c.l.b16 %v2407
        %v2441 = vunpack.c.h.b16 %v2407
        %v2442 = vunpack.c.l.b16 %v2408
        %v2443 = vunpack.c.h.b16 %v2408
        %v2444 = vunpack.c.l.b16 %v2409
        %v2445 = vunpack.c.h.b16 %v2409
        %v2446 = vunpack.c.l.b16 %v2410
        %v2447 = vunpack.c.h.b16 %v2410
        %v2448 = vunpack.c.l.b16 %v2411
        %v2449 = vunpack.c.h.b16 %v2411
        %v2450 = vunpack.c.l.b16 %v2412
        %v2451 = vunpack.c.h.b16 %v2412
        %v2452 = vunpack.c.l.b16 %v2413
        %v2453 = vunpack.c.h.b16 %v2413
        %v2454 = vunpack.c.l.b16 %v2414
        %v2455 = vunpack.c.h.b16 %v2414
        %v2456 = vunpack.c.l.b16 %v2415
        %v2457 = vunpack.c.h.b16 %v2415
        %v2458 = vunpack.c.l.b16 %v2416
        %v2459 = vunpack.c.h.b16 %v2416
        %v2460 = vunpack.c.l.b16 %v2417
        %v2461 = vunpack.c.h.b16 %v2417
        %v2462 = vunpack.c.l.b16 %v2418
        %v2463 = vunpack.c.h.b16 %v2418
        %v2464 = vunpack.c.l.b16 %v2419
        %v2465 = vunpack.c.h.b16 %v2419
        %v2466 = vunpack.c.l.b16 %v2420
        %v2467 = vunpack.c.h.b16 %v2420
        %v2468 = vunpack.c.l.b16 %v2421
        %v2469 = vunpack.c.h.b16 %v2421
        %v2470 = vpack.c.b16 %v2438, %v2438
        %v2471 = vpack.c.b16 %v2439, %v2439
        %v2472 = vpack.c.b16 %v2440, %v2440
        %v2473 = vpack.c.b16 %v2441, %v2441
        %v2474 = vpack.c.b16 %v2442, %v2442
        %v2475 = vpack.c.b16 %v2443, %v2443
        %v2476 = vpack.c.b16 %v2444, %v2444
        %v2477 = vpack.c.b16 %v2445, %v2445
        %v2478 = vpack.c.b16 %v2446, %v2446
        %v2479 = vpack.c.b16 %v2447, %v2447
        %v2480 = vpack.c.b16 %v2448, %v2448
        %v2481 = vpack.c.b16 %v2449, %v2449
        %v2482 = vpack.c.b16 %v2450, %v2450
        %v2483 = vpack.c.b16 %v2451, %v2451
        %v2484 = vpack.c.b16 %v2452, %v2452
        %v2485 = vpack.c.b16 %v2453, %v2453
        %v2486 = vpack.c.b16 %v2454, %v2454
        %v2487 = vpack.c.b16 %v2455, %v2455
        %v2488 = vpack.c.b16 %v2456, %v2456
        %v2489 = vpack.c.b16 %v2457, %v2457
        %v2490 = vpack.c.b16 %v2458, %v2458
        %v2491 = vpack.c.b16 %v2459, %v2459
        %v2492 = vpack.c.b16 %v2460, %v2460
        %v2493 = vpack.c.b16 %v2461, %v2461
        %v2494 = vpack.c.b16 %v2462, %v2462
        %v2495 = vpack.c.b16 %v2463, %v2463
        %v2496 = vpack.c.b16 %v2464, %v2464
        %v2497 = vpack.c.b16 %v2465, %v2465
        %v2498 = vpack.c.b16 %v2466, %v2466
        %v2499 = vpack.c.b16 %v2467, %v2467
        %v2500 = vpack.c.b16 %v2468, %v2468
        %v2501 = vpack.c.b16 %v2469, %v2469
        %2534 = vst [vmem:[#allocation3 + $0x20] sm:$0xf] %v2470
        %2535 = vst [vmem:[#allocation3 + $0x44] sm:$0xf] %v2471
        %2536 = vst [vmem:[#allocation3 + $0x68] sm:$0xf] %v2472
        %2537 = vst [vmem:[#allocation3 + $0x8c] sm:$0xf] %v2473
        %2538 = vst [vmem:[#allocation3 + $0xb0] sm:$0xf] %v2474
        %2539 = vst [vmem:[#allocation3 + $0xd4] sm:$0xf] %v2475
        %2540 = vst [vmem:[#allocation3 + $0xf8] sm:$0xf] %v2476
        %2541 = vst [vmem:[#allocation3 + $0x11c] sm:$0xf] %v2477
        %2542 = vst [vmem:[#allocation3 + $0x140] sm:$0xf] %v2478
        %2543 = vst [vmem:[#allocation3 + $0x164] sm:$0xf] %v2479
        %2544 = vst [vmem:[#allocation3 + $0x188] sm:$0xf] %v2480
        %2545 = vst [vmem:[#allocation3 + $0x1ac] sm:$0xf] %v2481
        %2546 = vst [vmem:[#allocation3 + $0x1d0] sm:$0xf] %v2482
        %2547 = vst [vmem:[#allocation3 + $0x1f4] sm:$0xf] %v2483
        %2548 = vst [vmem:[#allocation3 + $0x218] sm:$0xf] %v2484
        %2549 = vst [vmem:[#allocation3 + $0x23c] sm:$0xf] %v2485
        %2550 = vst [vmem:[#allocation3 + $0x260] sm:$0xf] %v2486
        %2551 = vst [vmem:[#allocation3 + $0x284] sm:$0xf] %v2487
        %2552 = vst [vmem:[#allocation3 + $0x2a8] sm:$0xf] %v2488
        %2553 = vst [vmem:[#allocation3 + $0x2cc] sm:$0xf] %v2489
        %2554 = vst [vmem:[#allocation3 + $0x2f0] sm:$0xf] %v2490
        %2555 = vst [vmem:[#allocation3 + $0x314] sm:$0xf] %v2491
        %2556 = vst [vmem:[#allocation3 + $0x338] sm:$0xf] %v2492
        %2557 = vst [vmem:[#allocation3 + $0x35c] sm:$0xf] %v2493
        %2558 = vst [vmem:[#allocation3 + $0x380] sm:$0xf] %v2494
        %2559 = vst [vmem:[#allocation3 + $0x3a4] sm:$0xf] %v2495
        %2560 = vst [vmem:[#allocation3 + $0x3c8] sm:$0xf] %v2496
        %2561 = vst [vmem:[#allocation3 + $0x3ec] sm:$0xf] %v2497
        %2562 = vst [vmem:[#allocation3 + $0x410] sm:$0xf] %v2498
        %2563 = vst [vmem:[#allocation3 + $0x434] sm:$0xf] %v2499
        %2564 = vst [vmem:[#allocation3 + $0x458] sm:$0xf] %v2500
        %2565 = vst [vmem:[#allocation3 + $0x47c] sm:$0xf] %v2501
        %v2566 = vld [vmem:[#allocation3] sm:$0xff]
        %v2567 = vld [vmem:[#allocation3 + $0x8] sm:$0xff]
        %v2568 = vld [vmem:[#allocation3 + $0x10] sm:$0xff]
        %v2569 = vld [vmem:[#allocation3 + $0x18] sm:$0xff]
        %v2570 = vld [vmem:[#allocation3 + $0x20] sm:$0xf]
        %v2571 = vld [vmem:[#allocation3 + $0x24] sm:$0xff]
        %v2572 = vld [vmem:[#allocation3 + $0x2c] sm:$0xff]
        %v2573 = vld [vmem:[#allocation3 + $0x34] sm:$0xff]
        %v2574 = vld [vmem:[#allocation3 + $0x3c] sm:$0xff]
        %v2575 = vld [vmem:[#allocation3 + $0x44] sm:$0xf]
        %v2576 = vld [vmem:[#allocation3 + $0x48] sm:$0xff]
        %v2577 = vld [vmem:[#allocation3 + $0x50] sm:$0xff]
        %v2578 = vld [vmem:[#allocation3 + $0x58] sm:$0xff]
        %v2579 = vld [vmem:[#allocation3 + $0x60] sm:$0xff]
        %v2580 = vld [vmem:[#allocation3 + $0x68] sm:$0xf]
        %v2581 = vld [vmem:[#allocation3 + $0x6c] sm:$0xff]
        %v2582 = vld [vmem:[#allocation3 + $0x74] sm:$0xff]
        %v2583 = vld [vmem:[#allocation3 + $0x7c] sm:$0xff]
        %v2584 = vld [vmem:[#allocation3 + $0x84] sm:$0xff]
        %v2585 = vld [vmem:[#allocation3 + $0x8c] sm:$0xf]
        %v2586 = vld [vmem:[#allocation3 + $0x90] sm:$0xff]
        %v2587 = vld [vmem:[#allocation3 + $0x98] sm:$0xff]
        %v2588 = vld [vmem:[#allocation3 + $0xa0] sm:$0xff]
        %v2589 = vld [vmem:[#allocation3 + $0xa8] sm:$0xff]
        %v2590 = vld [vmem:[#allocation3 + $0xb0] sm:$0xf]
        %v2591 = vld [vmem:[#allocation3 + $0xb4] sm:$0xff]
        %v2592 = vld [vmem:[#allocation3 + $0xbc] sm:$0xff]
        %v2593 = vld [vmem:[#allocation3 + $0xc4] sm:$0xff]
        %v2594 = vld [vmem:[#allocation3 + $0xcc] sm:$0xff]
        %v2595 = vld [vmem:[#allocation3 + $0xd4] sm:$0xf]
        %v2596 = vld [vmem:[#allocation3 + $0xd8] sm:$0xff]
        %v2597 = vld [vmem:[#allocation3 + $0xe0] sm:$0xff]
        %v2598 = vld [vmem:[#allocation3 + $0xe8] sm:$0xff]
        %v2599 = vld [vmem:[#allocation3 + $0xf0] sm:$0xff]
        %v2600 = vld [vmem:[#allocation3 + $0xf8] sm:$0xf]
        %v2601 = vld [vmem:[#allocation3 + $0xfc] sm:$0xff]
        %v2602 = vld [vmem:[#allocation3 + $0x104] sm:$0xff]
        %v2603 = vld [vmem:[#allocation3 + $0x10c] sm:$0xff]
        %v2604 = vld [vmem:[#allocation3 + $0x114] sm:$0xff]
        %v2605 = vld [vmem:[#allocation3 + $0x11c] sm:$0xf]
        %v2606 = vld [vmem:[#allocation3 + $0x120] sm:$0xff]
        %v2607 = vld [vmem:[#allocation3 + $0x128] sm:$0xff]
        %v2608 = vld [vmem:[#allocation3 + $0x130] sm:$0xff]
        %v2609 = vld [vmem:[#allocation3 + $0x138] sm:$0xff]
        %v2610 = vld [vmem:[#allocation3 + $0x140] sm:$0xf]
        %v2611 = vld [vmem:[#allocation3 + $0x144] sm:$0xff]
        %v2612 = vld [vmem:[#allocation3 + $0x14c] sm:$0xff]
        %v2613 = vld [vmem:[#allocation3 + $0x154] sm:$0xff]
        %v2614 = vld [vmem:[#allocation3 + $0x15c] sm:$0xff]
        %v2615 = vld [vmem:[#allocation3 + $0x164] sm:$0xf]
        %v2616 = vld [vmem:[#allocation3 + $0x168] sm:$0xff]
        %v2617 = vld [vmem:[#allocation3 + $0x170] sm:$0xff]
        %v2618 = vld [vmem:[#allocation3 + $0x178] sm:$0xff]
        %v2619 = vld [vmem:[#allocation3 + $0x180] sm:$0xff]
        %v2620 = vld [vmem:[#allocation3 + $0x188] sm:$0xf]
        %v2621 = vld [vmem:[#allocation3 + $0x18c] sm:$0xff]
        %v2622 = vld [vmem:[#allocation3 + $0x194] sm:$0xff]
        %v2623 = vld [vmem:[#allocation3 + $0x19c] sm:$0xff]
        %v2624 = vld [vmem:[#allocation3 + $0x1a4] sm:$0xff]
        %v2625 = vld [vmem:[#allocation3 + $0x1ac] sm:$0xf]
        %v2626 = vld [vmem:[#allocation3 + $0x1b0] sm:$0xff]
        %v2627 = vld [vmem:[#allocation3 + $0x1b8] sm:$0xff]
        %v2628 = vld [vmem:[#allocation3 + $0x1c0] sm:$0xff]
        %v2629 = vld [vmem:[#allocation3 + $0x1c8] sm:$0xff]
        %v2630 = vld [vmem:[#allocation3 + $0x1d0] sm:$0xf]
        %v2631 = vld [vmem:[#allocation3 + $0x1d4] sm:$0xff]
        %v2632 = vld [vmem:[#allocation3 + $0x1dc] sm:$0xff]
        %v2633 = vld [vmem:[#allocation3 + $0x1e4] sm:$0xff]
        %v2634 = vld [vmem:[#allocation3 + $0x1ec] sm:$0xff]
        %v2635 = vld [vmem:[#allocation3 + $0x1f4] sm:$0xf]
        %v2636 = vld [vmem:[#allocation3 + $0x1f8] sm:$0xff]
        %v2637 = vld [vmem:[#allocation3 + $0x200] sm:$0xff]
        %v2638 = vld [vmem:[#allocation3 + $0x208] sm:$0xff]
        %v2639 = vld [vmem:[#allocation3 + $0x210] sm:$0xff]
        %v2640 = vld [vmem:[#allocation3 + $0x218] sm:$0xf]
        %v2641 = vld [vmem:[#allocation3 + $0x21c] sm:$0xff]
        %v2642 = vld [vmem:[#allocation3 + $0x224] sm:$0xff]
        %v2643 = vld [vmem:[#allocation3 + $0x22c] sm:$0xff]
        %v2644 = vld [vmem:[#allocation3 + $0x234] sm:$0xff]
        %v2645 = vld [vmem:[#allocation3 + $0x23c] sm:$0xf]
        %v2646 = vld [vmem:[#allocation3 + $0x240] sm:$0xff]
        %v2647 = vld [vmem:[#allocation3 + $0x248] sm:$0xff]
        %v2648 = vld [vmem:[#allocation3 + $0x250] sm:$0xff]
        %v2649 = vld [vmem:[#allocation3 + $0x258] sm:$0xff]
        %v2650 = vld [vmem:[#allocation3 + $0x260] sm:$0xf]
        %v2651 = vld [vmem:[#allocation3 + $0x264] sm:$0xff]
        %v2652 = vld [vmem:[#allocation3 + $0x26c] sm:$0xff]
        %v2653 = vld [vmem:[#allocation3 + $0x274] sm:$0xff]
        %v2654 = vld [vmem:[#allocation3 + $0x27c] sm:$0xff]
        %v2655 = vld [vmem:[#allocation3 + $0x284] sm:$0xf]
        %v2656 = vld [vmem:[#allocation3 + $0x288] sm:$0xff]
        %v2657 = vld [vmem:[#allocation3 + $0x290] sm:$0xff]
        %v2658 = vld [vmem:[#allocation3 + $0x298] sm:$0xff]
        %v2659 = vld [vmem:[#allocation3 + $0x2a0] sm:$0xff]
        %v2660 = vld [vmem:[#allocation3 + $0x2a8] sm:$0xf]
        %v2661 = vld [vmem:[#allocation3 + $0x2ac] sm:$0xff]
        %v2662 = vld [vmem:[#allocation3 + $0x2b4] sm:$0xff]
        %v2663 = vld [vmem:[#allocation3 + $0x2bc] sm:$0xff]
        %v2664 = vld [vmem:[#allocation3 + $0x2c4] sm:$0xff]
        %v2665 = vld [vmem:[#allocation3 + $0x2cc] sm:$0xf]
        %v2666 = vld [vmem:[#allocation3 + $0x2d0] sm:$0xff]
        %v2667 = vld [vmem:[#allocation3 + $0x2d8] sm:$0xff]
        %v2668 = vld [vmem:[#allocation3 + $0x2e0] sm:$0xff]
        %v2669 = vld [vmem:[#allocation3 + $0x2e8] sm:$0xff]
        %v2670 = vld [vmem:[#allocation3 + $0x2f0] sm:$0xf]
        %v2671 = vld [vmem:[#allocation3 + $0x2f4] sm:$0xff]
        %v2672 = vld [vmem:[#allocation3 + $0x2fc] sm:$0xff]
        %v2673 = vld [vmem:[#allocation3 + $0x304] sm:$0xff]
        %v2674 = vld [vmem:[#allocation3 + $0x30c] sm:$0xff]
        %v2675 = vld [vmem:[#allocation3 + $0x314] sm:$0xf]
        %v2676 = vld [vmem:[#allocation3 + $0x318] sm:$0xff]
        %v2677 = vld [vmem:[#allocation3 + $0x320] sm:$0xff]
        %v2678 = vld [vmem:[#allocation3 + $0x328] sm:$0xff]
        %v2679 = vld [vmem:[#allocation3 + $0x330] sm:$0xff]
        %v2680 = vld [vmem:[#allocation3 + $0x338] sm:$0xf]
        %v2681 = vld [vmem:[#allocation3 + $0x33c] sm:$0xff]
        %v2682 = vld [vmem:[#allocation3 + $0x344] sm:$0xff]
        %v2683 = vld [vmem:[#allocation3 + $0x34c] sm:$0xff]
        %v2684 = vld [vmem:[#allocation3 + $0x354] sm:$0xff]
        %v2685 = vld [vmem:[#allocation3 + $0x35c] sm:$0xf]
        %v2686 = vld [vmem:[#allocation3 + $0x360] sm:$0xff]
        %v2687 = vld [vmem:[#allocation3 + $0x368] sm:$0xff]
        %v2688 = vld [vmem:[#allocation3 + $0x370] sm:$0xff]
        %v2689 = vld [vmem:[#allocation3 + $0x378] sm:$0xff]
        %v2690 = vld [vmem:[#allocation3 + $0x380] sm:$0xf]
        %v2691 = vld [vmem:[#allocation3 + $0x384] sm:$0xff]
        %v2692 = vld [vmem:[#allocation3 + $0x38c] sm:$0xff]
        %v2693 = vld [vmem:[#allocation3 + $0x394] sm:$0xff]
        %v2694 = vld [vmem:[#allocation3 + $0x39c] sm:$0xff]
        %v2695 = vld [vmem:[#allocation3 + $0x3a4] sm:$0xf]
        %v2696 = vld [vmem:[#allocation3 + $0x3a8] sm:$0xff]
        %v2697 = vld [vmem:[#allocation3 + $0x3b0] sm:$0xff]
        %v2698 = vld [vmem:[#allocation3 + $0x3b8] sm:$0xff]
        %v2699 = vld [vmem:[#allocation3 + $0x3c0] sm:$0xff]
        %v2700 = vld [vmem:[#allocation3 + $0x3c8] sm:$0xf]
        %v2701 = vld [vmem:[#allocation3 + $0x3cc] sm:$0xff]
        %v2702 = vld [vmem:[#allocation3 + $0x3d4] sm:$0xff]
        %v2703 = vld [vmem:[#allocation3 + $0x3dc] sm:$0xff]
        %v2704 = vld [vmem:[#allocation3 + $0x3e4] sm:$0xff]
        %v2705 = vld [vmem:[#allocation3 + $0x3ec] sm:$0xf]
        %v2706 = vld [vmem:[#allocation3 + $0x3f0] sm:$0xff]
        %v2707 = vld [vmem:[#allocation3 + $0x3f8] sm:$0xff]
        %v2708 = vld [vmem:[#allocation3 + $0x400] sm:$0xff]
        %v2709 = vld [vmem:[#allocation3 + $0x408] sm:$0xff]
        %v2710 = vld [vmem:[#allocation3 + $0x410] sm:$0xf]
        %v2711 = vld [vmem:[#allocation3 + $0x414] sm:$0xff]
        %v2712 = vld [vmem:[#allocation3 + $0x41c] sm:$0xff]
        %v2713 = vld [vmem:[#allocation3 + $0x424] sm:$0xff]
        %v2714 = vld [vmem:[#allocation3 + $0x42c] sm:$0xff]
        %v2715 = vld [vmem:[#allocation3 + $0x434] sm:$0xf]
        %v2716 = vld [vmem:[#allocation3 + $0x438] sm:$0xff]
        %v2717 = vld [vmem:[#allocation3 + $0x440] sm:$0xff]
        %v2718 = vld [vmem:[#allocation3 + $0x448] sm:$0xff]
        %v2719 = vld [vmem:[#allocation3 + $0x450] sm:$0xff]
        %v2720 = vld [vmem:[#allocation3 + $0x458] sm:$0xf]
        %v2721 = vld [vmem:[#allocation3 + $0x45c] sm:$0xff]
        %v2722 = vld [vmem:[#allocation3 + $0x464] sm:$0xff]
        %v2723 = vld [vmem:[#allocation3 + $0x46c] sm:$0xff]
        %v2724 = vld [vmem:[#allocation3 + $0x474] sm:$0xff]
        %v2725 = vld [vmem:[#allocation3 + $0x47c] sm:$0xf]
        %v2726 = vld [vmem:[#allocation12] sm:$0xf]
        %v2727 = vld [vmem:[#allocation12 + $0x4] sm:$0xf]
        %v2728 = vld [vmem:[#allocation12 + $0x8] sm:$0xf]
        %v2729 = vld [vmem:[#allocation12 + $0xc] sm:$0xf]
        %v2730 = vld [vmem:[#allocation12 + $0x10] sm:$0xf]
        %v2731 = vld [vmem:[#allocation12 + $0x14] sm:$0xf]
        %v2732 = vld [vmem:[#allocation12 + $0x18] sm:$0xf]
        %v2733 = vld [vmem:[#allocation12 + $0x1c] sm:$0xf]
        %v2734 = vld [vmem:[#allocation12 + $0x20] sm:$0xf]
        %v2735 = vld [vmem:[#allocation12 + $0x24] sm:$0xf]
        %v2736 = vld [vmem:[#allocation12 + $0x28] sm:$0xf]
        %v2737 = vld [vmem:[#allocation12 + $0x2c] sm:$0xf]
        %v2738 = vld [vmem:[#allocation12 + $0x30] sm:$0xf]
        %v2739 = vld [vmem:[#allocation12 + $0x34] sm:$0xf]
        %v2740 = vld [vmem:[#allocation12 + $0x38] sm:$0xf]
        %v2741 = vld [vmem:[#allocation12 + $0x3c] sm:$0xf]
        %v2742 = vld [vmem:[#allocation12 + $0x40] sm:$0xf]
        %v2743 = vld [vmem:[#allocation12 + $0x44] sm:$0xf]
        %v2744 = vld [vmem:[#allocation12 + $0x48] sm:$0xf]
        %v2745 = vld [vmem:[#allocation12 + $0x4c] sm:$0xf]
        %v2746 = vld [vmem:[#allocation12 + $0x50] sm:$0xf]
        %v2747 = vld [vmem:[#allocation12 + $0x54] sm:$0xf]
        %v2748 = vld [vmem:[#allocation12 + $0x58] sm:$0xf]
        %v2749 = vld [vmem:[#allocation12 + $0x5c] sm:$0xf]
        %v2750 = vld [vmem:[#allocation12 + $0x60] sm:$0xf]
        %v2751 = vld [vmem:[#allocation12 + $0x64] sm:$0xf]
        %v2752 = vld [vmem:[#allocation12 + $0x68] sm:$0xf]
        %v2753 = vld [vmem:[#allocation12 + $0x6c] sm:$0xf]
        %v2754 = vld [vmem:[#allocation12 + $0x70] sm:$0xf]
        %v2755 = vld [vmem:[#allocation12 + $0x74] sm:$0xf]
        %v2756 = vld [vmem:[#allocation12 + $0x78] sm:$0xf]
        %v2757 = vld [vmem:[#allocation12 + $0x7c] sm:$0xf]
        %v2758 = vld [vmem:[#allocation12 + $0x80] sm:$0xf]
        %v2759 = vld [vmem:[#allocation12 + $0x84] sm:$0xf]
        %v2760 = vld [vmem:[#allocation12 + $0x88] sm:$0xf]
        %v2761 = vld [vmem:[#allocation12 + $0x8c] sm:$0xf]
        %v2762 = vld [vmem:[#allocation12 + $0x90] sm:$0xf]
        %v2763 = vld [vmem:[#allocation12 + $0x94] sm:$0xf]
        %v2764 = vld [vmem:[#allocation12 + $0x98] sm:$0xf]
        %v2765 = vld [vmem:[#allocation12 + $0x9c] sm:$0xf]
        %v2766 = vld [vmem:[#allocation12 + $0xa0] sm:$0xf]
        %v2767 = vld [vmem:[#allocation12 + $0xa4] sm:$0xf]
        %v2768 = vld [vmem:[#allocation12 + $0xa8] sm:$0xf]
        %v2769 = vld [vmem:[#allocation12 + $0xac] sm:$0xf]
        %v2770 = vld [vmem:[#allocation12 + $0xb0] sm:$0xf]
        %v2771 = vld [vmem:[#allocation12 + $0xb4] sm:$0xf]
        %v2772 = vld [vmem:[#allocation12 + $0xb8] sm:$0xf]
        %v2773 = vld [vmem:[#allocation12 + $0xbc] sm:$0xf]
        %v2774 = vld [vmem:[#allocation12 + $0xc0] sm:$0xf]
        %v2775 = vld [vmem:[#allocation12 + $0xc4] sm:$0xf]
        %v2776 = vld [vmem:[#allocation12 + $0xc8] sm:$0xf]
        %v2777 = vld [vmem:[#allocation12 + $0xcc] sm:$0xf]
        %v2778 = vld [vmem:[#allocation12 + $0xd0] sm:$0xf]
        %v2779 = vld [vmem:[#allocation12 + $0xd4] sm:$0xf]
        %v2780 = vld [vmem:[#allocation12 + $0xd8] sm:$0xf]
        %v2781 = vld [vmem:[#allocation12 + $0xdc] sm:$0xf]
        %v2782 = vld [vmem:[#allocation12 + $0xe0] sm:$0xf]
        %v2783 = vld [vmem:[#allocation12 + $0xe4] sm:$0xf]
        %v2784 = vld [vmem:[#allocation12 + $0xe8] sm:$0xf]
        %v2785 = vld [vmem:[#allocation12 + $0xec] sm:$0xf]
        %v2786 = vld [vmem:[#allocation12 + $0xf0] sm:$0xf]
        %v2787 = vld [vmem:[#allocation12 + $0xf4] sm:$0xf]
        %v2788 = vld [vmem:[#allocation12 + $0xf8] sm:$0xf]
        %v2789 = vld [vmem:[#allocation12 + $0xfc] sm:$0xf]
        %v2790 = vld [vmem:[#allocation12 + $0x100] sm:$0xf]
        %v2791 = vld [vmem:[#allocation12 + $0x104] sm:$0xf]
        %v2792 = vld [vmem:[#allocation12 + $0x108] sm:$0xf]
        %v2793 = vld [vmem:[#allocation12 + $0x10c] sm:$0xf]
        %v2794 = vld [vmem:[#allocation12 + $0x110] sm:$0xf]
        %v2795 = vld [vmem:[#allocation12 + $0x114] sm:$0xf]
        %v2796 = vld [vmem:[#allocation12 + $0x118] sm:$0xf]
        %v2797 = vld [vmem:[#allocation12 + $0x11c] sm:$0xf]
        %v2798 = vld [vmem:[#allocation12 + $0x120] sm:$0xf]
        %v2799 = vld [vmem:[#allocation12 + $0x124] sm:$0xf]
        %v2800 = vld [vmem:[#allocation12 + $0x128] sm:$0xf]
        %v2801 = vld [vmem:[#allocation12 + $0x12c] sm:$0xf]
        %v2802 = vld [vmem:[#allocation12 + $0x130] sm:$0xf]
        %v2803 = vld [vmem:[#allocation12 + $0x134] sm:$0xf]
        %v2804 = vld [vmem:[#allocation12 + $0x138] sm:$0xf]
        %v2805 = vld [vmem:[#allocation12 + $0x13c] sm:$0xf]
        %v2806 = vld [vmem:[#allocation12 + $0x140] sm:$0xf]
        %v2807 = vld [vmem:[#allocation12 + $0x144] sm:$0xf]
        %v2808 = vld [vmem:[#allocation12 + $0x148] sm:$0xf]
        %v2809 = vld [vmem:[#allocation12 + $0x14c] sm:$0xf]
        %v2810 = vld [vmem:[#allocation12 + $0x150] sm:$0xf]
        %v2811 = vld [vmem:[#allocation12 + $0x154] sm:$0xf]
        %v2812 = vld [vmem:[#allocation12 + $0x158] sm:$0xf]
        %v2813 = vld [vmem:[#allocation12 + $0x15c] sm:$0xf]
        %v2814 = vld [vmem:[#allocation12 + $0x160] sm:$0xf]
        %v2815 = vld [vmem:[#allocation12 + $0x164] sm:$0xf]
        %v2816 = vld [vmem:[#allocation12 + $0x168] sm:$0xf]
        %v2817 = vld [vmem:[#allocation12 + $0x16c] sm:$0xf]
        %v2818 = vld [vmem:[#allocation12 + $0x170] sm:$0xf]
        %v2819 = vld [vmem:[#allocation12 + $0x174] sm:$0xf]
        %v2820 = vld [vmem:[#allocation12 + $0x178] sm:$0xf]
        %v2821 = vld [vmem:[#allocation12 + $0x17c] sm:$0xf]
        %v2822 = vld [vmem:[#allocation12 + $0x180] sm:$0xf]
        %v2823 = vld [vmem:[#allocation12 + $0x184] sm:$0xf]
        %v2824 = vld [vmem:[#allocation12 + $0x188] sm:$0xf]
        %v2825 = vld [vmem:[#allocation12 + $0x18c] sm:$0xf]
        %v2826 = vld [vmem:[#allocation12 + $0x190] sm:$0xf]
        %v2827 = vld [vmem:[#allocation12 + $0x194] sm:$0xf]
        %v2828 = vld [vmem:[#allocation12 + $0x198] sm:$0xf]
        %v2829 = vld [vmem:[#allocation12 + $0x19c] sm:$0xf]
        %v2830 = vld [vmem:[#allocation12 + $0x1a0] sm:$0xf]
        %v2831 = vld [vmem:[#allocation12 + $0x1a4] sm:$0xf]
        %v2832 = vld [vmem:[#allocation12 + $0x1a8] sm:$0xf]
        %v2833 = vld [vmem:[#allocation12 + $0x1ac] sm:$0xf]
        %v2834 = vld [vmem:[#allocation12 + $0x1b0] sm:$0xf]
        %v2835 = vld [vmem:[#allocation12 + $0x1b4] sm:$0xf]
        %v2836 = vld [vmem:[#allocation12 + $0x1b8] sm:$0xf]
        %v2837 = vld [vmem:[#allocation12 + $0x1bc] sm:$0xf]
        %v2838 = vld [vmem:[#allocation12 + $0x1c0] sm:$0xf]
        %v2839 = vld [vmem:[#allocation12 + $0x1c4] sm:$0xf]
        %v2840 = vld [vmem:[#allocation12 + $0x1c8] sm:$0xf]
        %v2841 = vld [vmem:[#allocation12 + $0x1cc] sm:$0xf]
        %v2842 = vld [vmem:[#allocation12 + $0x1d0] sm:$0xf]
        %v2843 = vld [vmem:[#allocation12 + $0x1d4] sm:$0xf]
        %v2844 = vld [vmem:[#allocation12 + $0x1d8] sm:$0xf]
        %v2845 = vld [vmem:[#allocation12 + $0x1dc] sm:$0xf]
        %v2846 = vld [vmem:[#allocation12 + $0x1e0] sm:$0xf]
        %v2847 = vld [vmem:[#allocation12 + $0x1e4] sm:$0xf]
        %v2848 = vld [vmem:[#allocation12 + $0x1e8] sm:$0xf]
        %v2849 = vld [vmem:[#allocation12 + $0x1ec] sm:$0xf]
        %v2850 = vld [vmem:[#allocation12 + $0x1f0] sm:$0xf]
        %v2851 = vld [vmem:[#allocation12 + $0x1f4] sm:$0xf]
        %v2852 = vld [vmem:[#allocation12 + $0x1f8] sm:$0xf]
        %v2853 = vld [vmem:[#allocation12 + $0x1fc] sm:$0xf]
        %v2854 = vld [vmem:[#allocation12 + $0x200] sm:$0xf]
        %v2855 = vld [vmem:[#allocation12 + $0x204] sm:$0xf]
        %v2856 = vld [vmem:[#allocation12 + $0x208] sm:$0xf]
        %v2857 = vld [vmem:[#allocation12 + $0x20c] sm:$0xf]
        %v2858 = vld [vmem:[#allocation12 + $0x210] sm:$0xf]
        %v2859 = vld [vmem:[#allocation12 + $0x214] sm:$0xf]
        %v2860 = vld [vmem:[#allocation12 + $0x218] sm:$0xf]
        %v2861 = vld [vmem:[#allocation12 + $0x21c] sm:$0xf]
        %v2862 = vld [vmem:[#allocation12 + $0x220] sm:$0xf]
        %v2863 = vld [vmem:[#allocation12 + $0x224] sm:$0xf]
        %v2864 = vld [vmem:[#allocation12 + $0x228] sm:$0xf]
        %v2865 = vld [vmem:[#allocation12 + $0x22c] sm:$0xf]
        %v2866 = vld [vmem:[#allocation12 + $0x230] sm:$0xf]
        %v2867 = vld [vmem:[#allocation12 + $0x234] sm:$0xf]
        %v2868 = vld [vmem:[#allocation12 + $0x238] sm:$0xf]
        %v2869 = vld [vmem:[#allocation12 + $0x23c] sm:$0xf]
        %v2870 = vld [vmem:[%s4] sm:$0x1]
        %v2872 = vlaneseq
        %v2873 = vshrl.u32 %v2872, 7
        %v2874 = vsub.s32 0, %v2873
        %v2875 = vrot.slane %v2870, %v2874
        %v3037 = vunpack.c.l.b16 %v2566
        %v3038 = vunpack.c.h.b16 %v2566
        %v3039 = vunpack.c.l.b16 %v2567
        %v3040 = vunpack.c.h.b16 %v2567
        %v3041 = vunpack.c.l.b16 %v2568
        %v3042 = vunpack.c.h.b16 %v2568
        %v3043 = vunpack.c.l.b16 %v2569
        %v3044 = vunpack.c.h.b16 %v2569
        %v3045 = vunpack.c.l.b16 %v2570
        %v3046 = vunpack.c.l.b16 %v2571
        %v3047 = vunpack.c.h.b16 %v2571
        %v3048 = vunpack.c.l.b16 %v2572
        %v3049 = vunpack.c.h.b16 %v2572
        %v3050 = vunpack.c.l.b16 %v2573
        %v3051 = vunpack.c.h.b16 %v2573
        %v3052 = vunpack.c.l.b16 %v2574
        %v3053 = vunpack.c.h.b16 %v2574
        %v3054 = vunpack.c.l.b16 %v2575
        %v3055 = vunpack.c.l.b16 %v2576
        %v3056 = vunpack.c.h.b16 %v2576
        %v3057 = vunpack.c.l.b16 %v2577
        %v3058 = vunpack.c.h.b16 %v2577
        %v3059 = vunpack.c.l.b16 %v2578
        %v3060 = vunpack.c.h.b16 %v2578
        %v3061 = vunpack.c.l.b16 %v2579
        %v3062 = vunpack.c.h.b16 %v2579
        %v3063 = vunpack.c.l.b16 %v2580
        %v3064 = vunpack.c.l.b16 %v2581
        %v3065 = vunpack.c.h.b16 %v2581
        %v3066 = vunpack.c.l.b16 %v2582
        %v3067 = vunpack.c.h.b16 %v2582
        %v3068 = vunpack.c.l.b16 %v2583
        %v3069 = vunpack.c.h.b16 %v2583
        %v3070 = vunpack.c.l.b16 %v2584
        %v3071 = vunpack.c.h.b16 %v2584
        %v3072 = vunpack.c.l.b16 %v2585
        %v3073 = vunpack.c.l.b16 %v2586
        %v3074 = vunpack.c.h.b16 %v2586
        %v3075 = vunpack.c.l.b16 %v2587
        %v3076 = vunpack.c.h.b16 %v2587
        %v3077 = vunpack.c.l.b16 %v2588
        %v3078 = vunpack.c.h.b16 %v2588
        %v3079 = vunpack.c.l.b16 %v2589
        %v3080 = vunpack.c.h.b16 %v2589
        %v3081 = vunpack.c.l.b16 %v2590
        %v3082 = vunpack.c.l.b16 %v2591
        %v3083 = vunpack.c.h.b16 %v2591
        %v3084 = vunpack.c.l.b16 %v2592
        %v3085 = vunpack.c.h.b16 %v2592
        %v3086 = vunpack.c.l.b16 %v2593
        %v3087 = vunpack.c.h.b16 %v2593
        %v3088 = vunpack.c.l.b16 %v2594
        %v3089 = vunpack.c.h.b16 %v2594
        %v3090 = vunpack.c.l.b16 %v2595
        %v3091 = vunpack.c.l.b16 %v2596
        %v3092 = vunpack.c.h.b16 %v2596
        %v3093 = vunpack.c.l.b16 %v2597
        %v3094 = vunpack.c.h.b16 %v2597
        %v3095 = vunpack.c.l.b16 %v2598
        %v3096 = vunpack.c.h.b16 %v2598
        %v3097 = vunpack.c.l.b16 %v2599
        %v3098 = vunpack.c.h.b16 %v2599
        %v3099 = vunpack.c.l.b16 %v2600
        %v3100 = vunpack.c.l.b16 %v2601
        %v3101 = vunpack.c.h.b16 %v2601
        %v3102 = vunpack.c.l.b16 %v2602
        %v3103 = vunpack.c.h.b16 %v2602
        %v3104 = vunpack.c.l.b16 %v2603
        %v3105 = vunpack.c.h.b16 %v2603
        %v3106 = vunpack.c.l.b16 %v2604
        %v3107 = vunpack.c.h.b16 %v2604
        %v3108 = vunpack.c.l.b16 %v2605
        %v3109 = vunpack.c.l.b16 %v2606
        %v3110 = vunpack.c.h.b16 %v2606
        %v3111 = vunpack.c.l.b16 %v2607
        %v3112 = vunpack.c.h.b16 %v2607
        %v3113 = vunpack.c.l.b16 %v2608
        %v3114 = vunpack.c.h.b16 %v2608
        %v3115 = vunpack.c.l.b16 %v2609
        %v3116 = vunpack.c.h.b16 %v2609
        %v3117 = vunpack.c.l.b16 %v2610
        %v3118 = vunpack.c.l.b16 %v2611
        %v3119 = vunpack.c.h.b16 %v2611
        %v3120 = vunpack.c.l.b16 %v2612
        %v3121 = vunpack.c.h.b16 %v2612
        %v3122 = vunpack.c.l.b16 %v2613
        %v3123 = vunpack.c.h.b16 %v2613
        %v3124 = vunpack.c.l.b16 %v2614
        %v3125 = vunpack.c.h.b16 %v2614
        %v3126 = vunpack.c.l.b16 %v2615
        %v3127 = vunpack.c.l.b16 %v2616
        %v3128 = vunpack.c.h.b16 %v2616
        %v3129 = vunpack.c.l.b16 %v2617
        %v3130 = vunpack.c.h.b16 %v2617
        %v3131 = vunpack.c.l.b16 %v2618
        %v3132 = vunpack.c.h.b16 %v2618
        %v3133 = vunpack.c.l.b16 %v2619
        %v3134 = vunpack.c.h.b16 %v2619
        %v3135 = vunpack.c.l.b16 %v2620
        %v3136 = vunpack.c.l.b16 %v2621
        %v3137 = vunpack.c.h.b16 %v2621
        %v3138 = vunpack.c.l.b16 %v2622
        %v3139 = vunpack.c.h.b16 %v2622
        %v3140 = vunpack.c.l.b16 %v2623
        %v3141 = vunpack.c.h.b16 %v2623
        %v3142 = vunpack.c.l.b16 %v2624
        %v3143 = vunpack.c.h.b16 %v2624
        %v3144 = vunpack.c.l.b16 %v2625
        %v3145 = vunpack.c.l.b16 %v2626
        %v3146 = vunpack.c.h.b16 %v2626
        %v3147 = vunpack.c.l.b16 %v2627
        %v3148 = vunpack.c.h.b16 %v2627
        %v3149 = vunpack.c.l.b16 %v2628
        %v3150 = vunpack.c.h.b16 %v2628
        %v3151 = vunpack.c.l.b16 %v2629
        %v3152 = vunpack.c.h.b16 %v2629
        %v3153 = vunpack.c.l.b16 %v2630
        %v3154 = vunpack.c.l.b16 %v2631
        %v3155 = vunpack.c.h.b16 %v2631
        %v3156 = vunpack.c.l.b16 %v2632
        %v3157 = vunpack.c.h.b16 %v2632
        %v3158 = vunpack.c.l.b16 %v2633
        %v3159 = vunpack.c.h.b16 %v2633
        %v3160 = vunpack.c.l.b16 %v2634
        %v3161 = vunpack.c.h.b16 %v2634
        %v3162 = vunpack.c.l.b16 %v2635
        %v3163 = vunpack.c.l.b16 %v2636
        %v3164 = vunpack.c.h.b16 %v2636
        %v3165 = vunpack.c.l.b16 %v2637
        %v3166 = vunpack.c.h.b16 %v2637
        %v3167 = vunpack.c.l.b16 %v2638
        %v3168 = vunpack.c.h.b16 %v2638
        %v3169 = vunpack.c.l.b16 %v2639
        %v3170 = vunpack.c.h.b16 %v2639
        %v3171 = vunpack.c.l.b16 %v2640
        %v3172 = vunpack.c.l.b16 %v2641
        %v3173 = vunpack.c.h.b16 %v2641
        %v3174 = vunpack.c.l.b16 %v2642
        %v3175 = vunpack.c.h.b16 %v2642
        %v3176 = vunpack.c.l.b16 %v2643
        %v3177 = vunpack.c.h.b16 %v2643
        %v3178 = vunpack.c.l.b16 %v2644
        %v3179 = vunpack.c.h.b16 %v2644
        %v3180 = vunpack.c.l.b16 %v2645
        %v3181 = vunpack.c.l.b16 %v2646
        %v3182 = vunpack.c.h.b16 %v2646
        %v3183 = vunpack.c.l.b16 %v2647
        %v3184 = vunpack.c.h.b16 %v2647
        %v3185 = vunpack.c.l.b16 %v2648
        %v3186 = vunpack.c.h.b16 %v2648
        %v3187 = vunpack.c.l.b16 %v2649
        %v3188 = vunpack.c.h.b16 %v2649
        %v3189 = vunpack.c.l.b16 %v2650
        %v3190 = vunpack.c.l.b16 %v2651
        %v3191 = vunpack.c.h.b16 %v2651
        %v3192 = vunpack.c.l.b16 %v2652
        %v3193 = vunpack.c.h.b16 %v2652
        %v3194 = vunpack.c.l.b16 %v2653
        %v3195 = vunpack.c.h.b16 %v2653
        %v3196 = vunpack.c.l.b16 %v2654
        %v3197 = vunpack.c.h.b16 %v2654
        %v3198 = vunpack.c.l.b16 %v2655
        %v3199 = vunpack.c.l.b16 %v2656
        %v3200 = vunpack.c.h.b16 %v2656
        %v3201 = vunpack.c.l.b16 %v2657
        %v3202 = vunpack.c.h.b16 %v2657
        %v3203 = vunpack.c.l.b16 %v2658
        %v3204 = vunpack.c.h.b16 %v2658
        %v3205 = vunpack.c.l.b16 %v2659
        %v3206 = vunpack.c.h.b16 %v2659
        %v3207 = vunpack.c.l.b16 %v2660
        %v3208 = vunpack.c.l.b16 %v2661
        %v3209 = vunpack.c.h.b16 %v2661
        %v3210 = vunpack.c.l.b16 %v2662
        %v3211 = vunpack.c.h.b16 %v2662
        %v3212 = vunpack.c.l.b16 %v2663
        %v3213 = vunpack.c.h.b16 %v2663
        %v3214 = vunpack.c.l.b16 %v2664
        %v3215 = vunpack.c.h.b16 %v2664
        %v3216 = vunpack.c.l.b16 %v2665
        %v3217 = vunpack.c.l.b16 %v2666
        %v3218 = vunpack.c.h.b16 %v2666
        %v3219 = vunpack.c.l.b16 %v2667
        %v3220 = vunpack.c.h.b16 %v2667
        %v3221 = vunpack.c.l.b16 %v2668
        %v3222 = vunpack.c.h.b16 %v2668
        %v3223 = vunpack.c.l.b16 %v2669
        %v3224 = vunpack.c.h.b16 %v2669
        %v3225 = vunpack.c.l.b16 %v2670
        %v3226 = vunpack.c.l.b16 %v2671
        %v3227 = vunpack.c.h.b16 %v2671
        %v3228 = vunpack.c.l.b16 %v2672
        %v3229 = vunpack.c.h.b16 %v2672
        %v3230 = vunpack.c.l.b16 %v2673
        %v3231 = vunpack.c.h.b16 %v2673
        %v3232 = vunpack.c.l.b16 %v2674
        %v3233 = vunpack.c.h.b16 %v2674
        %v3234 = vunpack.c.l.b16 %v2675
        %v3235 = vunpack.c.l.b16 %v2676
        %v3236 = vunpack.c.h.b16 %v2676
        %v3237 = vunpack.c.l.b16 %v2677
        %v3238 = vunpack.c.h.b16 %v2677
        %v3239 = vunpack.c.l.b16 %v2678
        %v3240 = vunpack.c.h.b16 %v2678
        %v3241 = vunpack.c.l.b16 %v2679
        %v3242 = vunpack.c.h.b16 %v2679
        %v3243 = vunpack.c.l.b16 %v2680
        %v3244 = vunpack.c.l.b16 %v2681
        %v3245 = vunpack.c.h.b16 %v2681
        %v3246 = vunpack.c.l.b16 %v2682
        %v3247 = vunpack.c.h.b16 %v2682
        %v3248 = vunpack.c.l.b16 %v2683
        %v3249 = vunpack.c.h.b16 %v2683
        %v3250 = vunpack.c.l.b16 %v2684
        %v3251 = vunpack.c.h.b16 %v2684
        %v3252 = vunpack.c.l.b16 %v2685
        %v3253 = vunpack.c.l.b16 %v2686
        %v3254 = vunpack.c.h.b16 %v2686
        %v3255 = vunpack.c.l.b16 %v2687
        %v3256 = vunpack.c.h.b16 %v2687
        %v3257 = vunpack.c.l.b16 %v2688
        %v3258 = vunpack.c.h.b16 %v2688
        %v3259 = vunpack.c.l.b16 %v2689
        %v3260 = vunpack.c.h.b16 %v2689
        %v3261 = vunpack.c.l.b16 %v2690
        %v3262 = vunpack.c.l.b16 %v2691
        %v3263 = vunpack.c.h.b16 %v2691
        %v3264 = vunpack.c.l.b16 %v2692
        %v3265 = vunpack.c.h.b16 %v2692
        %v3266 = vunpack.c.l.b16 %v2693
        %v3267 = vunpack.c.h.b16 %v2693
        %v3268 = vunpack.c.l.b16 %v2694
        %v3269 = vunpack.c.h.b16 %v2694
        %v3270 = vunpack.c.l.b16 %v2695
        %v3271 = vunpack.c.l.b16 %v2696
        %v3272 = vunpack.c.h.b16 %v2696
        %v3273 = vunpack.c.l.b16 %v2697
        %v3274 = vunpack.c.h.b16 %v2697
        %v3275 = vunpack.c.l.b16 %v2698
        %v3276 = vunpack.c.h.b16 %v2698
        %v3277 = vunpack.c.l.b16 %v2699
        %v3278 = vunpack.c.h.b16 %v2699
        %v3279 = vunpack.c.l.b16 %v2700
        %v3280 = vunpack.c.l.b16 %v2701
        %v3281 = vunpack.c.h.b16 %v2701
        %v3282 = vunpack.c.l.b16 %v2702
        %v3283 = vunpack.c.h.b16 %v2702
        %v3284 = vunpack.c.l.b16 %v2703
        %v3285 = vunpack.c.h.b16 %v2703
        %v3286 = vunpack.c.l.b16 %v2704
        %v3287 = vunpack.c.h.b16 %v2704
        %v3288 = vunpack.c.l.b16 %v2705
        %v3289 = vunpack.c.l.b16 %v2706
        %v3290 = vunpack.c.h.b16 %v2706
        %v3291 = vunpack.c.l.b16 %v2707
        %v3292 = vunpack.c.h.b16 %v2707
        %v3293 = vunpack.c.l.b16 %v2708
        %v3294 = vunpack.c.h.b16 %v2708
        %v3295 = vunpack.c.l.b16 %v2709
        %v3296 = vunpack.c.h.b16 %v2709
        %v3297 = vunpack.c.l.b16 %v2710
        %v3298 = vunpack.c.l.b16 %v2711
        %v3299 = vunpack.c.h.b16 %v2711
        %v3300 = vunpack.c.l.b16 %v2712
        %v3301 = vunpack.c.h.b16 %v2712
        %v3302 = vunpack.c.l.b16 %v2713
        %v3303 = vunpack.c.h.b16 %v2713
        %v3304 = vunpack.c.l.b16 %v2714
        %v3305 = vunpack.c.h.b16 %v2714
        %v3306 = vunpack.c.l.b16 %v2715
        %v3307 = vunpack.c.l.b16 %v2716
        %v3308 = vunpack.c.h.b16 %v2716
        %v3309 = vunpack.c.l.b16 %v2717
        %v3310 = vunpack.c.h.b16 %v2717
        %v3311 = vunpack.c.l.b16 %v2718
        %v3312 = vunpack.c.h.b16 %v2718
        %v3313 = vunpack.c.l.b16 %v2719
        %v3314 = vunpack.c.h.b16 %v2719
        %v3315 = vunpack.c.l.b16 %v2720
        %v3316 = vunpack.c.l.b16 %v2721
        %v3317 = vunpack.c.h.b16 %v2721
        %v3318 = vunpack.c.l.b16 %v2722
        %v3319 = vunpack.c.h.b16 %v2722
        %v3320 = vunpack.c.l.b16 %v2723
        %v3321 = vunpack.c.h.b16 %v2723
        %v3322 = vunpack.c.l.b16 %v2724
        %v3323 = vunpack.c.h.b16 %v2724
        %v3324 = vunpack.c.l.b16 %v2725
        %v3325 = vpack.c.b16 %v3046, %v3037
        %v3326 = vpack.c.b16 %v3047, %v3038
        %v3327 = vpack.c.b16 %v3048, %v3039
        %v3328 = vpack.c.b16 %v3049, %v3040
        %v3329 = vpack.c.b16 %v3050, %v3041
        %v3330 = vpack.c.b16 %v3051, %v3042
        %v3331 = vpack.c.b16 %v3052, %v3043
        %v3332 = vpack.c.b16 %v3053, %v3044
        %v3333 = vpack.c.b16 %v3054, %v3045
        %v3334 = vpack.c.b16 %v3064, %v3055
        %v3335 = vpack.c.b16 %v3065, %v3056
        %v3336 = vpack.c.b16 %v3066, %v3057
        %v3337 = vpack.c.b16 %v3067, %v3058
        %v3338 = vpack.c.b16 %v3068, %v3059
        %v3339 = vpack.c.b16 %v3069, %v3060
        %v3340 = vpack.c.b16 %v3070, %v3061
        %v3341 = vpack.c.b16 %v3071, %v3062
        %v3342 = vpack.c.b16 %v3072, %v3063
        %v3343 = vpack.c.b16 %v3082, %v3073
        %v3344 = vpack.c.b16 %v3083, %v3074
        %v3345 = vpack.c.b16 %v3084, %v3075
        %v3346 = vpack.c.b16 %v3085, %v3076
        %v3347 = vpack.c.b16 %v3086, %v3077
        %v3348 = vpack.c.b16 %v3087, %v3078
        %v3349 = vpack.c.b16 %v3088, %v3079
        %v3350 = vpack.c.b16 %v3089, %v3080
        %v3351 = vpack.c.b16 %v3090, %v3081
        %v3352 = vpack.c.b16 %v3100, %v3091
        %v3353 = vpack.c.b16 %v3101, %v3092
        %v3354 = vpack.c.b16 %v3102, %v3093
        %v3355 = vpack.c.b16 %v3103, %v3094
        %v3356 = vpack.c.b16 %v3104, %v3095
        %v3357 = vpack.c.b16 %v3105, %v3096
        %v3358 = vpack.c.b16 %v3106, %v3097
        %v3359 = vpack.c.b16 %v3107, %v3098
        %v3360 = vpack.c.b16 %v3108, %v3099
        %v3361 = vpack.c.b16 %v3118, %v3109
        %v3362 = vpack.c.b16 %v3119, %v3110
        %v3363 = vpack.c.b16 %v3120, %v3111
        %v3364 = vpack.c.b16 %v3121, %v3112
        %v3365 = vpack.c.b16 %v3122, %v3113
        %v3366 = vpack.c.b16 %v3123, %v3114
        %v3367 = vpack.c.b16 %v3124, %v3115
        %v3368 = vpack.c.b16 %v3125, %v3116
        %v3369 = vpack.c.b16 %v3126, %v3117
        %v3370 = vpack.c.b16 %v3136, %v3127
        %v3371 = vpack.c.b16 %v3137, %v3128
        %v3372 = vpack.c.b16 %v3138, %v3129
        %v3373 = vpack.c.b16 %v3139, %v3130
        %v3374 = vpack.c.b16 %v3140, %v3131
        %v3375 = vpack.c.b16 %v3141, %v3132
        %v3376 = vpack.c.b16 %v3142, %v3133
        %v3377 = vpack.c.b16 %v3143, %v3134
        %v3378 = vpack.c.b16 %v3144, %v3135
        %v3379 = vpack.c.b16 %v3154, %v3145
        %v3380 = vpack.c.b16 %v3155, %v3146
        %v3381 = vpack.c.b16 %v3156, %v3147
        %v3382 = vpack.c.b16 %v3157, %v3148
        %v3383 = vpack.c.b16 %v3158, %v3149
        %v3384 = vpack.c.b16 %v3159, %v3150
        %v3385 = vpack.c.b16 %v3160, %v3151
        %v3386 = vpack.c.b16 %v3161, %v3152
        %v3387 = vpack.c.b16 %v3162, %v3153
        %v3388 = vpack.c.b16 %v3172, %v3163
        %v3389 = vpack.c.b16 %v3173, %v3164
        %v3390 = vpack.c.b16 %v3174, %v3165
        %v3391 = vpack.c.b16 %v3175, %v3166
        %v3392 = vpack.c.b16 %v3176, %v3167
        %v3393 = vpack.c.b16 %v3177, %v3168
        %v3394 = vpack.c.b16 %v3178, %v3169
        %v3395 = vpack.c.b16 %v3179, %v3170
        %v3396 = vpack.c.b16 %v3180, %v3171
        %v3397 = vpack.c.b16 %v3190, %v3181
        %v3398 = vpack.c.b16 %v3191, %v3182
        %v3399 = vpack.c.b16 %v3192, %v3183
        %v3400 = vpack.c.b16 %v3193, %v3184
        %v3401 = vpack.c.b16 %v3194, %v3185
        %v3402 = vpack.c.b16 %v3195, %v3186
        %v3403 = vpack.c.b16 %v3196, %v3187
        %v3404 = vpack.c.b16 %v3197, %v3188
        %v3405 = vpack.c.b16 %v3198, %v3189
        %v3406 = vpack.c.b16 %v3208, %v3199
        %v3407 = vpack.c.b16 %v3209, %v3200
        %v3408 = vpack.c.b16 %v3210, %v3201
        %v3409 = vpack.c.b16 %v3211, %v3202
        %v3410 = vpack.c.b16 %v3212, %v3203
        %v3411 = vpack.c.b16 %v3213, %v3204
        %v3412 = vpack.c.b16 %v3214, %v3205
        %v3413 = vpack.c.b16 %v3215, %v3206
        %v3414 = vpack.c.b16 %v3216, %v3207
        %v3415 = vpack.c.b16 %v3226, %v3217
        %v3416 = vpack.c.b16 %v3227, %v3218
        %v3417 = vpack.c.b16 %v3228, %v3219
        %v3418 = vpack.c.b16 %v3229, %v3220
        %v3419 = vpack.c.b16 %v3230, %v3221
        %v3420 = vpack.c.b16 %v3231, %v3222
        %v3421 = vpack.c.b16 %v3232, %v3223
        %v3422 = vpack.c.b16 %v3233, %v3224
        %v3423 = vpack.c.b16 %v3234, %v3225
        %v3424 = vpack.c.b16 %v3244, %v3235
        %v3425 = vpack.c.b16 %v3245, %v3236
        %v3426 = vpack.c.b16 %v3246, %v3237
        %v3427 = vpack.c.b16 %v3247, %v3238
        %v3428 = vpack.c.b16 %v3248, %v3239
        %v3429 = vpack.c.b16 %v3249, %v3240
        %v3430 = vpack.c.b16 %v3250, %v3241
        %v3431 = vpack.c.b16 %v3251, %v3242
        %v3432 = vpack.c.b16 %v3252, %v3243
        %v3433 = vpack.c.b16 %v3262, %v3253
        %v3434 = vpack.c.b16 %v3263, %v3254
        %v3435 = vpack.c.b16 %v3264, %v3255
        %v3436 = vpack.c.b16 %v3265, %v3256
        %v3437 = vpack.c.b16 %v3266, %v3257
        %v3438 = vpack.c.b16 %v3267, %v3258
        %v3439 = vpack.c.b16 %v3268, %v3259
        %v3440 = vpack.c.b16 %v3269, %v3260
        %v3441 = vpack.c.b16 %v3270, %v3261
        %v3442 = vpack.c.b16 %v3280, %v3271
        %v3443 = vpack.c.b16 %v3281, %v3272
        %v3444 = vpack.c.b16 %v3282, %v3273
        %v3445 = vpack.c.b16 %v3283, %v3274
        %v3446 = vpack.c.b16 %v3284, %v3275
        %v3447 = vpack.c.b16 %v3285, %v3276
        %v3448 = vpack.c.b16 %v3286, %v3277
        %v3449 = vpack.c.b16 %v3287, %v3278
        %v3450 = vpack.c.b16 %v3288, %v3279
        %v3451 = vpack.c.b16 %v3298, %v3289
        %v3452 = vpack.c.b16 %v3299, %v3290
        %v3453 = vpack.c.b16 %v3300, %v3291
        %v3454 = vpack.c.b16 %v3301, %v3292
        %v3455 = vpack.c.b16 %v3302, %v3293
        %v3456 = vpack.c.b16 %v3303, %v3294
        %v3457 = vpack.c.b16 %v3304, %v3295
        %v3458 = vpack.c.b16 %v3305, %v3296
        %v3459 = vpack.c.b16 %v3306, %v3297
        %v3460 = vpack.c.b16 %v3316, %v3307
        %v3461 = vpack.c.b16 %v3317, %v3308
        %v3462 = vpack.c.b16 %v3318, %v3309
        %v3463 = vpack.c.b16 %v3319, %v3310
        %v3464 = vpack.c.b16 %v3320, %v3311
        %v3465 = vpack.c.b16 %v3321, %v3312
        %v3466 = vpack.c.b16 %v3322, %v3313
        %v3467 = vpack.c.b16 %v3323, %v3314
        %v3468 = vpack.c.b16 %v3324, %v3315
        %v3757 = vunpack.c.l.b16 %v2726
        %v3758 = vunpack.c.l.b16 %v2727
        %v3759 = vunpack.c.l.b16 %v2728
        %v3760 = vunpack.c.l.b16 %v2729
        %v3761 = vunpack.c.l.b16 %v2730
        %v3762 = vunpack.c.l.b16 %v2731
        %v3763 = vunpack.c.l.b16 %v2732
        %v3764 = vunpack.c.l.b16 %v2733
        %v3765 = vunpack.c.l.b16 %v2734
        %v3766 = vunpack.c.l.b16 %v2735
        %v3767 = vunpack.c.l.b16 %v2736
        %v3768 = vunpack.c.l.b16 %v2737
        %v3769 = vunpack.c.l.b16 %v2738
        %v3770 = vunpack.c.l.b16 %v2739
        %v3771 = vunpack.c.l.b16 %v2740
        %v3772 = vunpack.c.l.b16 %v2741
        %v3773 = vunpack.c.l.b16 %v2742
        %v3774 = vunpack.c.l.b16 %v2743
        %v3775 = vunpack.c.l.b16 %v2744
        %v3776 = vunpack.c.l.b16 %v2745
        %v3777 = vunpack.c.l.b16 %v2746
        %v3778 = vunpack.c.l.b16 %v2747
        %v3779 = vunpack.c.l.b16 %v2748
        %v3780 = vunpack.c.l.b16 %v2749
        %v3781 = vunpack.c.l.b16 %v2750
        %v3782 = vunpack.c.l.b16 %v2751
        %v3783 = vunpack.c.l.b16 %v2752
        %v3784 = vunpack.c.l.b16 %v2753
        %v3785 = vunpack.c.l.b16 %v2754
        %v3786 = vunpack.c.l.b16 %v2755
        %v3787 = vunpack.c.l.b16 %v2756
        %v3788 = vunpack.c.l.b16 %v2757
        %v3789 = vunpack.c.l.b16 %v2758
        %v3790 = vunpack.c.l.b16 %v2759
        %v3791 = vunpack.c.l.b16 %v2760
        %v3792 = vunpack.c.l.b16 %v2761
        %v3793 = vunpack.c.l.b16 %v2762
        %v3794 = vunpack.c.l.b16 %v2763
        %v3795 = vunpack.c.l.b16 %v2764
        %v3796 = vunpack.c.l.b16 %v2765
        %v3797 = vunpack.c.l.b16 %v2766
        %v3798 = vunpack.c.l.b16 %v2767
        %v3799 = vunpack.c.l.b16 %v2768
        %v3800 = vunpack.c.l.b16 %v2769
        %v3801 = vunpack.c.l.b16 %v2770
        %v3802 = vunpack.c.l.b16 %v2771
        %v3803 = vunpack.c.l.b16 %v2772
        %v3804 = vunpack.c.l.b16 %v2773
        %v3805 = vunpack.c.l.b16 %v2774
        %v3806 = vunpack.c.l.b16 %v2775
        %v3807 = vunpack.c.l.b16 %v2776
        %v3808 = vunpack.c.l.b16 %v2777
        %v3809 = vunpack.c.l.b16 %v2778
        %v3810 = vunpack.c.l.b16 %v2779
        %v3811 = vunpack.c.l.b16 %v2780
        %v3812 = vunpack.c.l.b16 %v2781
        %v3813 = vunpack.c.l.b16 %v2782
        %v3814 = vunpack.c.l.b16 %v2783
        %v3815 = vunpack.c.l.b16 %v2784
        %v3816 = vunpack.c.l.b16 %v2785
        %v3817 = vunpack.c.l.b16 %v2786
        %v3818 = vunpack.c.l.b16 %v2787
        %v3819 = vunpack.c.l.b16 %v2788
        %v3820 = vunpack.c.l.b16 %v2789
        %v3821 = vunpack.c.l.b16 %v2790
        %v3822 = vunpack.c.l.b16 %v2791
        %v3823 = vunpack.c.l.b16 %v2792
        %v3824 = vunpack.c.l.b16 %v2793
        %v3825 = vunpack.c.l.b16 %v2794
        %v3826 = vunpack.c.l.b16 %v2795
        %v3827 = vunpack.c.l.b16 %v2796
        %v3828 = vunpack.c.l.b16 %v2797
        %v3829 = vunpack.c.l.b16 %v2798
        %v3830 = vunpack.c.l.b16 %v2799
        %v3831 = vunpack.c.l.b16 %v2800
        %v3832 = vunpack.c.l.b16 %v2801
        %v3833 = vunpack.c.l.b16 %v2802
        %v3834 = vunpack.c.l.b16 %v2803
        %v3835 = vunpack.c.l.b16 %v2804
        %v3836 = vunpack.c.l.b16 %v2805
        %v3837 = vunpack.c.l.b16 %v2806
        %v3838 = vunpack.c.l.b16 %v2807
        %v3839 = vunpack.c.l.b16 %v2808
        %v3840 = vunpack.c.l.b16 %v2809
        %v3841 = vunpack.c.l.b16 %v2810
        %v3842 = vunpack.c.l.b16 %v2811
        %v3843 = vunpack.c.l.b16 %v2812
        %v3844 = vunpack.c.l.b16 %v2813
        %v3845 = vunpack.c.l.b16 %v2814
        %v3846 = vunpack.c.l.b16 %v2815
        %v3847 = vunpack.c.l.b16 %v2816
        %v3848 = vunpack.c.l.b16 %v2817
        %v3849 = vunpack.c.l.b16 %v2818
        %v3850 = vunpack.c.l.b16 %v2819
        %v3851 = vunpack.c.l.b16 %v2820
        %v3852 = vunpack.c.l.b16 %v2821
        %v3853 = vunpack.c.l.b16 %v2822
        %v3854 = vunpack.c.l.b16 %v2823
        %v3855 = vunpack.c.l.b16 %v2824
        %v3856 = vunpack.c.l.b16 %v2825
        %v3857 = vunpack.c.l.b16 %v2826
        %v3858 = vunpack.c.l.b16 %v2827
        %v3859 = vunpack.c.l.b16 %v2828
        %v3860 = vunpack.c.l.b16 %v2829
        %v3861 = vunpack.c.l.b16 %v2830
        %v3862 = vunpack.c.l.b16 %v2831
        %v3863 = vunpack.c.l.b16 %v2832
        %v3864 = vunpack.c.l.b16 %v2833
        %v3865 = vunpack.c.l.b16 %v2834
        %v3866 = vunpack.c.l.b16 %v2835
        %v3867 = vunpack.c.l.b16 %v2836
        %v3868 = vunpack.c.l.b16 %v2837
        %v3869 = vunpack.c.l.b16 %v2838
        %v3870 = vunpack.c.l.b16 %v2839
        %v3871 = vunpack.c.l.b16 %v2840
        %v3872 = vunpack.c.l.b16 %v2841
        %v3873 = vunpack.c.l.b16 %v2842
        %v3874 = vunpack.c.l.b16 %v2843
        %v3875 = vunpack.c.l.b16 %v2844
        %v3876 = vunpack.c.l.b16 %v2845
        %v3877 = vunpack.c.l.b16 %v2846
        %v3878 = vunpack.c.l.b16 %v2847
        %v3879 = vunpack.c.l.b16 %v2848
        %v3880 = vunpack.c.l.b16 %v2849
        %v3881 = vunpack.c.l.b16 %v2850
        %v3882 = vunpack.c.l.b16 %v2851
        %v3883 = vunpack.c.l.b16 %v2852
        %v3884 = vunpack.c.l.b16 %v2853
        %v3885 = vunpack.c.l.b16 %v2854
        %v3886 = vunpack.c.l.b16 %v2855
        %v3887 = vunpack.c.l.b16 %v2856
        %v3888 = vunpack.c.l.b16 %v2857
        %v3889 = vunpack.c.l.b16 %v2858
        %v3890 = vunpack.c.l.b16 %v2859
        %v3891 = vunpack.c.l.b16 %v2860
        %v3892 = vunpack.c.l.b16 %v2861
        %v3893 = vunpack.c.l.b16 %v2862
        %v3894 = vunpack.c.l.b16 %v2863
        %v3895 = vunpack.c.l.b16 %v2864
        %v3896 = vunpack.c.l.b16 %v2865
        %v3897 = vunpack.c.l.b16 %v2866
        %v3898 = vunpack.c.l.b16 %v2867
        %v3899 = vunpack.c.l.b16 %v2868
        %v3900 = vunpack.c.l.b16 %v2869
        %v3901 = vpack.c.b16 %v3758, %v3757
        %v3902 = vpack.c.b16 %v3760, %v3759
        %v3903 = vpack.c.b16 %v3762, %v3761
        %v3904 = vpack.c.b16 %v3764, %v3763
        %v3905 = vpack.c.b16 %v3766, %v3765
        %v3906 = vpack.c.b16 %v3768, %v3767
        %v3907 = vpack.c.b16 %v3770, %v3769
        %v3908 = vpack.c.b16 %v3772, %v3771
        %v3909 = vpack.c.b16 %v3774, %v3773
        %v3910 = vpack.c.b16 %v3776, %v3775
        %v3911 = vpack.c.b16 %v3778, %v3777
        %v3912 = vpack.c.b16 %v3780, %v3779
        %v3913 = vpack.c.b16 %v3782, %v3781
        %v3914 = vpack.c.b16 %v3784, %v3783
        %v3915 = vpack.c.b16 %v3786, %v3785
        %v3916 = vpack.c.b16 %v3788, %v3787
        %v3917 = vpack.c.b16 %v3790, %v3789
        %v3918 = vpack.c.b16 %v3792, %v3791
        %v3919 = vpack.c.b16 %v3794, %v3793
        %v3920 = vpack.c.b16 %v3796, %v3795
        %v3921 = vpack.c.b16 %v3798, %v3797
        %v3922 = vpack.c.b16 %v3800, %v3799
        %v3923 = vpack.c.b16 %v3802, %v3801
        %v3924 = vpack.c.b16 %v3804, %v3803
        %v3925 = vpack.c.b16 %v3806, %v3805
        %v3926 = vpack.c.b16 %v3808, %v3807
        %v3927 = vpack.c.b16 %v3810, %v3809
        %v3928 = vpack.c.b16 %v3812, %v3811
        %v3929 = vpack.c.b16 %v3814, %v3813
        %v3930 = vpack.c.b16 %v3816, %v3815
        %v3931 = vpack.c.b16 %v3818, %v3817
        %v3932 = vpack.c.b16 %v3820, %v3819
        %v3933 = vpack.c.b16 %v3822, %v3821
        %v3934 = vpack.c.b16 %v3824, %v3823
        %v3935 = vpack.c.b16 %v3826, %v3825
        %v3936 = vpack.c.b16 %v3828, %v3827
        %v3937 = vpack.c.b16 %v3830, %v3829
        %v3938 = vpack.c.b16 %v3832, %v3831
        %v3939 = vpack.c.b16 %v3834, %v3833
        %v3940 = vpack.c.b16 %v3836, %v3835
        %v3941 = vpack.c.b16 %v3838, %v3837
        %v3942 = vpack.c.b16 %v3840, %v3839
        %v3943 = vpack.c.b16 %v3842, %v3841
        %v3944 = vpack.c.b16 %v3844, %v3843
        %v3945 = vpack.c.b16 %v3846, %v3845
        %v3946 = vpack.c.b16 %v3848, %v3847
        %v3947 = vpack.c.b16 %v3850, %v3849
        %v3948 = vpack.c.b16 %v3852, %v3851
        %v3949 = vpack.c.b16 %v3854, %v3853
        %v3950 = vpack.c.b16 %v3856, %v3855
        %v3951 = vpack.c.b16 %v3858, %v3857
        %v3952 = vpack.c.b16 %v3860, %v3859
        %v3953 = vpack.c.b16 %v3862, %v3861
        %v3954 = vpack.c.b16 %v3864, %v3863
        %v3955 = vpack.c.b16 %v3866, %v3865
        %v3956 = vpack.c.b16 %v3868, %v3867
        %v3957 = vpack.c.b16 %v3870, %v3869
        %v3958 = vpack.c.b16 %v3872, %v3871
        %v3959 = vpack.c.b16 %v3874, %v3873
        %v3960 = vpack.c.b16 %v3876, %v3875
        %v3961 = vpack.c.b16 %v3878, %v3877
        %v3962 = vpack.c.b16 %v3880, %v3879
        %v3963 = vpack.c.b16 %v3882, %v3881
        %v3964 = vpack.c.b16 %v3884, %v3883
        %v3965 = vpack.c.b16 %v3886, %v3885
        %v3966 = vpack.c.b16 %v3888, %v3887
        %v3967 = vpack.c.b16 %v3890, %v3889
        %v3968 = vpack.c.b16 %v3892, %v3891
        %v3969 = vpack.c.b16 %v3894, %v3893
        %v3970 = vpack.c.b16 %v3896, %v3895
        %v3971 = vpack.c.b16 %v3898, %v3897
        %v3972 = vpack.c.b16 %v3900, %v3899
        %4045 = vmatprep.subr.bf16.mxu0 0
        %4046 = vmatpush1.bf16.msra.mxu0 %v3908
        %4047 = vmatprep.subr.bf16.mxu0 0
        %4048 = vmatpush1.bf16.msra.mxu0 %v3907
        %4049 = vmatprep.subr.bf16.mxu0 0
        %4050 = vmatpush1.bf16.msra.mxu0 %v3906
        %4051 = vmatprep.subr.bf16.mxu0 0
        %4052 = vmatpush1.bf16.msra.mxu0 %v3905
        %4053 = vmatprep.subr.bf16.mxu0 0
        %4054 = vmatpush1.bf16.msra.mxu0 %v3904
        %4055 = vmatprep.subr.bf16.mxu0 0
        %4056 = vmatpush1.bf16.msra.mxu0 %v3903
        %4057 = vmatprep.subr.bf16.mxu0 0
        %4058 = vmatpush1.bf16.msra.mxu0 %v3902
        %4059 = vmatprep.subr.bf16.mxu0 0
        %4060 = vmatpush1.bf16.msra.mxu0 %v3901
        %4061 = vmatprep.subr.bf16.mxu0 0
        %4062 = vmatpush2.bf16.msra.mxu0 %v3916
        %4063 = vmatprep.subr.bf16.mxu0 0
        %4064 = vmatpush2.bf16.msra.mxu0 %v3915
        %4065 = vmatprep.subr.bf16.mxu0 0
        %4066 = vmatpush2.bf16.msra.mxu0 %v3914
        %4067 = vmatprep.subr.bf16.mxu0 0
        %4068 = vmatpush2.bf16.msra.mxu0 %v3913
        %4069 = vmatprep.subr.bf16.mxu0 0
        %4070 = vmatpush2.bf16.msra.mxu0 %v3912
        %4071 = vmatprep.subr.bf16.mxu0 0
        %4072 = vmatpush2.bf16.msra.mxu0 %v3911
        %4073 = vmatprep.subr.bf16.mxu0 0
        %4074 = vmatpush2.bf16.msra.mxu0 %v3910
        %4075 = vmatprep.subr.bf16.mxu0 0
        %4076 = vmatpush2.bf16.msra.mxu0 %v3909
        %4077 = vmatprep.mubr.bf16.mxu0 %v3326
        %4078 = vmatmul.mubr.bf16.gmra.mxu0 %v3325
        %v4079 = vpop.f32.mrf.mxu0
        %v4080 = vadd.f32 %v2875, %v4079
        %v4081 = vpop.f32.mrf.mxu0
        %v4082 = vpop.f32.mrf.mxu0
        %v4083 = vadd.f32 %v2875, %v4082
        %v4084 = vpop.f32.mrf.mxu0
        %4085 = vmatprep.mubr.bf16.mxu0 %v3335
        %4086 = vmatmul.mubr.bf16.gmra.mxu0 %v3334
        %v4087 = vpop.f32.mrf.mxu0
        %v4088 = vadd.f32 %v2875, %v4087
        %v4089 = vpop.f32.mrf.mxu0
        %v4090 = vpop.f32.mrf.mxu0
        %v4091 = vadd.f32 %v2875, %v4090
        %v4092 = vpop.f32.mrf.mxu0
        %4093 = vmatprep.mubr.bf16.mxu0 %v3344
        %4094 = vmatmul.mubr.bf16.gmra.mxu0 %v3343
        %v4095 = vpop.f32.mrf.mxu0
        %v4096 = vadd.f32 %v2875, %v4095
        %v4097 = vpop.f32.mrf.mxu0
        %v4098 = vpop.f32.mrf.mxu0
        %v4099 = vadd.f32 %v2875, %v4098
        %v4100 = vpop.f32.mrf.mxu0
        %4101 = vmatprep.mubr.bf16.mxu0 %v3353
        %4102 = vmatmul.mubr.bf16.gmra.mxu0 %v3352
        %v4103 = vpop.f32.mrf.mxu0
        %v4104 = vadd.f32 %v2875, %v4103
        %v4105 = vpop.f32.mrf.mxu0
        %v4106 = vpop.f32.mrf.mxu0
        %v4107 = vadd.f32 %v2875, %v4106
        %v4108 = vpop.f32.mrf.mxu0
        %4109 = vmatprep.mubr.bf16.mxu0 %v3362
        %4110 = vmatmul.mubr.bf16.gmra.mxu0 %v3361
        %v4111 = vpop.f32.mrf.mxu0
        %v4112 = vadd.f32 %v2875, %v4111
        %v4113 = vpop.f32.mrf.mxu0
        %v4114 = vpop.f32.mrf.mxu0
        %v4115 = vadd.f32 %v2875, %v4114
        %v4116 = vpop.f32.mrf.mxu0
        %4117 = vmatprep.mubr.bf16.mxu0 %v3371
        %4118 = vmatmul.mubr.bf16.gmra.mxu0 %v3370
        %v4119 = vpop.f32.mrf.mxu0
        %v4120 = vadd.f32 %v2875, %v4119
        %v4121 = vpop.f32.mrf.mxu0
        %v4122 = vpop.f32.mrf.mxu0
        %v4123 = vadd.f32 %v2875, %v4122
        %v4124 = vpop.f32.mrf.mxu0
        %4125 = vmatprep.mubr.bf16.mxu0 %v3380
        %4126 = vmatmul.mubr.bf16.gmra.mxu0 %v3379
        %v4127 = vpop.f32.mrf.mxu0
        %v4128 = vadd.f32 %v2875, %v4127
        %v4129 = vpop.f32.mrf.mxu0
        %v4130 = vpop.f32.mrf.mxu0
        %v4131 = vadd.f32 %v2875, %v4130
        %v4132 = vpop.f32.mrf.mxu0
        %4133 = vmatprep.mubr.bf16.mxu0 %v3389
        %4134 = vmatmul.mubr.bf16.gmra.mxu0 %v3388
        %v4135 = vpop.f32.mrf.mxu0
        %v4136 = vadd.f32 %v2875, %v4135
        %v4137 = vpop.f32.mrf.mxu0
        %v4138 = vpop.f32.mrf.mxu0
        %v4139 = vadd.f32 %v2875, %v4138
        %v4140 = vpop.f32.mrf.mxu0
        %4141 = vmatprep.mubr.bf16.mxu0 %v3398
        %4142 = vmatmul.mubr.bf16.gmra.mxu0 %v3397
        %v4143 = vpop.f32.mrf.mxu0
        %v4144 = vadd.f32 %v2875, %v4143
        %v4145 = vpop.f32.mrf.mxu0
        %v4146 = vpop.f32.mrf.mxu0
        %v4147 = vadd.f32 %v2875, %v4146
        %v4148 = vpop.f32.mrf.mxu0
        %4149 = vmatprep.mubr.bf16.mxu0 %v3407
        %4150 = vmatmul.mubr.bf16.gmra.mxu0 %v3406
        %v4151 = vpop.f32.mrf.mxu0
        %v4152 = vadd.f32 %v2875, %v4151
        %v4153 = vpop.f32.mrf.mxu0
        %v4154 = vpop.f32.mrf.mxu0
        %v4155 = vadd.f32 %v2875, %v4154
        %v4156 = vpop.f32.mrf.mxu0
        %4157 = vmatprep.mubr.bf16.mxu0 %v3416
        %4158 = vmatmul.mubr.bf16.gmra.mxu0 %v3415
        %v4159 = vpop.f32.mrf.mxu0
        %v4160 = vadd.f32 %v2875, %v4159
        %v4161 = vpop.f32.mrf.mxu0
        %v4162 = vpop.f32.mrf.mxu0
        %v4163 = vadd.f32 %v2875, %v4162
        %v4164 = vpop.f32.mrf.mxu0
        %4165 = vmatprep.mubr.bf16.mxu0 %v3425
        %4166 = vmatmul.mubr.bf16.gmra.mxu0 %v3424
        %v4167 = vpop.f32.mrf.mxu0
        %v4168 = vadd.f32 %v2875, %v4167
        %v4169 = vpop.f32.mrf.mxu0
        %v4170 = vpop.f32.mrf.mxu0
        %v4171 = vadd.f32 %v2875, %v4170
        %v4172 = vpop.f32.mrf.mxu0
        %4173 = vmatprep.mubr.bf16.mxu0 %v3434
        %4174 = vmatmul.mubr.bf16.gmra.mxu0 %v3433
        %v4175 = vpop.f32.mrf.mxu0
        %v4176 = vadd.f32 %v2875, %v4175
        %v4177 = vpop.f32.mrf.mxu0
        %v4178 = vpop.f32.mrf.mxu0
        %v4179 = vadd.f32 %v2875, %v4178
        %v4180 = vpop.f32.mrf.mxu0
        %4181 = vmatprep.mubr.bf16.mxu0 %v3443
        %4182 = vmatmul.mubr.bf16.gmra.mxu0 %v3442
        %v4183 = vpop.f32.mrf.mxu0
        %v4184 = vadd.f32 %v2875, %v4183
        %v4185 = vpop.f32.mrf.mxu0
        %v4186 = vpop.f32.mrf.mxu0
        %v4187 = vadd.f32 %v2875, %v4186
        %v4188 = vpop.f32.mrf.mxu0
        %4189 = vmatprep.mubr.bf16.mxu0 %v3452
        %4190 = vmatmul.mubr.bf16.gmra.mxu0 %v3451
        %v4191 = vpop.f32.mrf.mxu0
        %v4192 = vadd.f32 %v2875, %v4191
        %v4193 = vpop.f32.mrf.mxu0
        %v4194 = vpop.f32.mrf.mxu0
        %v4195 = vadd.f32 %v2875, %v4194
        %v4196 = vpop.f32.mrf.mxu0
        %4197 = vmatprep.mubr.bf16.mxu0 %v3461
        %4198 = vmatmul.mubr.bf16.gmra.mxu0 %v3460
        %v4199 = vpop.f32.mrf.mxu0
        %v4200 = vadd.f32 %v2875, %v4199
        %v4201 = vpop.f32.mrf.mxu0
        %v4202 = vpop.f32.mrf.mxu0
        %v4203 = vadd.f32 %v2875, %v4202
        %v4204 = vpop.f32.mrf.mxu0
        %4205 = vdwg.mxu0
        %4206 = vmatprep.subr.bf16.mxu0 0
        %4207 = vmatpush1.bf16.msra.mxu0 %v3924
        %4208 = vmatprep.subr.bf16.mxu0 0
        %4209 = vmatpush1.bf16.msra.mxu0 %v3923
        %4210 = vmatprep.subr.bf16.mxu0 0
        %4211 = vmatpush1.bf16.msra.mxu0 %v3922
        %4212 = vmatprep.subr.bf16.mxu0 0
        %4213 = vmatpush1.bf16.msra.mxu0 %v3921
        %4214 = vmatprep.subr.bf16.mxu0 0
        %4215 = vmatpush1.bf16.msra.mxu0 %v3920
        %4216 = vmatprep.subr.bf16.mxu0 0
        %4217 = vmatpush1.bf16.msra.mxu0 %v3919
        %4218 = vmatprep.subr.bf16.mxu0 0
        %4219 = vmatpush1.bf16.msra.mxu0 %v3918
        %4220 = vmatprep.subr.bf16.mxu0 0
        %4221 = vmatpush1.bf16.msra.mxu0 %v3917
        %4222 = vmatprep.subr.bf16.mxu0 0
        %4223 = vmatpush2.bf16.msra.mxu0 %v3932
        %4224 = vmatprep.subr.bf16.mxu0 0
        %4225 = vmatpush2.bf16.msra.mxu0 %v3931
        %4226 = vmatprep.subr.bf16.mxu0 0
        %4227 = vmatpush2.bf16.msra.mxu0 %v3930
        %4228 = vmatprep.subr.bf16.mxu0 0
        %4229 = vmatpush2.bf16.msra.mxu0 %v3929
        %4230 = vmatprep.subr.bf16.mxu0 0
        %4231 = vmatpush2.bf16.msra.mxu0 %v3928
        %4232 = vmatprep.subr.bf16.mxu0 0
        %4233 = vmatpush2.bf16.msra.mxu0 %v3927
        %4234 = vmatprep.subr.bf16.mxu0 0
        %4235 = vmatpush2.bf16.msra.mxu0 %v3926
        %4236 = vmatprep.subr.bf16.mxu0 0
        %4237 = vmatpush2.bf16.msra.mxu0 %v3925
        %4238 = vmatprep.mubr.bf16.mxu0 %v3328
        %4239 = vmatmul.mubr.bf16.gmra.mxu0 %v3327
        %v4240 = vpop.f32.mrf.mxu0
        %v4241 = vadd.f32 %v4080, %v4240
        %v4242 = vpop.f32.mrf.mxu0
        %v4243 = vpop.f32.mrf.mxu0
        %v4244 = vadd.f32 %v4083, %v4243
        %v4245 = vpop.f32.mrf.mxu0
        %4246 = vmatprep.mubr.bf16.mxu0 %v3337
        %4247 = vmatmul.mubr.bf16.gmra.mxu0 %v3336
        %v4248 = vpop.f32.mrf.mxu0
        %v4249 = vadd.f32 %v4088, %v4248
        %v4250 = vpop.f32.mrf.mxu0
        %v4251 = vpop.f32.mrf.mxu0
        %v4252 = vadd.f32 %v4091, %v4251
        %v4253 = vpop.f32.mrf.mxu0
        %4254 = vmatprep.mubr.bf16.mxu0 %v3346
        %4255 = vmatmul.mubr.bf16.gmra.mxu0 %v3345
        %v4256 = vpop.f32.mrf.mxu0
        %v4257 = vadd.f32 %v4096, %v4256
        %v4258 = vpop.f32.mrf.mxu0
        %v4259 = vpop.f32.mrf.mxu0
        %v4260 = vadd.f32 %v4099, %v4259
        %v4261 = vpop.f32.mrf.mxu0
        %4262 = vmatprep.mubr.bf16.mxu0 %v3355
        %4263 = vmatmul.mubr.bf16.gmra.mxu0 %v3354
        %v4264 = vpop.f32.mrf.mxu0
        %v4265 = vadd.f32 %v4104, %v4264
        %v4266 = vpop.f32.mrf.mxu0
        %v4267 = vpop.f32.mrf.mxu0
        %v4268 = vadd.f32 %v4107, %v4267
        %v4269 = vpop.f32.mrf.mxu0
        %4270 = vmatprep.mubr.bf16.mxu0 %v3364
        %4271 = vmatmul.mubr.bf16.gmra.mxu0 %v3363
        %v4272 = vpop.f32.mrf.mxu0
        %v4273 = vadd.f32 %v4112, %v4272
        %v4274 = vpop.f32.mrf.mxu0
        %v4275 = vpop.f32.mrf.mxu0
        %v4276 = vadd.f32 %v4115, %v4275
        %v4277 = vpop.f32.mrf.mxu0
        %4278 = vmatprep.mubr.bf16.mxu0 %v3373
        %4279 = vmatmul.mubr.bf16.gmra.mxu0 %v3372
        %v4280 = vpop.f32.mrf.mxu0
        %v4281 = vadd.f32 %v4120, %v4280
        %v4282 = vpop.f32.mrf.mxu0
        %v4283 = vpop.f32.mrf.mxu0
        %v4284 = vadd.f32 %v4123, %v4283
        %v4285 = vpop.f32.mrf.mxu0
        %4286 = vmatprep.mubr.bf16.mxu0 %v3382
        %4287 = vmatmul.mubr.bf16.gmra.mxu0 %v3381
        %v4288 = vpop.f32.mrf.mxu0
        %v4289 = vadd.f32 %v4128, %v4288
        %v4290 = vpop.f32.mrf.mxu0
        %v4291 = vpop.f32.mrf.mxu0
        %v4292 = vadd.f32 %v4131, %v4291
        %v4293 = vpop.f32.mrf.mxu0
        %4294 = vmatprep.mubr.bf16.mxu0 %v3391
        %4295 = vmatmul.mubr.bf16.gmra.mxu0 %v3390
        %v4296 = vpop.f32.mrf.mxu0
        %v4297 = vadd.f32 %v4136, %v4296
        %v4298 = vpop.f32.mrf.mxu0
        %v4299 = vpop.f32.mrf.mxu0
        %v4300 = vadd.f32 %v4139, %v4299
        %v4301 = vpop.f32.mrf.mxu0
        %4302 = vmatprep.mubr.bf16.mxu0 %v3400
        %4303 = vmatmul.mubr.bf16.gmra.mxu0 %v3399
        %v4304 = vpop.f32.mrf.mxu0
        %v4305 = vadd.f32 %v4144, %v4304
        %v4306 = vpop.f32.mrf.mxu0
        %v4307 = vpop.f32.mrf.mxu0
        %v4308 = vadd.f32 %v4147, %v4307
        %v4309 = vpop.f32.mrf.mxu0
        %4310 = vmatprep.mubr.bf16.mxu0 %v3409
        %4311 = vmatmul.mubr.bf16.gmra.mxu0 %v3408
        %v4312 = vpop.f32.mrf.mxu0
        %v4313 = vadd.f32 %v4152, %v4312
        %v4314 = vpop.f32.mrf.mxu0
        %v4315 = vpop.f32.mrf.mxu0
        %v4316 = vadd.f32 %v4155, %v4315
        %v4317 = vpop.f32.mrf.mxu0
        %4318 = vmatprep.mubr.bf16.mxu0 %v3418
        %4319 = vmatmul.mubr.bf16.gmra.mxu0 %v3417
        %v4320 = vpop.f32.mrf.mxu0
        %v4321 = vadd.f32 %v4160, %v4320
        %v4322 = vpop.f32.mrf.mxu0
        %v4323 = vpop.f32.mrf.mxu0
        %v4324 = vadd.f32 %v4163, %v4323
        %v4325 = vpop.f32.mrf.mxu0
        %4326 = vmatprep.mubr.bf16.mxu0 %v3427
        %4327 = vmatmul.mubr.bf16.gmra.mxu0 %v3426
        %v4328 = vpop.f32.mrf.mxu0
        %v4329 = vadd.f32 %v4168, %v4328
        %v4330 = vpop.f32.mrf.mxu0
        %v4331 = vpop.f32.mrf.mxu0
        %v4332 = vadd.f32 %v4171, %v4331
        %v4333 = vpop.f32.mrf.mxu0
        %4334 = vmatprep.mubr.bf16.mxu0 %v3436
        %4335 = vmatmul.mubr.bf16.gmra.mxu0 %v3435
        %v4336 = vpop.f32.mrf.mxu0
        %v4337 = vadd.f32 %v4176, %v4336
        %v4338 = vpop.f32.mrf.mxu0
        %v4339 = vpop.f32.mrf.mxu0
        %v4340 = vadd.f32 %v4179, %v4339
        %v4341 = vpop.f32.mrf.mxu0
        %4342 = vmatprep.mubr.bf16.mxu0 %v3445
        %4343 = vmatmul.mubr.bf16.gmra.mxu0 %v3444
        %v4344 = vpop.f32.mrf.mxu0
        %v4345 = vadd.f32 %v4184, %v4344
        %v4346 = vpop.f32.mrf.mxu0
        %v4347 = vpop.f32.mrf.mxu0
        %v4348 = vadd.f32 %v4187, %v4347
        %v4349 = vpop.f32.mrf.mxu0
        %4350 = vmatprep.mubr.bf16.mxu0 %v3454
        %4351 = vmatmul.mubr.bf16.gmra.mxu0 %v3453
        %v4352 = vpop.f32.mrf.mxu0
        %v4353 = vadd.f32 %v4192, %v4352
        %v4354 = vpop.f32.mrf.mxu0
        %v4355 = vpop.f32.mrf.mxu0
        %v4356 = vadd.f32 %v4195, %v4355
        %v4357 = vpop.f32.mrf.mxu0
        %4358 = vmatprep.mubr.bf16.mxu0 %v3463
        %4359 = vmatmul.mubr.bf16.gmra.mxu0 %v3462
        %v4360 = vpop.f32.mrf.mxu0
        %v4361 = vadd.f32 %v4200, %v4360
        %v4362 = vpop.f32.mrf.mxu0
        %v4363 = vpop.f32.mrf.mxu0
        %v4364 = vadd.f32 %v4203, %v4363
        %v4365 = vpop.f32.mrf.mxu0
        %4366 = vdwg.mxu0
        %4367 = vmatprep.subr.bf16.mxu0 0
        %4368 = vmatpush1.bf16.msra.mxu0 %v3940
        %4369 = vmatprep.subr.bf16.mxu0 0
        %4370 = vmatpush1.bf16.msra.mxu0 %v3939
        %4371 = vmatprep.subr.bf16.mxu0 0
        %4372 = vmatpush1.bf16.msra.mxu0 %v3938
        %4373 = vmatprep.subr.bf16.mxu0 0
        %4374 = vmatpush1.bf16.msra.mxu0 %v3937
        %4375 = vmatprep.subr.bf16.mxu0 0
        %4376 = vmatpush1.bf16.msra.mxu0 %v3936
        %4377 = vmatprep.subr.bf16.mxu0 0
        %4378 = vmatpush1.bf16.msra.mxu0 %v3935
        %4379 = vmatprep.subr.bf16.mxu0 0
        %4380 = vmatpush1.bf16.msra.mxu0 %v3934
        %4381 = vmatprep.subr.bf16.mxu0 0
        %4382 = vmatpush1.bf16.msra.mxu0 %v3933
        %4383 = vmatprep.subr.bf16.mxu0 0
        %4384 = vmatpush2.bf16.msra.mxu0 %v3948
        %4385 = vmatprep.subr.bf16.mxu0 0
        %4386 = vmatpush2.bf16.msra.mxu0 %v3947
        %4387 = vmatprep.subr.bf16.mxu0 0
        %4388 = vmatpush2.bf16.msra.mxu0 %v3946
        %4389 = vmatprep.subr.bf16.mxu0 0
        %4390 = vmatpush2.bf16.msra.mxu0 %v3945
        %4391 = vmatprep.subr.bf16.mxu0 0
        %4392 = vmatpush2.bf16.msra.mxu0 %v3944
        %4393 = vmatprep.subr.bf16.mxu0 0
        %4394 = vmatpush2.bf16.msra.mxu0 %v3943
        %4395 = vmatprep.subr.bf16.mxu0 0
        %4396 = vmatpush2.bf16.msra.mxu0 %v3942
        %4397 = vmatprep.subr.bf16.mxu0 0
        %4398 = vmatpush2.bf16.msra.mxu0 %v3941
        %4399 = vmatprep.mubr.bf16.mxu0 %v3330
        %4400 = vmatmul.mubr.bf16.gmra.mxu0 %v3329
        %v4401 = vpop.f32.mrf.mxu0
        %v4402 = vadd.f32 %v4241, %v4401
        %v4403 = vpop.f32.mrf.mxu0
        %v4404 = vpop.f32.mrf.mxu0
        %v4405 = vadd.f32 %v4244, %v4404
        %v4406 = vpop.f32.mrf.mxu0
        %4407 = vmatprep.mubr.bf16.mxu0 %v3339
        %4408 = vmatmul.mubr.bf16.gmra.mxu0 %v3338
        %v4409 = vpop.f32.mrf.mxu0
        %v4410 = vadd.f32 %v4249, %v4409
        %v4411 = vpop.f32.mrf.mxu0
        %v4412 = vpop.f32.mrf.mxu0
        %v4413 = vadd.f32 %v4252, %v4412
        %v4414 = vpop.f32.mrf.mxu0
        %4415 = vmatprep.mubr.bf16.mxu0 %v3348
        %4416 = vmatmul.mubr.bf16.gmra.mxu0 %v3347
        %v4417 = vpop.f32.mrf.mxu0
        %v4418 = vadd.f32 %v4257, %v4417
        %v4419 = vpop.f32.mrf.mxu0
        %v4420 = vpop.f32.mrf.mxu0
        %v4421 = vadd.f32 %v4260, %v4420
        %v4422 = vpop.f32.mrf.mxu0
        %4423 = vmatprep.mubr.bf16.mxu0 %v3357
        %4424 = vmatmul.mubr.bf16.gmra.mxu0 %v3356
        %v4425 = vpop.f32.mrf.mxu0
        %v4426 = vadd.f32 %v4265, %v4425
        %v4427 = vpop.f32.mrf.mxu0
        %v4428 = vpop.f32.mrf.mxu0
        %v4429 = vadd.f32 %v4268, %v4428
        %v4430 = vpop.f32.mrf.mxu0
        %4431 = vmatprep.mubr.bf16.mxu0 %v3366
        %4432 = vmatmul.mubr.bf16.gmra.mxu0 %v3365
        %v4433 = vpop.f32.mrf.mxu0
        %v4434 = vadd.f32 %v4273, %v4433
        %v4435 = vpop.f32.mrf.mxu0
        %v4436 = vpop.f32.mrf.mxu0
        %v4437 = vadd.f32 %v4276, %v4436
        %v4438 = vpop.f32.mrf.mxu0
        %4439 = vmatprep.mubr.bf16.mxu0 %v3375
        %4440 = vmatmul.mubr.bf16.gmra.mxu0 %v3374
        %v4441 = vpop.f32.mrf.mxu0
        %v4442 = vadd.f32 %v4281, %v4441
        %v4443 = vpop.f32.mrf.mxu0
        %v4444 = vpop.f32.mrf.mxu0
        %v4445 = vadd.f32 %v4284, %v4444
        %v4446 = vpop.f32.mrf.mxu0
        %4447 = vmatprep.mubr.bf16.mxu0 %v3384
        %4448 = vmatmul.mubr.bf16.gmra.mxu0 %v3383
        %v4449 = vpop.f32.mrf.mxu0
        %v4450 = vadd.f32 %v4289, %v4449
        %v4451 = vpop.f32.mrf.mxu0
        %v4452 = vpop.f32.mrf.mxu0
        %v4453 = vadd.f32 %v4292, %v4452
        %v4454 = vpop.f32.mrf.mxu0
        %4455 = vmatprep.mubr.bf16.mxu0 %v3393
        %4456 = vmatmul.mubr.bf16.gmra.mxu0 %v3392
        %v4457 = vpop.f32.mrf.mxu0
        %v4458 = vadd.f32 %v4297, %v4457
        %v4459 = vpop.f32.mrf.mxu0
        %v4460 = vpop.f32.mrf.mxu0
        %v4461 = vadd.f32 %v4300, %v4460
        %v4462 = vpop.f32.mrf.mxu0
        %4463 = vmatprep.mubr.bf16.mxu0 %v3402
        %4464 = vmatmul.mubr.bf16.gmra.mxu0 %v3401
        %v4465 = vpop.f32.mrf.mxu0
        %v4466 = vadd.f32 %v4305, %v4465
        %v4467 = vpop.f32.mrf.mxu0
        %v4468 = vpop.f32.mrf.mxu0
        %v4469 = vadd.f32 %v4308, %v4468
        %v4470 = vpop.f32.mrf.mxu0
        %4471 = vmatprep.mubr.bf16.mxu0 %v3411
        %4472 = vmatmul.mubr.bf16.gmra.mxu0 %v3410
        %v4473 = vpop.f32.mrf.mxu0
        %v4474 = vadd.f32 %v4313, %v4473
        %v4475 = vpop.f32.mrf.mxu0
        %v4476 = vpop.f32.mrf.mxu0
        %v4477 = vadd.f32 %v4316, %v4476
        %v4478 = vpop.f32.mrf.mxu0
        %4479 = vmatprep.mubr.bf16.mxu0 %v3420
        %4480 = vmatmul.mubr.bf16.gmra.mxu0 %v3419
        %v4481 = vpop.f32.mrf.mxu0
        %v4482 = vadd.f32 %v4321, %v4481
        %v4483 = vpop.f32.mrf.mxu0
        %v4484 = vpop.f32.mrf.mxu0
        %v4485 = vadd.f32 %v4324, %v4484
        %v4486 = vpop.f32.mrf.mxu0
        %4487 = vmatprep.mubr.bf16.mxu0 %v3429
        %4488 = vmatmul.mubr.bf16.gmra.mxu0 %v3428
        %v4489 = vpop.f32.mrf.mxu0
        %v4490 = vadd.f32 %v4329, %v4489
        %v4491 = vpop.f32.mrf.mxu0
        %v4492 = vpop.f32.mrf.mxu0
        %v4493 = vadd.f32 %v4332, %v4492
        %v4494 = vpop.f32.mrf.mxu0
        %4495 = vmatprep.mubr.bf16.mxu0 %v3438
        %4496 = vmatmul.mubr.bf16.gmra.mxu0 %v3437
        %v4497 = vpop.f32.mrf.mxu0
        %v4498 = vadd.f32 %v4337, %v4497
        %v4499 = vpop.f32.mrf.mxu0
        %v4500 = vpop.f32.mrf.mxu0
        %v4501 = vadd.f32 %v4340, %v4500
        %v4502 = vpop.f32.mrf.mxu0
        %4503 = vmatprep.mubr.bf16.mxu0 %v3447
        %4504 = vmatmul.mubr.bf16.gmra.mxu0 %v3446
        %v4505 = vpop.f32.mrf.mxu0
        %v4506 = vadd.f32 %v4345, %v4505
        %v4507 = vpop.f32.mrf.mxu0
        %v4508 = vpop.f32.mrf.mxu0
        %v4509 = vadd.f32 %v4348, %v4508
        %v4510 = vpop.f32.mrf.mxu0
        %4511 = vmatprep.mubr.bf16.mxu0 %v3456
        %4512 = vmatmul.mubr.bf16.gmra.mxu0 %v3455
        %v4513 = vpop.f32.mrf.mxu0
        %v4514 = vadd.f32 %v4353, %v4513
        %v4515 = vpop.f32.mrf.mxu0
        %v4516 = vpop.f32.mrf.mxu0
        %v4517 = vadd.f32 %v4356, %v4516
        %v4518 = vpop.f32.mrf.mxu0
        %4519 = vmatprep.mubr.bf16.mxu0 %v3465
        %4520 = vmatmul.mubr.bf16.gmra.mxu0 %v3464
        %v4521 = vpop.f32.mrf.mxu0
        %v4522 = vadd.f32 %v4361, %v4521
        %v4523 = vpop.f32.mrf.mxu0
        %v4524 = vpop.f32.mrf.mxu0
        %v4525 = vadd.f32 %v4364, %v4524
        %v4526 = vpop.f32.mrf.mxu0
        %4527 = vdwg.mxu0
        %4528 = vmatprep.subr.bf16.mxu0 0
        %4529 = vmatpush1.bf16.msra.mxu0 %v3956
        %4530 = vmatprep.subr.bf16.mxu0 0
        %4531 = vmatpush1.bf16.msra.mxu0 %v3955
        %4532 = vmatprep.subr.bf16.mxu0 0
        %4533 = vmatpush1.bf16.msra.mxu0 %v3954
        %4534 = vmatprep.subr.bf16.mxu0 0
        %4535 = vmatpush1.bf16.msra.mxu0 %v3953
        %4536 = vmatprep.subr.bf16.mxu0 0
        %4537 = vmatpush1.bf16.msra.mxu0 %v3952
        %4538 = vmatprep.subr.bf16.mxu0 0
        %4539 = vmatpush1.bf16.msra.mxu0 %v3951
        %4540 = vmatprep.subr.bf16.mxu0 0
        %4541 = vmatpush1.bf16.msra.mxu0 %v3950
        %4542 = vmatprep.subr.bf16.mxu0 0
        %4543 = vmatpush1.bf16.msra.mxu0 %v3949
        %4544 = vmatprep.subr.bf16.mxu0 0
        %4545 = vmatpush2.bf16.msra.mxu0 %v3964
        %4546 = vmatprep.subr.bf16.mxu0 0
        %4547 = vmatpush2.bf16.msra.mxu0 %v3963
        %4548 = vmatprep.subr.bf16.mxu0 0
        %4549 = vmatpush2.bf16.msra.mxu0 %v3962
        %4550 = vmatprep.subr.bf16.mxu0 0
        %4551 = vmatpush2.bf16.msra.mxu0 %v3961
        %4552 = vmatprep.subr.bf16.mxu0 0
        %4553 = vmatpush2.bf16.msra.mxu0 %v3960
        %4554 = vmatprep.subr.bf16.mxu0 0
        %4555 = vmatpush2.bf16.msra.mxu0 %v3959
        %4556 = vmatprep.subr.bf16.mxu0 0
        %4557 = vmatpush2.bf16.msra.mxu0 %v3958
        %4558 = vmatprep.subr.bf16.mxu0 0
        %4559 = vmatpush2.bf16.msra.mxu0 %v3957
        %4560 = vmatprep.mubr.bf16.mxu0 %v3332
        %4561 = vmatmul.mubr.bf16.gmra.mxu0 %v3331
        %v4562 = vpop.f32.mrf.mxu0
        %v4563 = vadd.f32 %v4402, %v4562
        %v4564 = vpop.f32.mrf.mxu0
        %v4565 = vpop.f32.mrf.mxu0
        %v4566 = vadd.f32 %v4405, %v4565
        %v4567 = vpop.f32.mrf.mxu0
        %4568 = vmatprep.mubr.bf16.mxu0 %v3341
        %4569 = vmatmul.mubr.bf16.gmra.mxu0 %v3340
        %v4570 = vpop.f32.mrf.mxu0
        %v4571 = vadd.f32 %v4410, %v4570
        %v4572 = vpop.f32.mrf.mxu0
        %v4573 = vpop.f32.mrf.mxu0
        %v4574 = vadd.f32 %v4413, %v4573
        %v4575 = vpop.f32.mrf.mxu0
        %4576 = vmatprep.mubr.bf16.mxu0 %v3350
        %4577 = vmatmul.mubr.bf16.gmra.mxu0 %v3349
        %v4578 = vpop.f32.mrf.mxu0
        %v4579 = vadd.f32 %v4418, %v4578
        %v4580 = vpop.f32.mrf.mxu0
        %v4581 = vpop.f32.mrf.mxu0
        %v4582 = vadd.f32 %v4421, %v4581
        %v4583 = vpop.f32.mrf.mxu0
        %4584 = vmatprep.mubr.bf16.mxu0 %v3359
        %4585 = vmatmul.mubr.bf16.gmra.mxu0 %v3358
        %v4586 = vpop.f32.mrf.mxu0
        %v4587 = vadd.f32 %v4426, %v4586
        %v4588 = vpop.f32.mrf.mxu0
        %v4589 = vpop.f32.mrf.mxu0
        %v4590 = vadd.f32 %v4429, %v4589
        %v4591 = vpop.f32.mrf.mxu0
        %4592 = vmatprep.mubr.bf16.mxu0 %v3368
        %4593 = vmatmul.mubr.bf16.gmra.mxu0 %v3367
        %v4594 = vpop.f32.mrf.mxu0
        %v4595 = vadd.f32 %v4434, %v4594
        %v4596 = vpop.f32.mrf.mxu0
        %v4597 = vpop.f32.mrf.mxu0
        %v4598 = vadd.f32 %v4437, %v4597
        %v4599 = vpop.f32.mrf.mxu0
        %4600 = vmatprep.mubr.bf16.mxu0 %v3377
        %4601 = vmatmul.mubr.bf16.gmra.mxu0 %v3376
        %v4602 = vpop.f32.mrf.mxu0
        %v4603 = vadd.f32 %v4442, %v4602
        %v4604 = vpop.f32.mrf.mxu0
        %v4605 = vpop.f32.mrf.mxu0
        %v4606 = vadd.f32 %v4445, %v4605
        %v4607 = vpop.f32.mrf.mxu0
        %4608 = vmatprep.mubr.bf16.mxu0 %v3386
        %4609 = vmatmul.mubr.bf16.gmra.mxu0 %v3385
        %v4610 = vpop.f32.mrf.mxu0
        %v4611 = vadd.f32 %v4450, %v4610
        %v4612 = vpop.f32.mrf.mxu0
        %v4613 = vpop.f32.mrf.mxu0
        %v4614 = vadd.f32 %v4453, %v4613
        %v4615 = vpop.f32.mrf.mxu0
        %4616 = vmatprep.mubr.bf16.mxu0 %v3395
        %4617 = vmatmul.mubr.bf16.gmra.mxu0 %v3394
        %v4618 = vpop.f32.mrf.mxu0
        %v4619 = vadd.f32 %v4458, %v4618
        %v4620 = vpop.f32.mrf.mxu0
        %v4621 = vpop.f32.mrf.mxu0
        %v4622 = vadd.f32 %v4461, %v4621
        %v4623 = vpop.f32.mrf.mxu0
        %4624 = vmatprep.mubr.bf16.mxu0 %v3404
        %4625 = vmatmul.mubr.bf16.gmra.mxu0 %v3403
        %v4626 = vpop.f32.mrf.mxu0
        %v4627 = vadd.f32 %v4466, %v4626
        %v4628 = vpop.f32.mrf.mxu0
        %v4629 = vpop.f32.mrf.mxu0
        %v4630 = vadd.f32 %v4469, %v4629
        %v4631 = vpop.f32.mrf.mxu0
        %4632 = vmatprep.mubr.bf16.mxu0 %v3413
        %4633 = vmatmul.mubr.bf16.gmra.mxu0 %v3412
        %v4634 = vpop.f32.mrf.mxu0
        %v4635 = vadd.f32 %v4474, %v4634
        %v4636 = vpop.f32.mrf.mxu0
        %v4637 = vpop.f32.mrf.mxu0
        %v4638 = vadd.f32 %v4477, %v4637
        %v4639 = vpop.f32.mrf.mxu0
        %4640 = vmatprep.mubr.bf16.mxu0 %v3422
        %4641 = vmatmul.mubr.bf16.gmra.mxu0 %v3421
        %v4642 = vpop.f32.mrf.mxu0
        %v4643 = vadd.f32 %v4482, %v4642
        %v4644 = vpop.f32.mrf.mxu0
        %v4645 = vpop.f32.mrf.mxu0
        %v4646 = vadd.f32 %v4485, %v4645
        %v4647 = vpop.f32.mrf.mxu0
        %4648 = vmatprep.mubr.bf16.mxu0 %v3431
        %4649 = vmatmul.mubr.bf16.gmra.mxu0 %v3430
        %v4650 = vpop.f32.mrf.mxu0
        %v4651 = vadd.f32 %v4490, %v4650
        %v4652 = vpop.f32.mrf.mxu0
        %v4653 = vpop.f32.mrf.mxu0
        %v4654 = vadd.f32 %v4493, %v4653
        %v4655 = vpop.f32.mrf.mxu0
        %4656 = vmatprep.mubr.bf16.mxu0 %v3440
        %4657 = vmatmul.mubr.bf16.gmra.mxu0 %v3439
        %v4658 = vpop.f32.mrf.mxu0
        %v4659 = vadd.f32 %v4498, %v4658
        %v4660 = vpop.f32.mrf.mxu0
        %v4661 = vpop.f32.mrf.mxu0
        %v4662 = vadd.f32 %v4501, %v4661
        %v4663 = vpop.f32.mrf.mxu0
        %4664 = vmatprep.mubr.bf16.mxu0 %v3449
        %4665 = vmatmul.mubr.bf16.gmra.mxu0 %v3448
        %v4666 = vpop.f32.mrf.mxu0
        %v4667 = vadd.f32 %v4506, %v4666
        %v4668 = vpop.f32.mrf.mxu0
        %v4669 = vpop.f32.mrf.mxu0
        %v4670 = vadd.f32 %v4509, %v4669
        %v4671 = vpop.f32.mrf.mxu0
        %4672 = vmatprep.mubr.bf16.mxu0 %v3458
        %4673 = vmatmul.mubr.bf16.gmra.mxu0 %v3457
        %v4674 = vpop.f32.mrf.mxu0
        %v4675 = vadd.f32 %v4514, %v4674
        %v4676 = vpop.f32.mrf.mxu0
        %v4677 = vpop.f32.mrf.mxu0
        %v4678 = vadd.f32 %v4517, %v4677
        %v4679 = vpop.f32.mrf.mxu0
        %4680 = vmatprep.mubr.bf16.mxu0 %v3467
        %4681 = vmatmul.mubr.bf16.gmra.mxu0 %v3466
        %v4682 = vpop.f32.mrf.mxu0
        %v4683 = vadd.f32 %v4522, %v4682
        %v4684 = vpop.f32.mrf.mxu0
        %v4685 = vpop.f32.mrf.mxu0
        %v4686 = vadd.f32 %v4525, %v4685
        %v4687 = vpop.f32.mrf.mxu0
        %4688 = vdwg.mxu0
        %4689 = vmatprep.subr.bf16.mxu0 0
        %4690 = vmatpush1.bf16.msra.mxu0 %v3972
        %4691 = vmatprep.subr.bf16.mxu0 0
        %4692 = vmatpush1.bf16.msra.mxu0 %v3971
        %4693 = vmatprep.subr.bf16.mxu0 0
        %4694 = vmatpush1.bf16.msra.mxu0 %v3970
        %4695 = vmatprep.subr.bf16.mxu0 0
        %4696 = vmatpush1.bf16.msra.mxu0 %v3969
        %4697 = vmatprep.subr.bf16.mxu0 0
        %4698 = vmatpush1.bf16.msra.mxu0 %v3968
        %4699 = vmatprep.subr.bf16.mxu0 0
        %4700 = vmatpush1.bf16.msra.mxu0 %v3967
        %4701 = vmatprep.subr.bf16.mxu0 0
        %4702 = vmatpush1.bf16.msra.mxu0 %v3966
        %4703 = vmatprep.subr.bf16.mxu0 0
        %4704 = vmatpush1.bf16.msra.mxu0 %v3965
        %4705 = vmatprep.subr.bf16.mxu0 0
        %4706 = vmatpush2.bf16.msra.mxu0 0
        %4707 = vmatprep.subr.bf16.mxu0 0
        %4708 = vmatpush2.bf16.msra.mxu0 0
        %4709 = vmatprep.subr.bf16.mxu0 0
        %4710 = vmatpush2.bf16.msra.mxu0 0
        %4711 = vmatprep.subr.bf16.mxu0 0
        %4712 = vmatpush2.bf16.msra.mxu0 0
        %4713 = vmatprep.subr.bf16.mxu0 0
        %4714 = vmatpush2.bf16.msra.mxu0 0
        %4715 = vmatprep.subr.bf16.mxu0 0
        %4716 = vmatpush2.bf16.msra.mxu0 0
        %4717 = vmatprep.subr.bf16.mxu0 0
        %4718 = vmatpush2.bf16.msra.mxu0 0
        %4719 = vmatprep.subr.bf16.mxu0 0
        %4720 = vmatpush2.bf16.msra.mxu0 0
        %4721 = vmatprep.mubr.bf16.mxu0 0
        %4722 = vmatmul.mubr.bf16.gmra.mxu0 %v3333
        %v4723 = vpop.f32.mrf.mxu0
        %v4724 = vadd.f32 %v4563, %v4723
        %v4725 = vpop.f32.mrf.mxu0
        %v4726 = vpop.f32.mrf.mxu0
        %v4727 = vadd.f32 %v4566, %v4726
        %v4728 = vpop.f32.mrf.mxu0
        %4729 = vmatprep.mubr.bf16.mxu0 0
        %4730 = vmatmul.mubr.bf16.gmra.mxu0 %v3342
        %v4731 = vpop.f32.mrf.mxu0
        %v4732 = vadd.f32 %v4571, %v4731
        %v4733 = vpop.f32.mrf.mxu0
        %v4734 = vpop.f32.mrf.mxu0
        %v4735 = vadd.f32 %v4574, %v4734
        %v4736 = vpop.f32.mrf.mxu0
        %4737 = vmatprep.mubr.bf16.mxu0 0
        %4738 = vmatmul.mubr.bf16.gmra.mxu0 %v3351
        %v4739 = vpop.f32.mrf.mxu0
        %v4740 = vadd.f32 %v4579, %v4739
        %v4741 = vpop.f32.mrf.mxu0
        %v4742 = vpop.f32.mrf.mxu0
        %v4743 = vadd.f32 %v4582, %v4742
        %v4744 = vpop.f32.mrf.mxu0
        %4745 = vmatprep.mubr.bf16.mxu0 0
        %4746 = vmatmul.mubr.bf16.gmra.mxu0 %v3360
        %v4747 = vpop.f32.mrf.mxu0
        %v4748 = vadd.f32 %v4587, %v4747
        %v4749 = vpop.f32.mrf.mxu0
        %v4750 = vpop.f32.mrf.mxu0
        %v4751 = vadd.f32 %v4590, %v4750
        %v4752 = vpop.f32.mrf.mxu0
        %4753 = vmatprep.mubr.bf16.mxu0 0
        %4754 = vmatmul.mubr.bf16.gmra.mxu0 %v3369
        %v4755 = vpop.f32.mrf.mxu0
        %v4756 = vadd.f32 %v4595, %v4755
        %v4757 = vpop.f32.mrf.mxu0
        %v4758 = vpop.f32.mrf.mxu0
        %v4759 = vadd.f32 %v4598, %v4758
        %v4760 = vpop.f32.mrf.mxu0
        %4761 = vmatprep.mubr.bf16.mxu0 0
        %4762 = vmatmul.mubr.bf16.gmra.mxu0 %v3378
        %v4763 = vpop.f32.mrf.mxu0
        %v4764 = vadd.f32 %v4603, %v4763
        %v4765 = vpop.f32.mrf.mxu0
        %v4766 = vpop.f32.mrf.mxu0
        %v4767 = vadd.f32 %v4606, %v4766
        %v4768 = vpop.f32.mrf.mxu0
        %4769 = vmatprep.mubr.bf16.mxu0 0
        %4770 = vmatmul.mubr.bf16.gmra.mxu0 %v3387
        %v4771 = vpop.f32.mrf.mxu0
        %v4772 = vadd.f32 %v4611, %v4771
        %v4773 = vpop.f32.mrf.mxu0
        %v4774 = vpop.f32.mrf.mxu0
        %v4775 = vadd.f32 %v4614, %v4774
        %v4776 = vpop.f32.mrf.mxu0
        %4777 = vmatprep.mubr.bf16.mxu0 0
        %4778 = vmatmul.mubr.bf16.gmra.mxu0 %v3396
        %v4779 = vpop.f32.mrf.mxu0
        %v4780 = vadd.f32 %v4619, %v4779
        %v4781 = vpop.f32.mrf.mxu0
        %v4782 = vpop.f32.mrf.mxu0
        %v4783 = vadd.f32 %v4622, %v4782
        %v4784 = vpop.f32.mrf.mxu0
        %4785 = vmatprep.mubr.bf16.mxu0 0
        %4786 = vmatmul.mubr.bf16.gmra.mxu0 %v3405
        %v4787 = vpop.f32.mrf.mxu0
        %v4788 = vadd.f32 %v4627, %v4787
        %v4789 = vpop.f32.mrf.mxu0
        %v4790 = vpop.f32.mrf.mxu0
        %v4791 = vadd.f32 %v4630, %v4790
        %v4792 = vpop.f32.mrf.mxu0
        %4793 = vmatprep.mubr.bf16.mxu0 0
        %4794 = vmatmul.mubr.bf16.gmra.mxu0 %v3414
        %v4795 = vpop.f32.mrf.mxu0
        %v4796 = vadd.f32 %v4635, %v4795
        %v4797 = vpop.f32.mrf.mxu0
        %v4798 = vpop.f32.mrf.mxu0
        %v4799 = vadd.f32 %v4638, %v4798
        %v4800 = vpop.f32.mrf.mxu0
        %4801 = vmatprep.mubr.bf16.mxu0 0
        %4802 = vmatmul.mubr.bf16.gmra.mxu0 %v3423
        %v4803 = vpop.f32.mrf.mxu0
        %v4804 = vadd.f32 %v4643, %v4803
        %v4805 = vpop.f32.mrf.mxu0
        %v4806 = vpop.f32.mrf.mxu0
        %v4807 = vadd.f32 %v4646, %v4806
        %v4808 = vpop.f32.mrf.mxu0
        %4809 = vmatprep.mubr.bf16.mxu0 0
        %4810 = vmatmul.mubr.bf16.gmra.mxu0 %v3432
        %v4811 = vpop.f32.mrf.mxu0
        %v4812 = vadd.f32 %v4651, %v4811
        %v4813 = vpop.f32.mrf.mxu0
        %v4814 = vpop.f32.mrf.mxu0
        %v4815 = vadd.f32 %v4654, %v4814
        %v4816 = vpop.f32.mrf.mxu0
        %4817 = vmatprep.mubr.bf16.mxu0 0
        %4818 = vmatmul.mubr.bf16.gmra.mxu0 %v3441
        %v4819 = vpop.f32.mrf.mxu0
        %v4820 = vadd.f32 %v4659, %v4819
        %v4821 = vpop.f32.mrf.mxu0
        %v4822 = vpop.f32.mrf.mxu0
        %v4823 = vadd.f32 %v4662, %v4822
        %v4824 = vpop.f32.mrf.mxu0
        %4825 = vmatprep.mubr.bf16.mxu0 0
        %4826 = vmatmul.mubr.bf16.gmra.mxu0 %v3450
        %v4827 = vpop.f32.mrf.mxu0
        %v4828 = vadd.f32 %v4667, %v4827
        %v4829 = vpop.f32.mrf.mxu0
        %v4830 = vpop.f32.mrf.mxu0
        %v4831 = vadd.f32 %v4670, %v4830
        %v4832 = vpop.f32.mrf.mxu0
        %4833 = vmatprep.mubr.bf16.mxu0 0
        %4834 = vmatmul.mubr.bf16.gmra.mxu0 %v3459
        %v4835 = vpop.f32.mrf.mxu0
        %v4836 = vadd.f32 %v4675, %v4835
        %v4837 = vpop.f32.mrf.mxu0
        %v4838 = vpop.f32.mrf.mxu0
        %v4839 = vadd.f32 %v4678, %v4838
        %v4840 = vpop.f32.mrf.mxu0
        %4841 = vmatprep.mubr.bf16.mxu0 0
        %4842 = vmatmul.mubr.bf16.gmra.mxu0 %v3468
        %v4843 = vpop.f32.mrf.mxu0
        %v4844 = vadd.f32 %v4683, %v4843
        %v4845 = vpop.f32.mrf.mxu0
        %v4846 = vpop.f32.mrf.mxu0
        %v4847 = vadd.f32 %v4686, %v4846
        %v4848 = vpop.f32.mrf.mxu0
        %4849 = vdwg.mxu0
        %v4850 = vmax.f32 %v4724, 0.0
        %v4851 = vmax.f32 %v4727, 0.0
        %v4852 = vmax.f32 %v4732, 0.0
        %v4853 = vmax.f32 %v4735, 0.0
        %v4854 = vmax.f32 %v4740, 0.0
        %v4855 = vmax.f32 %v4743, 0.0
        %v4856 = vmax.f32 %v4748, 0.0
        %v4857 = vmax.f32 %v4751, 0.0
        %v4858 = vmax.f32 %v4756, 0.0
        %v4859 = vmax.f32 %v4759, 0.0
        %v4860 = vmax.f32 %v4764, 0.0
        %v4861 = vmax.f32 %v4767, 0.0
        %v4862 = vmax.f32 %v4772, 0.0
        %v4863 = vmax.f32 %v4775, 0.0
        %v4864 = vmax.f32 %v4780, 0.0
        %v4865 = vmax.f32 %v4783, 0.0
        %v4866 = vmax.f32 %v4788, 0.0
        %v4867 = vmax.f32 %v4791, 0.0
        %v4868 = vmax.f32 %v4796, 0.0
        %v4869 = vmax.f32 %v4799, 0.0
        %v4870 = vmax.f32 %v4804, 0.0
        %v4871 = vmax.f32 %v4807, 0.0
        %v4872 = vmax.f32 %v4812, 0.0
        %v4873 = vmax.f32 %v4815, 0.0
        %v4874 = vmax.f32 %v4820, 0.0
        %v4875 = vmax.f32 %v4823, 0.0
        %v4876 = vmax.f32 %v4828, 0.0
        %v4877 = vmax.f32 %v4831, 0.0
        %v4878 = vmax.f32 %v4836, 0.0
        %v4879 = vmax.f32 %v4839, 0.0
        %v4880 = vmax.f32 %v4844, 0.0
        %v4881 = vmax.f32 %v4847, 0.0
        %v4882 = vld [vmem:[%s5] sm:$0x1]
        %v4884 = vlaneseq
        %v4885 = vshrl.u32 %v4884, 7
        %v4886 = vsub.s32 0, %v4885
        %v4887 = vrot.slane %v4882, %v4886
        %v4889 = vmul.f32 %v4850, %v4887
        %v4890 = vmul.f32 %v4851, %v4887
        %v4891 = vmul.f32 %v4852, %v4887
        %v4892 = vmul.f32 %v4853, %v4887
        %v4893 = vmul.f32 %v4854, %v4887
        %v4894 = vmul.f32 %v4855, %v4887
        %v4895 = vmul.f32 %v4856, %v4887
        %v4896 = vmul.f32 %v4857, %v4887
        %v4897 = vmul.f32 %v4858, %v4887
        %v4898 = vmul.f32 %v4859, %v4887
        %v4899 = vmul.f32 %v4860, %v4887
        %v4900 = vmul.f32 %v4861, %v4887
        %v4901 = vmul.f32 %v4862, %v4887
        %v4902 = vmul.f32 %v4863, %v4887
        %v4903 = vmul.f32 %v4864, %v4887
        %v4904 = vmul.f32 %v4865, %v4887
        %v4905 = vmul.f32 %v4866, %v4887
        %v4906 = vmul.f32 %v4867, %v4887
        %v4907 = vmul.f32 %v4868, %v4887
        %v4908 = vmul.f32 %v4869, %v4887
        %v4909 = vmul.f32 %v4870, %v4887
        %v4910 = vmul.f32 %v4871, %v4887
        %v4911 = vmul.f32 %v4872, %v4887
        %v4912 = vmul.f32 %v4873, %v4887
        %v4913 = vmul.f32 %v4874, %v4887
        %v4914 = vmul.f32 %v4875, %v4887
        %v4915 = vmul.f32 %v4876, %v4887
        %v4916 = vmul.f32 %v4877, %v4887
        %v4917 = vmul.f32 %v4878, %v4887
        %v4918 = vmul.f32 %v4879, %v4887
        %v4919 = vmul.f32 %v4880, %v4887
        %v4920 = vmul.f32 %v4881, %v4887
        %4921 = vadd.xlane.f32.xlu0 %v4889
        %v4922 = vpop.xlane.xlu0 %4921
        %4923 = vadd.xlane.f32.xlu0 %v4890
        %v4924 = vpop.xlane.xlu0 %4923
        %4925 = vadd.xlane.f32.xlu0 %v4891
        %v4926 = vpop.xlane.xlu0 %4925
        %4927 = vadd.xlane.f32.xlu0 %v4892
        %v4928 = vpop.xlane.xlu0 %4927
        %4929 = vadd.xlane.f32.xlu0 %v4893
        %v4930 = vpop.xlane.xlu0 %4929
        %4931 = vadd.xlane.f32.xlu0 %v4894
        %v4932 = vpop.xlane.xlu0 %4931
        %4933 = vadd.xlane.f32.xlu0 %v4895
        %v4934 = vpop.xlane.xlu0 %4933
        %4935 = vadd.xlane.f32.xlu0 %v4896
        %v4936 = vpop.xlane.xlu0 %4935
        %4937 = vadd.xlane.f32.xlu0 %v4897
        %v4938 = vpop.xlane.xlu0 %4937
        %4939 = vadd.xlane.f32.xlu0 %v4898
        %v4940 = vpop.xlane.xlu0 %4939
        %4941 = vadd.xlane.f32.xlu0 %v4899
        %v4942 = vpop.xlane.xlu0 %4941
        %4943 = vadd.xlane.f32.xlu0 %v4900
        %v4944 = vpop.xlane.xlu0 %4943
        %4945 = vadd.xlane.f32.xlu0 %v4901
        %v4946 = vpop.xlane.xlu0 %4945
        %4947 = vadd.xlane.f32.xlu0 %v4902
        %v4948 = vpop.xlane.xlu0 %4947
        %4949 = vadd.xlane.f32.xlu0 %v4903
        %v4950 = vpop.xlane.xlu0 %4949
        %4951 = vadd.xlane.f32.xlu0 %v4904
        %v4952 = vpop.xlane.xlu0 %4951
        %4953 = vadd.xlane.f32.xlu0 %v4905
        %v4954 = vpop.xlane.xlu0 %4953
        %4955 = vadd.xlane.f32.xlu0 %v4906
        %v4956 = vpop.xlane.xlu0 %4955
        %4957 = vadd.xlane.f32.xlu0 %v4907
        %v4958 = vpop.xlane.xlu0 %4957
        %4959 = vadd.xlane.f32.xlu0 %v4908
        %v4960 = vpop.xlane.xlu0 %4959
        %4961 = vadd.xlane.f32.xlu0 %v4909
        %v4962 = vpop.xlane.xlu0 %4961
        %4963 = vadd.xlane.f32.xlu0 %v4910
        %v4964 = vpop.xlane.xlu0 %4963
        %4965 = vadd.xlane.f32.xlu0 %v4911
        %v4966 = vpop.xlane.xlu0 %4965
        %4967 = vadd.xlane.f32.xlu0 %v4912
        %v4968 = vpop.xlane.xlu0 %4967
        %4969 = vadd.xlane.f32.xlu0 %v4913
        %v4970 = vpop.xlane.xlu0 %4969
        %4971 = vadd.xlane.f32.xlu0 %v4914
        %v4972 = vpop.xlane.xlu0 %4971
        %4973 = vadd.xlane.f32.xlu0 %v4915
        %v4974 = vpop.xlane.xlu0 %4973
        %4975 = vadd.xlane.f32.xlu0 %v4916
        %v4976 = vpop.xlane.xlu0 %4975
        %4977 = vadd.xlane.f32.xlu0 %v4917
        %v4978 = vpop.xlane.xlu0 %4977
        %4979 = vadd.xlane.f32.xlu0 %v4918
        %v4980 = vpop.xlane.xlu0 %4979
        %4981 = vadd.xlane.f32.xlu0 %v4919
        %v4982 = vpop.xlane.xlu0 %4981
        %4983 = vadd.xlane.f32.xlu0 %v4920
        %v4984 = vpop.xlane.xlu0 %4983
        %s4985 = sld [smem:[#allocation5]]
        %v4986 = vstv %s4985
        %v4987 = vadd.f32 %v4922, %v4986
        %v4988 = vadd.f32 %v4924, %v4986
        %v4989 = vadd.f32 %v4926, %v4986
        %v4990 = vadd.f32 %v4928, %v4986
        %v4991 = vadd.f32 %v4930, %v4986
        %v4992 = vadd.f32 %v4932, %v4986
        %v4993 = vadd.f32 %v4934, %v4986
        %v4994 = vadd.f32 %v4936, %v4986
        %v4995 = vadd.f32 %v4938, %v4986
        %v4996 = vadd.f32 %v4940, %v4986
        %v4997 = vadd.f32 %v4942, %v4986
        %v4998 = vadd.f32 %v4944, %v4986
        %v4999 = vadd.f32 %v4946, %v4986
        %v5000 = vadd.f32 %v4948, %v4986
        %v5001 = vadd.f32 %v4950, %v4986
        %v5002 = vadd.f32 %v4952, %v4986
        %v5003 = vadd.f32 %v4954, %v4986
        %v5004 = vadd.f32 %v4956, %v4986
        %v5005 = vadd.f32 %v4958, %v4986
        %v5006 = vadd.f32 %v4960, %v4986
        %v5007 = vadd.f32 %v4962, %v4986
        %v5008 = vadd.f32 %v4964, %v4986
        %v5009 = vadd.f32 %v4966, %v4986
        %v5010 = vadd.f32 %v4968, %v4986
        %v5011 = vadd.f32 %v4970, %v4986
        %v5012 = vadd.f32 %v4972, %v4986
        %v5013 = vadd.f32 %v4974, %v4986
        %v5014 = vadd.f32 %v4976, %v4986
        %v5015 = vadd.f32 %v4978, %v4986
        %v5016 = vadd.f32 %v4980, %v4986
        %v5017 = vadd.f32 %v4982, %v4986
        %v5018 = vadd.f32 %v4984, %v4986
        %vm5019 = vcmask 146432
        %5020 = vst.msk [vmem:[#allocation4] sm:$0xff] %vm5019, 0.0
        %5021 = vst.msk [vmem:[#allocation4 + $0x8] sm:$0xff] %vm5019, 0.0
        %vm5022 = vcmask 140288
        %5023 = vst.msk [vmem:[#allocation4 + $0x10] sm:$0x3] %vm5022, 0.0
        %v5056 = vlaneseq
        %v5057 = vand.u32 %v5056, 127
        %v5058 = vadd.s32 %v5057, 4294967295
        %v5059 = vlaneseq
        %v5060 = vshrl.u32 %v5059, 7
        %v5061 = vsub.s32 %v5058, %v5060
        %v5062 = vrot.slane %v4987, %v5061
        %v5063 = vadd.s32 %v5057, 4294967287
        %v5064 = vlaneseq
        %v5065 = vshrl.u32 %v5064, 7
        %v5066 = vsub.s32 %v5063, %v5065
        %v5067 = vrot.slane %v4988, %v5066
        %vm5068 = vcmask 138312
        %v5069 = vsel %vm5068, %v5067, %v5062
        %v5070 = vlaneseq
        %v5071 = vshrl.u32 %v5070, 7
        %v5072 = vsub.s32 %v5058, %v5071
        %v5073 = vrot.slane %v4989, %v5072
        %v5074 = vlaneseq
        %v5075 = vshrl.u32 %v5074, 7
        %v5076 = vsub.s32 %v5063, %v5075
        %v5077 = vrot.slane %v4990, %v5076
        %v5078 = vsel %vm5068, %v5077, %v5073
        %v5079 = vlaneseq
        %v5080 = vshrl.u32 %v5079, 7
        %v5081 = vsub.s32 %v5058, %v5080
        %v5082 = vrot.slane %v4991, %v5081
        %v5083 = vlaneseq
        %v5084 = vshrl.u32 %v5083, 7
        %v5085 = vsub.s32 %v5063, %v5084
        %v5086 = vrot.slane %v4992, %v5085
        %v5087 = vsel %vm5068, %v5086, %v5082
        %v5088 = vlaneseq
        %v5089 = vshrl.u32 %v5088, 7
        %v5090 = vsub.s32 %v5058, %v5089
        %v5091 = vrot.slane %v4993, %v5090
        %v5092 = vlaneseq
        %v5093 = vshrl.u32 %v5092, 7
        %v5094 = vsub.s32 %v5063, %v5093
        %v5095 = vrot.slane %v4994, %v5094
        %v5096 = vsel %vm5068, %v5095, %v5091
        %v5097 = vlaneseq
        %v5098 = vshrl.u32 %v5097, 7
        %v5099 = vsub.s32 %v5058, %v5098
        %v5100 = vrot.slane %v4995, %v5099
        %v5101 = vlaneseq
        %v5102 = vshrl.u32 %v5101, 7
        %v5103 = vsub.s32 %v5063, %v5102
        %v5104 = vrot.slane %v4996, %v5103
        %v5105 = vsel %vm5068, %v5104, %v5100
        %v5106 = vlaneseq
        %v5107 = vshrl.u32 %v5106, 7
        %v5108 = vsub.s32 %v5058, %v5107
        %v5109 = vrot.slane %v4997, %v5108
        %v5110 = vlaneseq
        %v5111 = vshrl.u32 %v5110, 7
        %v5112 = vsub.s32 %v5063, %v5111
        %v5113 = vrot.slane %v4998, %v5112
        %v5114 = vsel %vm5068, %v5113, %v5109
        %v5115 = vlaneseq
        %v5116 = vshrl.u32 %v5115, 7
        %v5117 = vsub.s32 %v5058, %v5116
        %v5118 = vrot.slane %v4999, %v5117
        %v5119 = vlaneseq
        %v5120 = vshrl.u32 %v5119, 7
        %v5121 = vsub.s32 %v5063, %v5120
        %v5122 = vrot.slane %v5000, %v5121
        %v5123 = vsel %vm5068, %v5122, %v5118
        %v5124 = vlaneseq
        %v5125 = vshrl.u32 %v5124, 7
        %v5126 = vsub.s32 %v5058, %v5125
        %v5127 = vrot.slane %v5001, %v5126
        %v5128 = vlaneseq
        %v5129 = vshrl.u32 %v5128, 7
        %v5130 = vsub.s32 %v5063, %v5129
        %v5131 = vrot.slane %v5002, %v5130
        %v5132 = vsel %vm5068, %v5131, %v5127
        %v5133 = vlaneseq
        %v5134 = vshrl.u32 %v5133, 7
        %v5135 = vsub.s32 %v5058, %v5134
        %v5136 = vrot.slane %v5003, %v5135
        %v5137 = vlaneseq
        %v5138 = vshrl.u32 %v5137, 7
        %v5139 = vsub.s32 %v5063, %v5138
        %v5140 = vrot.slane %v5004, %v5139
        %v5141 = vsel %vm5068, %v5140, %v5136
        %v5142 = vlaneseq
        %v5143 = vshrl.u32 %v5142, 7
        %v5144 = vsub.s32 %v5058, %v5143
        %v5145 = vrot.slane %v5005, %v5144
        %v5146 = vlaneseq
        %v5147 = vshrl.u32 %v5146, 7
        %v5148 = vsub.s32 %v5063, %v5147
        %v5149 = vrot.slane %v5006, %v5148
        %v5150 = vsel %vm5068, %v5149, %v5145
        %v5151 = vlaneseq
        %v5152 = vshrl.u32 %v5151, 7
        %v5153 = vsub.s32 %v5058, %v5152
        %v5154 = vrot.slane %v5007, %v5153
        %v5155 = vlaneseq
        %v5156 = vshrl.u32 %v5155, 7
        %v5157 = vsub.s32 %v5063, %v5156
        %v5158 = vrot.slane %v5008, %v5157
        %v5159 = vsel %vm5068, %v5158, %v5154
        %v5160 = vlaneseq
        %v5161 = vshrl.u32 %v5160, 7
        %v5162 = vsub.s32 %v5058, %v5161
        %v5163 = vrot.slane %v5009, %v5162
        %v5164 = vlaneseq
        %v5165 = vshrl.u32 %v5164, 7
        %v5166 = vsub.s32 %v5063, %v5165
        %v5167 = vrot.slane %v5010, %v5166
        %v5168 = vsel %vm5068, %v5167, %v5163
        %v5169 = vlaneseq
        %v5170 = vshrl.u32 %v5169, 7
        %v5171 = vsub.s32 %v5058, %v5170
        %v5172 = vrot.slane %v5011, %v5171
        %v5173 = vlaneseq
        %v5174 = vshrl.u32 %v5173, 7
        %v5175 = vsub.s32 %v5063, %v5174
        %v5176 = vrot.slane %v5012, %v5175
        %v5177 = vsel %vm5068, %v5176, %v5172
        %v5178 = vlaneseq
        %v5179 = vshrl.u32 %v5178, 7
        %v5180 = vsub.s32 %v5058, %v5179
        %v5181 = vrot.slane %v5013, %v5180
        %v5182 = vlaneseq
        %v5183 = vshrl.u32 %v5182, 7
        %v5184 = vsub.s32 %v5063, %v5183
        %v5185 = vrot.slane %v5014, %v5184
        %v5186 = vsel %vm5068, %v5185, %v5181
        %v5187 = vlaneseq
        %v5188 = vshrl.u32 %v5187, 7
        %v5189 = vsub.s32 %v5058, %v5188
        %v5190 = vrot.slane %v5015, %v5189
        %v5191 = vlaneseq
        %v5192 = vshrl.u32 %v5191, 7
        %v5193 = vsub.s32 %v5063, %v5192
        %v5194 = vrot.slane %v5016, %v5193
        %v5195 = vsel %vm5068, %v5194, %v5190
        %v5196 = vlaneseq
        %v5197 = vshrl.u32 %v5196, 7
        %v5198 = vsub.s32 %v5058, %v5197
        %v5199 = vrot.slane %v5017, %v5198
        %v5200 = vlaneseq
        %v5201 = vshrl.u32 %v5200, 7
        %v5202 = vsub.s32 %v5063, %v5201
        %v5203 = vrot.slane %v5018, %v5202
        %v5204 = vsel %vm5068, %v5203, %v5199
        %vm5205 = vcmask 1041409
        %v5206 = vsel %vm5205, %v5078, %v5069
        %vm5207 = vcmask 1042434
        %v5208 = vsel %vm5207, %v5087, %v5206
        %vm5209 = vcmask 1043459
        %v5210 = vsel %vm5209, %v5096, %v5208
        %vm5211 = vcmask 1044484
        %v5212 = vsel %vm5211, %v5105, %v5210
        %vm5213 = vcmask 1045509
        %v5214 = vsel %vm5213, %v5114, %v5212
        %vm5215 = vcmask 1046534
        %v5216 = vsel %vm5215, %v5123, %v5214
        %vm5217 = vcmask 1047559
        %v5218 = vsel %vm5217, %v5132, %v5216
        %v5219 = vsel %vm5205, %v5150, %v5141
        %v5220 = vsel %vm5207, %v5159, %v5219
        %v5221 = vsel %vm5209, %v5168, %v5220
        %v5222 = vsel %vm5211, %v5177, %v5221
        %v5223 = vsel %vm5213, %v5186, %v5222
        %v5224 = vsel %vm5215, %v5195, %v5223
        %v5225 = vsel %vm5217, %v5204, %v5224
        %vm5228 = vcmask 138248
        %5229 = vst.msk [vmem:[#allocation4 + $0x1] sm:$0xff] %vm5228, %v5218
        %5230 = vst.msk [vmem:[#allocation4 + $0x9] sm:$0xff] %vm5228, %v5225
        %s5231 = sld [smem:[#allocation13 + $0x81]]
        %v5232 = vld [vmem:[#allocation4 + $0x1] sm:$0xff]
        %v5233 = vld [vmem:[#allocation4 + $0x9] sm:$0xff]
        %v5234 = vstv %s5231
        %v5235 = vmul.f32 %v5234, %v5232
        %v5236 = vmul.f32 %v5234, %v5233
        %s5237 = sld [smem:[#allocation13 + $0x83]]
        %v5238 = vstv %s5237
        %v5239 = vmul.f32 %v5238, %v5232
        %v5240 = vmul.f32 %v5238, %v5233
        %5243 = vrot.lane.b32.xlu0 %v5239, 1
        %v5244 = vpop.permute.xlu0 %5243
        %5245 = vrot.lane.b32.xlu0 %v5240, 1
        %v5246 = vpop.permute.xlu0 %5245
        %v5249 = vadd.f32 %v5235, %v5244
        %v5250 = vadd.f32 %v5236, %v5246
        %s5251 = sld [smem:[#allocation13 + $0x181]]
        %v5252 = vld [vmem:[#allocation4] sm:$0xff]
        %v5253 = vld [vmem:[#allocation4 + $0x8] sm:$0xff]
        %v5254 = vstv %s5251
        %v5255 = vmul.f32 %v5254, %v5252
        %v5256 = vmul.f32 %v5254, %v5253
        %v5257 = vadd.f32 %v5249, %v5255
        %v5258 = vadd.f32 %v5250, %v5256
        %s5259 = sld [smem:[#allocation13 + $0x183]]
        %v5260 = vstv %s5259
        %v5261 = vmul.f32 %v5260, %v5252
        %v5262 = vmul.f32 %v5260, %v5253
        %5265 = vrot.lane.b32.xlu0 %v5261, 1
        %v5266 = vpop.permute.xlu0 %5265
        %5267 = vrot.lane.b32.xlu0 %v5262, 1
        %v5268 = vpop.permute.xlu0 %5267
        %v5271 = vadd.f32 %v5257, %v5266
        %v5272 = vadd.f32 %v5258, %v5268
        %5275 = vrot.lane.b32.xlu0 %v5271, 127
        %v5276 = vpop.permute.xlu0 %5275
        %5277 = vrot.lane.b32.xlu0 %v5272, 127
        %v5278 = vpop.permute.xlu0 %5277
        %vm5281 = vcmask 130048
        %5282 = vst.msk [vmem:[%s367] sm:$0xff] %vm5281, %v5276
        %5283 = vst.msk [vmem:[%s367 + $0x8] sm:$0xff] %vm5281, %v5278
        %s5284 = sld [smem:[#allocation13 + $0x80]]
        %v5285 = vld [vmem:[#allocation4 + $0x1] sm:$0xff]
        %v5286 = vld [vmem:[#allocation4 + $0x9] sm:$0xff]
        %v5287 = vstv %s5284
        %v5288 = vmul.f32 %v5287, %v5285
        %v5289 = vmul.f32 %v5287, %v5286
        %s5290 = sld [smem:[#allocation13 + $0x82]]
        %v5291 = vstv %s5290
        %v5292 = vmul.f32 %v5291, %v5285
        %v5293 = vmul.f32 %v5291, %v5286
        %5296 = vrot.lane.b32.xlu0 %v5292, 1
        %v5297 = vpop.permute.xlu0 %5296
        %5298 = vrot.lane.b32.xlu0 %v5293, 1
        %v5299 = vpop.permute.xlu0 %5298
        %v5302 = vadd.f32 %v5288, %v5297
        %v5303 = vadd.f32 %v5289, %v5299
        %s5304 = sld [smem:[#allocation13 + $0x180]]
        %v5305 = vld [vmem:[#allocation4] sm:$0xff]
        %v5306 = vld [vmem:[#allocation4 + $0x8] sm:$0xff]
        %v5307 = vstv %s5304
        %v5308 = vmul.f32 %v5307, %v5305
        %v5309 = vmul.f32 %v5307, %v5306
        %v5310 = vadd.f32 %v5302, %v5308
        %v5311 = vadd.f32 %v5303, %v5309
        %s5312 = sld [smem:[#allocation13 + $0x182]]
        %v5313 = vstv %s5312
        %v5314 = vmul.f32 %v5313, %v5305
        %v5315 = vmul.f32 %v5313, %v5306
        %5318 = vrot.lane.b32.xlu0 %v5314, 1
        %v5319 = vpop.permute.xlu0 %5318
        %5320 = vrot.lane.b32.xlu0 %v5315, 1
        %v5321 = vpop.permute.xlu0 %5320
        %v5324 = vadd.f32 %v5310, %v5319
        %v5325 = vadd.f32 %v5311, %v5321
        %5328 = vrot.lane.b32.xlu0 %v5324, 126
        %v5329 = vpop.permute.xlu0 %5328
        %5330 = vrot.lane.b32.xlu0 %v5325, 126
        %v5331 = vpop.permute.xlu0 %5330
        %s5334 = scalar_lea.vmem %s367, 16 [#allocation14]
        %5335 = vst.msk [vmem:[%s5334] sm:$0xff] %vm5281, %v5329
        %5336 = vst.msk [vmem:[%s5334 + $0x8] sm:$0xff] %vm5281, %v5331
        %s5337 = sld [smem:[#allocation13 + $0x1]]
        %v5338 = vld [vmem:[#allocation4 + $0x2] sm:$0xff]
        %v5339 = vld [vmem:[#allocation4 + $0xa] sm:$0xff]
        %v5340 = vstv %s5337
        %v5341 = vmul.f32 %v5340, %v5338
        %v5342 = vmul.f32 %v5340, %v5339
        %s5343 = sld [smem:[#allocation13 + $0x3]]
        %v5344 = vstv %s5343
        %v5345 = vmul.f32 %v5344, %v5338
        %v5346 = vmul.f32 %v5344, %v5339
        %5349 = vrot.lane.b32.xlu0 %v5345, 1
        %v5350 = vpop.permute.xlu0 %5349
        %5351 = vrot.lane.b32.xlu0 %v5346, 1
        %v5352 = vpop.permute.xlu0 %5351
        %v5355 = vadd.f32 %v5341, %v5350
        %v5356 = vadd.f32 %v5342, %v5352
        %s5357 = sld [smem:[#allocation13 + $0x101]]
        %v5358 = vld [vmem:[#allocation4 + $0x1] sm:$0xff]
        %v5359 = vld [vmem:[#allocation4 + $0x9] sm:$0xff]
        %v5360 = vstv %s5357
        %v5361 = vmul.f32 %v5360, %v5358
        %v5362 = vmul.f32 %v5360, %v5359
        %v5363 = vadd.f32 %v5355, %v5361
        %v5364 = vadd.f32 %v5356, %v5362
        %s5365 = sld [smem:[#allocation13 + $0x103]]
        %v5366 = vstv %s5365
        %v5367 = vmul.f32 %v5366, %v5358
        %v5368 = vmul.f32 %v5366, %v5359
        %5371 = vrot.lane.b32.xlu0 %v5367, 1
        %v5372 = vpop.permute.xlu0 %5371
        %5373 = vrot.lane.b32.xlu0 %v5368, 1
        %v5374 = vpop.permute.xlu0 %5373
        %v5377 = vadd.f32 %v5363, %v5372
        %v5378 = vadd.f32 %v5364, %v5374
        %5381 = vrot.lane.b32.xlu0 %v5377, 127
        %v5382 = vpop.permute.xlu0 %5381
        %5383 = vrot.lane.b32.xlu0 %v5378, 127
        %v5384 = vpop.permute.xlu0 %5383
        %s5387 = scalar_lea.vmem %s367, 32 [#allocation14]
        %5388 = vst.msk [vmem:[%s5387] sm:$0xff] %vm5281, %v5382
        %5389 = vst.msk [vmem:[%s5387 + $0x8] sm:$0xff] %vm5281, %v5384
        %s5390 = sld [smem:[#allocation13]]
        %v5391 = vld [vmem:[#allocation4 + $0x2] sm:$0xff]
        %v5392 = vld [vmem:[#allocation4 + $0xa] sm:$0xff]
        %v5393 = vstv %s5390
        %v5394 = vmul.f32 %v5393, %v5391
        %v5395 = vmul.f32 %v5393, %v5392
        %s5396 = sld [smem:[#allocation13 + $0x2]]
        %v5397 = vstv %s5396
        %v5398 = vmul.f32 %v5397, %v5391
        %v5399 = vmul.f32 %v5397, %v5392
        %5402 = vrot.lane.b32.xlu0 %v5398, 1
        %v5403 = vpop.permute.xlu0 %5402
        %5404 = vrot.lane.b32.xlu0 %v5399, 1
        %v5405 = vpop.permute.xlu0 %5404
        %v5408 = vadd.f32 %v5394, %v5403
        %v5409 = vadd.f32 %v5395, %v5405
        %s5410 = sld [smem:[#allocation13 + $0x100]]
        %v5411 = vld [vmem:[#allocation4 + $0x1] sm:$0xff]
        %v5412 = vld [vmem:[#allocation4 + $0x9] sm:$0xff]
        %v5413 = vstv %s5410
        %v5414 = vmul.f32 %v5413, %v5411
        %v5415 = vmul.f32 %v5413, %v5412
        %v5416 = vadd.f32 %v5408, %v5414
        %v5417 = vadd.f32 %v5409, %v5415
        %s5418 = sld [smem:[#allocation13 + $0x102]]
        %v5419 = vstv %s5418
        %v5420 = vmul.f32 %v5419, %v5411
        %v5421 = vmul.f32 %v5419, %v5412
        %5424 = vrot.lane.b32.xlu0 %v5420, 1
        %v5425 = vpop.permute.xlu0 %5424
        %5426 = vrot.lane.b32.xlu0 %v5421, 1
        %v5427 = vpop.permute.xlu0 %5426
        %v5430 = vadd.f32 %v5416, %v5425
        %v5431 = vadd.f32 %v5417, %v5427
        %5434 = vrot.lane.b32.xlu0 %v5430, 126
        %v5435 = vpop.permute.xlu0 %5434
        %5436 = vrot.lane.b32.xlu0 %v5431, 126
        %v5437 = vpop.permute.xlu0 %5436
        %s5440 = scalar_lea.vmem %s367, 48 [#allocation14]
        %5441 = vst.msk [vmem:[%s5440] sm:$0xff] %vm5281, %v5435
        %5442 = vst.msk [vmem:[%s5440 + $0x8] sm:$0xff] %vm5281, %v5437
        %s5443 = sand.u32 %s209, 1
        %s5444 = scalar_lea.sflag [#allocation8], %s5443
        %s5445 = sand.u32 %s209, 1
        %s5446 = smul.addr %s5445, 64
        %s5447 = scalar_lea.vmem [#allocation14], %s5446
        // Predicated region
        $region69: #{tpu_custom_call.1} parent=51 // pred_check
          %p5448 = pneg %p219
        $region70: #{tpu_custom_call.1} parent=51 // pred_check_branch
          %5450 = sbr.rel (%p5448) target = $region72
        $region71: #{tpu_custom_call.1} parent=51 // pred_region
          %s5452 = ssub.s32 1024, 1024
          %5453 = vsyncadd %s5444, %s5452
          %s5454 = smul.addr %s28, 8
          %s5455 = smul.addr %s5454, 128
          %s5456 = scalar_lea.hbm %s8, %s5455
          %s5457 = sshll.u32 %s5447, 4
          %s5458 = int_to_ptr.vmem [resolvable:$true] %s5457
          %5463 = dma.vmem_to_hbm [thread:$0]  %s5458, 1024, %s5456, %s5444, 128, 128, 8
        $region72: #{tpu_custom_call.1} parent=51 // pred_fallthru
          _
      $region52: #{tpu_custom_call.1} parent=5 // pred_fallthru
        _
      %p5464 = scmp.le.s32.totalorder 2, %s23
      // Predicated region
      $region73: #{tpu_custom_call.1} parent=5 // pred_check
        %p5465 = pneg %p5464
      $region74: #{tpu_custom_call.1} parent=5 // pred_check_branch
        %5467 = sbr.rel (%p5465) target = $region76
      $region75: #{tpu_custom_call.1} parent=5 // pred_region
        %s5468 = ssub.s32 %s23, 2
        // Predicated region
        $region77: #{tpu_custom_call.1} parent=75 // pred_check
          %p5469 = pneg %p225
        $region78: #{tpu_custom_call.1} parent=75 // pred_check_branch
          %5471 = sbr.rel (%p5469) target = $region80
        $region79: #{tpu_custom_call.1} parent=75 // pred_region
          %s5472 = sand.u32 %s210, 1
          %s5473 = scalar_lea.sflag [#allocation8], %s5472
          %s5474 = sand.u32 %s210, 1
          %s5475 = smul.addr %s5474, 64
          %s5476 = scalar_lea.vmem [#allocation14], %s5475
          %5477 = dma.done %s5473, 1024
        $region80: #{tpu_custom_call.1} parent=75 // pred_fallthru
          _
      $region76: #{tpu_custom_call.1} parent=5 // pred_fallthru
        _
    $region6: #{tpu_custom_call.1} parent=1 // loop_footer
      %s27 = sadd.s32 1, %s23
    $region7: #{tpu_custom_call.1} parent=1 // loop_footer_branch
      %22 = sbr.rel target = $region3
    $region8: #{tpu_custom_call.1} parent=1 // loop_exit
      _
    %5478 = vsyncpa [#allocation7], 1
    %s5479 = scalar_lea.sflag [#allocation7], 1
    %5480 = vsyncpa %s5479, 1
    %5481 = vsyncpa [#allocation11], 1
    %5482 = vsyncpa [#allocation8], 1
    %s5483 = scalar_lea.sflag [#allocation8], 1
    %5484 = vsyncpa %s5483, 1
    %5485 = vsyncpa [#allocation9], 1
    %s5486 = scalar_lea.sflag [#allocation9], 1
    %5487 = vsyncpa %s5486, 1

</llo_original>
